<compile_context>
chip_gen: v6e
topology: v6e:2x2x1
jax: 0.10.0
libtpu: 0.0.40
codegen_flags: <defaults>
</compile_context>

<pallas_src>
import functools
import math

import jax
import jax.numpy as jnp
import numpy as np
from jax.experimental import pallas as pl
from jax.experimental.pallas import tpu as pltpu

NUM_HEADS = 4      # nn.MultiheadAttention(hidden_size, num_heads=4)
LN_EPS = 1e-5
LANE = 128         # TPU vreg lane width


def _round_up(x, m):
    return (x + m - 1) // m * m


# --------------------------------------------------------------------------- #
# Kernel
# --------------------------------------------------------------------------- #
def fusion_kernel(x_ref, w0_ref, b0_ref, w1_ref, b1_ref,
                  wqkv_ref, bqkv_ref, wout_ref, bout_ref,
                  gamma_ref, beta_ref, o_ref, *,
                  seq_len, hidden, head_pad, matmul_dtype):
    """One grid step = one block of batch elements, rows flattened to (B_blk*S, D)."""
    rows = x_ref.shape[0]
    hp = o_ref.shape[-1]                       # padded hidden (multiple of 128)
    bb = rows // seq_len                       # batch elements in this block

    def mm(a, w_ref, b_ref):
        # Weights are pre-transposed to (in, out) and pre-cast in the wrapper;
        # `a` is cast by the caller exactly once.  f32 accumulation on the MXU.
        return jnp.dot(a, w_ref[...], preferred_element_type=jnp.float32) + b_ref[...]

    # ---- MLP stack: (Linear -> ReLU -> Dropout(identity)) x 2, flattened rows ----
    x = x_ref[...].astype(matmul_dtype)                        # (rows, Dp)
    h = jnp.maximum(mm(x, w0_ref, b0_ref), 0.0)                # (rows, Hp) f32
    h = jnp.maximum(mm(h.astype(matmul_dtype), w1_ref, b1_ref), 0.0)

    # ---- fused, head-blocked Q/K/V projection (1/sqrt(hd) folded into Q) ----
    qkv = mm(h.astype(matmul_dtype), wqkv_ref, bqkv_ref)       # (rows, 3*NH*hdp) f32
    qkv = qkv.astype(matmul_dtype).reshape(bb, seq_len, 3 * NUM_HEADS * head_pad)

    # ---- multi-head self-attention; every slice is on a 128-lane tile bound ----
    acc = jnp.zeros((rows, hp), jnp.float32)
    for hh in range(NUM_HEADS):                                # static unroll (4)
        q_lo = hh * head_pad
        k_lo = (NUM_HEADS + hh) * head_pad
        v_lo = (2 * NUM_HEADS + hh) * head_pad
        qh = qkv[:, :, q_lo:q_lo + head_pad]                   # (bb, S, hdp)
        kh = qkv[:, :, k_lo:k_lo + head_pad]
        vh = qkv[:, :, v_lo:v_lo + head_pad]
        s = jnp.einsum("bqd,bkd->bqk", qh, kh,
                       preferred_element_type=jnp.float32)     # (bb, S, S) f32
        s = s - jnp.max(s, axis=-1, keepdims=True)
        p = jnp.exp(s)
        p = p * pl.reciprocal(jnp.sum(p, axis=-1, keepdims=True), approx=True)
        pv = jnp.einsum("bqk,bkd->bqd", p.astype(matmul_dtype), vh,
                        preferred_element_type=jnp.float32)    # (bb, S, hdp) f32
        # Per-head row-block of the out-projection: replaces the lane-axis concat.
        acc = acc + jnp.dot(pv.reshape(rows, head_pad).astype(matmul_dtype),
                            wout_ref[hh * head_pad:(hh + 1) * head_pad, :],
                            preferred_element_type=jnp.float32)
    attn = acc + bout_ref[...]                                 # (rows, Hp)

    # ---- residual + LayerNorm over the real hidden features (pad cols are 0) ----
    y = h + attn
    inv_h = 1.0 / hidden
    mu = jnp.sum(y, axis=-1, keepdims=True) * inv_h
    var = jnp.sum(y * y, axis=-1, keepdims=True) * inv_h - mu * mu
    y = (y - mu) * jax.lax.rsqrt(var + LN_EPS)
    o_ref[...] = (y * gamma_ref[...] + beta_ref[...]).astype(o_ref.dtype)


# --------------------------------------------------------------------------- #
# Wrapper-side (one-time) weight packing
# --------------------------------------------------------------------------- #
def pack_params(params, *, matmul_dtype=jnp.bfloat16):
    """Transpose weights to (in, out), zero-pad every feature dim to 128 lanes,
    give each head's Q/K/V section its own 128-lane block, and fold the
    1/sqrt(head_dim) attention scale into the Q projection (weights + bias)."""
    H = params["w1"].shape[0]
    D_in = params["w0"].shape[1]
    assert H % NUM_HEADS == 0
    hd = H // NUM_HEADS
    dp = _round_up(D_in, LANE)
    hp = _round_up(H, LANE)
    hdp = _round_up(hd, LANE)
    scale = 1.0 / math.sqrt(hd)

    def pad2(w_t, rows, cols):
        out = jnp.zeros((rows, cols), jnp.float32)
        return out.at[:w_t.shape[0], :w_t.shape[1]].set(w_t)

    def pad_vec(v, cols):
        out = jnp.zeros((1, cols), jnp.float32)
        return out.at[0, :v.shape[0]].set(v)

    w0p = pad2(params["w0"].T, dp, hp).astype(matmul_dtype)
    w1p = pad2(params["w1"].T, hp, hp).astype(matmul_dtype)
    b0p = pad_vec(params["b0"][0], hp)
    b1p = pad_vec(params["b1"][0], hp)

    # Head-blocked packed in-projection: (Hp, 3*NH*hdp); Q columns pre-scaled.
    w_in_t = params["w_in"].T                  # (H, 3H): [Q | K | V] along columns
    b_in = params["b_in"][0]                   # (3H,)
    wqkv = jnp.zeros((hp, 3 * NUM_HEADS * hdp), jnp.float32)
    bqkv = jnp.zeros((1, 3 * NUM_HEADS * hdp), jnp.float32)
    for sec in range(3):                       # 0=Q, 1=K, 2=V
        sec_scale = scale if sec == 0 else 1.0
        for hh in range(NUM_HEADS):
            src = sec * H + hh * hd
            dst = (sec * NUM_HEADS + hh) * hdp
            wqkv = wqkv.at[:H, dst:dst + hd].set(sec_scale * w_in_t[:, src:src + hd])
            bqkv = bqkv.at[0, dst:dst + hd].set(sec_scale * b_in[src:src + hd])
    wqkv = wqkv.astype(matmul_dtype)

    # Head-blocked out-projection: (NH*hdp, Hp); head hh occupies rows [hh*hdp, hh*hdp+hd).
    w_out_t = params["w_out"].T                # (H, H), rows = concatenated heads
    wout = jnp.zeros((NUM_HEADS * hdp, hp), jnp.float32)
    for hh in range(NUM_HEADS):
        wout = wout.at[hh * hdp:hh * hdp + hd, :H].set(w_out_t[hh * hd:(hh + 1) * hd, :])
    wout = wout.astype(matmul_dtype)
    bout = pad_vec(params["b_out"][0], hp)

    gamma = pad_vec(params["gamma"][0], hp)    # zero-padded -> padded lanes stay 0
    beta = pad_vec(params["beta"][0], hp)

    return dict(w0=w0p, b0=b0p, w1=w1p, b1=b1p, wqkv=wqkv, bqkv=bqkv,
                wout=wout, bout=bout, gamma=gamma, beta=beta,
                meta=dict(D_in=D_in, H=H, hd=hd, dp=dp, hp=hp, hdp=hdp,
                          matmul_dtype=matmul_dtype))


# --------------------------------------------------------------------------- #
# Forward
# --------------------------------------------------------------------------- #
def knowledge_fusion_forward(x, packed, *, batch_block=None,
                             vmem_limit_bytes=32 * 1024 * 1024):
    meta = packed["meta"]
    B, S, D_in = x.shape
    assert D_in == meta["D_in"]
    H, dp, hp, hdp = meta["H"], meta["dp"], meta["hp"], meta["hdp"]
    matmul_dtype = meta["matmul_dtype"]

    if batch_block is None:
        # Single grid step -> all B*S rows feed the MXU together and the
        # ~0.35 us per-step overhead is paid once.  On v7x with large batches
        # pass batch_block = pl.cdiv(B, 2) so the "parallel" axis shards across
        # both TensorCores (keep vmem_limit_bytes <= ~48 MiB there); on v6e
        # grow the block / raise the limit instead.
        batch_block = B
    assert B % batch_block == 0, "batch must be divisible by batch_block"
    if batch_block > 1 and S % 8 != 0:
        raise ValueError("seq_len must be a multiple of 8 (sublane tile) when "
                         "batch_block > 1; pad the sequence or use batch_block=1.")
    grid = (B // batch_block,)
    rows_blk = batch_block * S

    # Lane-/sublane-dense input slab, zero-padded to 128 lanes (free in XLA).
    x_flat = jnp.zeros((B * S, dp), x.dtype).at[:, :D_in].set(x.reshape(B * S, D_in))

    def full_spec(a):
        zeros = (0,) * a.ndim
        return pl.BlockSpec(a.shape, lambda b: zeros)

    in_specs = [
        pl.BlockSpec((rows_blk, dp), lambda b: (b, 0)),
        full_spec(packed["w0"]), full_spec(packed["b0"]),
        full_spec(packed["w1"]), full_spec(packed["b1"]),
        full_spec(packed["wqkv"]), full_spec(packed["bqkv"]),
        full_spec(packed["wout"]), full_spec(packed["bout"]),
        full_spec(packed["gamma"]), full_spec(packed["beta"]),
    ]
    out_spec = pl.BlockSpec((rows_blk, hp), lambda b: (b, 0))

    flops = (2 * B * S * (dp * hp + hp * hp + hp * 3 * NUM_HEADS * hdp
                          + NUM_HEADS * hdp * hp)
             + 4 * B * NUM_HEADS * S * S * hdp)
    weight_bytes = sum(int(packed[k].size) * packed[k].dtype.itemsize
                       for k in ("w0", "b0", "w1", "b1", "wqkv", "bqkv",
                                 "wout", "bout", "gamma", "beta"))
    cost = pl.CostEstimate(
        flops=int(flops),
        transcendentals=int(B * NUM_HEADS * S * S + B * S),
        bytes_accessed=int(x_flat.size * x_flat.dtype.itemsize
                           + B * S * hp * x.dtype.itemsize + weight_bytes),
    )

    out_flat = pl.pallas_call(
        functools.partial(fusion_kernel, seq_len=S, hidden=H, head_pad=hdp,
                          matmul_dtype=matmul_dtype),
        out_shape=jax.ShapeDtypeStruct((B * S, hp), x.dtype),
        grid=grid,
        in_specs=in_specs,
        out_specs=out_spec,
        compiler_params=pltpu.CompilerParams(
            dimension_semantics=("parallel",),
            vmem_limit_bytes=vmem_limit_bytes,
        ),
        cost_estimate=cost,
    )(x_flat, packed["w0"], packed["b0"], packed["w1"], packed["b1"],
      packed["wqkv"], packed["bqkv"], packed["wout"], packed["bout"],
      packed["gamma"], packed["beta"])

    # Slice off the 128-lane padding and restore (B, S, H).
    return out_flat[:, :H].reshape(B, S, H)


# --------------------------------------------------------------------------- #
# Pure-JAX reference (mirrors the PyTorch forward, eval mode)
# --------------------------------------------------------------------------- #
def reference_forward(x, p):
    H = p["w1"].shape[0]
    hd = H // NUM_HEADS
    B, S, _ = x.shape
    h = jax.nn.relu(x @ p["w0"].T + p["b0"][0])
    h = jax.nn.relu(h @ p["w1"].T + p["b1"][0])
    q = h @ p["w_in"][:H].T + p["b_in"][0, :H]
    k = h @ p["w_in"][H:2 * H].T + p["b_in"][0, H:2 * H]
    v = h @ p["w_in"][2 * H:].T + p["b_in"][0, 2 * H:]
    qh = q.reshape(B, S, NUM_HEADS, hd).transpose(0, 2, 1, 3)
    kh = k.reshape(B, S, NUM_HEADS, hd).transpose(0, 2, 1, 3)
    vh = v.reshape(B, S, NUM_HEADS, hd).transpose(0, 2, 1, 3)
    s = jnp.einsum("bhqd,bhkd->bhqk", qh, kh) / jnp.sqrt(hd).astype(jnp.float32)
    a = jnp.einsum("bhqk,bhkd->bhqd", jax.nn.softmax(s, axis=-1), vh)
    a = a.transpose(0, 2, 1, 3).reshape(B, S, H)
    a = a @ p["w_out"].T + p["b_out"][0]
    y = h + a
    mu = y.mean(-1, keepdims=True)
    var = ((y - mu) ** 2).mean(-1, keepdims=True)
    return (y - mu) / jnp.sqrt(var + LN_EPS) * p["gamma"][0] + p["beta"][0]


def init_params(key, input_size, hidden_size):
    ks = jax.random.split(key, 8)
    scale = 0.1
    return {
        # MLP (num_layers = 2): Linear weights stored PyTorch-style (out, in)
        "w0": scale * jax.random.normal(ks[0], (hidden_size, input_size), jnp.float32),
        "b0": scale * jax.random.normal(ks[1], (1, hidden_size), jnp.float32),
        "w1": scale * jax.random.normal(ks[2], (hidden_size, hidden_size), jnp.float32),
        "b1": scale * jax.random.normal(ks[3], (1, hidden_size), jnp.float32),
        # MultiheadAttention packed in-projection (3H, H) + out-projection (H, H)
        "w_in": scale * jax.random.normal(ks[4], (3 * hidden_size, hidden_size), jnp.float32),
        "b_in": scale * jax.random.normal(ks[5], (1, 3 * hidden_size), jnp.float32),
        "w_out": scale * jax.random.normal(ks[6], (hidden_size, hidden_size), jnp.float32),
        "b_out": scale * jax.random.normal(ks[7], (1, hidden_size), jnp.float32),
        # LayerNorm affine
        "gamma": jnp.ones((1, hidden_size), jnp.float32),
        "beta": jnp.zeros((1, hidden_size), jnp.float32),
    }


if __name__ == "__main__":
    batch, seq, input_size, hidden_size = 2, 8, 16, 32

    key = jax.random.PRNGKey(0)
    k_x, k_p = jax.random.split(key)
    x = jax.random.normal(k_x, (batch, seq, input_size), jnp.float32)
    params = init_params(k_p, input_size, hidden_size)

    ref = jax.block_until_ready(reference_forward(x, params))

    # 1) f32 MXU operands: tight parity with the PyTorch/JAX reference
    #    (only the approx softmax reciprocal deviates, ~1e-4 level).
    packed_f32 = pack_params(params, matmul_dtype=jnp.float32)
    out_f32 = jax.block_until_ready(knowledge_fusion_forward(x, packed_f32))
    np.testing.assert_allclose(np.asarray(out_f32), np.asarray(ref),
                               rtol=2e-3, atol=2e-3)

    # 2) bf16 MXU operands (perf default on v5e/v6e/v7x): f32 accumulation and
    #    f32 softmax/LayerNorm, but operand casts add ~1e-2-level drift after
    #    LayerNorm, hence the looser tolerance.
    packed_bf16 = pack_params(params, matmul_dtype=jnp.bfloat16)
    out_bf16 = jax.block_until_ready(knowledge_fusion_forward(x, packed_bf16))
    np.testing.assert_allclose(np.asarray(out_bf16), np.asarray(ref),
                               rtol=5e-2, atol=5e-2)

    print("KERNEL_OK")
</pallas_src>

<mosaic_0001>
module attributes {stable_mosaic.version = 11 : i64} {
  func.func @fusion_kernel(%arg0: i32, %arg1: memref<16x128xf32, #tpu.memory_space<vmem>>, %arg2: memref<128x128xf32, #tpu.memory_space<vmem>>, %arg3: memref<1x128xf32, #tpu.memory_space<vmem>>, %arg4: memref<128x128xf32, #tpu.memory_space<vmem>>, %arg5: memref<1x128xf32, #tpu.memory_space<vmem>>, %arg6: memref<128x1536xf32, #tpu.memory_space<vmem>>, %arg7: memref<1x1536xf32, #tpu.memory_space<vmem>>, %arg8: memref<512x128xf32, #tpu.memory_space<vmem>>, %arg9: memref<1x128xf32, #tpu.memory_space<vmem>>, %arg10: memref<1x128xf32, #tpu.memory_space<vmem>>, %arg11: memref<1x128xf32, #tpu.memory_space<vmem>>, %arg12: memref<16x128xf32, #tpu.memory_space<vmem>>) attributes {dimension_semantics = [#tpu.dimension_semantics<parallel>], iteration_bounds = array<i64: 1>, scalar_prefetch = 0 : i64, scratch_operands = 0 : i64, tpu.core_type = #tpu.core_type<tc>, window_params = [{transform_indices = @transform_0, window_bounds = array<i64: 16, 128>}, {pipeline_mode = #tpu.pipeline_mode<synchronous>, transform_indices = @transform_1, window_bounds = array<i64: 128, 128>}, {pipeline_mode = #tpu.pipeline_mode<synchronous>, transform_indices = @transform_2, window_bounds = array<i64: 1, 128>}, {pipeline_mode = #tpu.pipeline_mode<synchronous>, transform_indices = @transform_3, window_bounds = array<i64: 128, 128>}, {pipeline_mode = #tpu.pipeline_mode<synchronous>, transform_indices = @transform_4, window_bounds = array<i64: 1, 128>}, {pipeline_mode = #tpu.pipeline_mode<synchronous>, transform_indices = @transform_5, window_bounds = array<i64: 128, 1536>}, {pipeline_mode = #tpu.pipeline_mode<synchronous>, transform_indices = @transform_6, window_bounds = array<i64: 1, 1536>}, {pipeline_mode = #tpu.pipeline_mode<synchronous>, transform_indices = @transform_7, window_bounds = array<i64: 512, 128>}, {pipeline_mode = #tpu.pipeline_mode<synchronous>, transform_indices = @transform_8, window_bounds = array<i64: 1, 128>}, {pipeline_mode = #tpu.pipeline_mode<synchronous>, transform_indices = @transform_9, window_bounds = array<i64: 1, 128>}, {pipeline_mode = #tpu.pipeline_mode<synchronous>, transform_indices = @transform_10, window_bounds = array<i64: 1, 128>}, {transform_indices = @transform_11, window_bounds = array<i64: 16, 128>}]} {
    %c0 = arith.constant 0 : index
    %c0_0 = arith.constant 0 : index
    %0 = vector.load %arg1[%c0, %c0_0] : memref<16x128xf32, #tpu.memory_space<vmem>>, vector<16x128xf32>
    %c0_1 = arith.constant 0 : index
    %c0_2 = arith.constant 0 : index
    %1 = vector.load %arg2[%c0_1, %c0_2] : memref<128x128xf32, #tpu.memory_space<vmem>>, vector<128x128xf32>
    %cst = arith.constant dense<0.000000e+00> : vector<16x128xf32>
    %2 = tpu.matmul %0, %1, %cst {dimension_numbers = #tpu.dot_dimension_numbers<[1], [0], [0], [1], [0, 0, 1, 1], [], []>} : vector<16x128xf32>, vector<128x128xf32>, vector<16x128xf32> -> vector<16x128xf32>
    %c0_3 = arith.constant 0 : index
    %c0_4 = arith.constant 0 : index
    %3 = vector.load %arg3[%c0_3, %c0_4] : memref<1x128xf32, #tpu.memory_space<vmem>>, vector<1x128xf32>
    %4 = vector.broadcast %3 : vector<1x128xf32> to vector<16x128xf32>
    %5 = arith.addf %2, %4 : vector<16x128xf32>
    %cst_5 = arith.constant 0.000000e+00 : f32
    %6 = vector.broadcast %cst_5 : f32 to vector<16x128xf32>
    %7 = arith.maximumf %5, %6 : vector<16x128xf32>
    %c0_6 = arith.constant 0 : index
    %c0_7 = arith.constant 0 : index
    %8 = vector.load %arg4[%c0_6, %c0_7] : memref<128x128xf32, #tpu.memory_space<vmem>>, vector<128x128xf32>
    %cst_8 = arith.constant dense<0.000000e+00> : vector<16x128xf32>
    %9 = tpu.matmul %7, %8, %cst_8 {dimension_numbers = #tpu.dot_dimension_numbers<[1], [0], [0], [1], [0, 0, 1, 1], [], []>} : vector<16x128xf32>, vector<128x128xf32>, vector<16x128xf32> -> vector<16x128xf32>
    %c0_9 = arith.constant 0 : index
    %c0_10 = arith.constant 0 : index
    %10 = vector.load %arg5[%c0_9, %c0_10] : memref<1x128xf32, #tpu.memory_space<vmem>>, vector<1x128xf32>
    %11 = vector.broadcast %10 : vector<1x128xf32> to vector<16x128xf32>
    %12 = arith.addf %9, %11 : vector<16x128xf32>
    %cst_11 = arith.constant 0.000000e+00 : f32
    %13 = vector.broadcast %cst_11 : f32 to vector<16x128xf32>
    %14 = arith.maximumf %12, %13 : vector<16x128xf32>
    %c0_12 = arith.constant 0 : index
    %c0_13 = arith.constant 0 : index
    %15 = vector.load %arg6[%c0_12, %c0_13] : memref<128x1536xf32, #tpu.memory_space<vmem>>, vector<128x1536xf32>
    %cst_14 = arith.constant dense<0.000000e+00> : vector<16x1536xf32>
    %16 = tpu.matmul %14, %15, %cst_14 {dimension_numbers = #tpu.dot_dimension_numbers<[1], [0], [0], [1], [0, 0, 1, 1], [], []>} : vector<16x128xf32>, vector<128x1536xf32>, vector<16x1536xf32> -> vector<16x1536xf32>
    %c0_15 = arith.constant 0 : index
    %c0_16 = arith.constant 0 : index
    %17 = vector.load %arg7[%c0_15, %c0_16] : memref<1x1536xf32, #tpu.memory_space<vmem>>, vector<1x1536xf32>
    %18 = vector.broadcast %17 : vector<1x1536xf32> to vector<16x1536xf32>
    %19 = arith.addf %16, %18 : vector<16x1536xf32>
    %20 = vector.shape_cast %19 : vector<16x1536xf32> to vector<2x8x1536xf32>
    %cst_17 = arith.constant 0.000000e+00 : f32
    %21 = vector.broadcast %cst_17 : f32 to vector<16x128xf32>
    %22 = vector.extract_strided_slice %20 {offsets = [0, 0, 0], sizes = [2, 8, 128], strides = [1, 1, 1]} : vector<2x8x1536xf32> to vector<2x8x128xf32>
    %23 = vector.extract_strided_slice %20 {offsets = [0, 0, 512], sizes = [2, 8, 128], strides = [1, 1, 1]} : vector<2x8x1536xf32> to vector<2x8x128xf32>
    %24 = vector.extract_strided_slice %20 {offsets = [0, 0, 1024], sizes = [2, 8, 128], strides = [1, 1, 1]} : vector<2x8x1536xf32> to vector<2x8x128xf32>
    "tpu.trace_start"() <{level = 10 : i32, message = "bqd,bkd->bqk"}> : () -> ()
    %cst_18 = arith.constant dense<0.000000e+00> : vector<2x8x8xf32>
    %25 = tpu.matmul %22, %23, %cst_18 {dimension_numbers = #tpu.dot_dimension_numbers<[2], [2], [1], [1], [0, 0, 0, 1, 1, 1], [0], [0]>} : vector<2x8x128xf32>, vector<2x8x128xf32>, vector<2x8x8xf32> -> vector<2x8x8xf32>
    "tpu.trace_stop"() : () -> ()
    %cst_19 = arith.constant dense<0xFF800000> : vector<2x8xf32>
    %26 = vector.multi_reduction <maximumf>, %25, %cst_19 [2] : vector<2x8x8xf32> to vector<2x8xf32>
    %27 = vector.shape_cast %26 : vector<2x8xf32> to vector<2x8x1xf32>
    %28 = vector.broadcast %27 : vector<2x8x1xf32> to vector<2x8x8xf32>
    %29 = arith.subf %25, %28 : vector<2x8x8xf32>
    %30 = math.exp %29 : vector<2x8x8xf32>
    %cst_20 = arith.constant dense<0.000000e+00> : vector<2x8xf32>
    %31 = vector.multi_reduction <add>, %30, %cst_20 [2] : vector<2x8x8xf32> to vector<2x8xf32>
    %32 = vector.shape_cast %31 : vector<2x8xf32> to vector<2x8x1xf32>
    %33 = tpu.reciprocal %32 {approx = true} : vector<2x8x1xf32> -> vector<2x8x1xf32>
    %34 = vector.broadcast %33 : vector<2x8x1xf32> to vector<2x8x8xf32>
    %35 = arith.mulf %30, %34 : vector<2x8x8xf32>
    "tpu.trace_start"() <{level = 10 : i32, message = "bqk,bkd->bqd"}> : () -> ()
    %cst_21 = arith.constant dense<0.000000e+00> : vector<2x8x128xf32>
    %36 = tpu.matmul %35, %24, %cst_21 {dimension_numbers = #tpu.dot_dimension_numbers<[2], [1], [1], [2], [0, 0, 0, 1, 1, 2], [0], [0]>} : vector<2x8x8xf32>, vector<2x8x128xf32>, vector<2x8x128xf32> -> vector<2x8x128xf32>
    "tpu.trace_stop"() : () -> ()
    %37 = vector.shape_cast %36 : vector<2x8x128xf32> to vector<16x128xf32>
    %c0_22 = arith.constant 0 : index
    %c0_23 = arith.constant 0 : index
    %38 = vector.load %arg8[%c0_22, %c0_23] : memref<512x128xf32, #tpu.memory_space<vmem>>, vector<128x128xf32>
    %cst_24 = arith.constant dense<0.000000e+00> : vector<16x128xf32>
    %39 = tpu.matmul %37, %38, %cst_24 {dimension_numbers = #tpu.dot_dimension_numbers<[1], [0], [0], [1], [0, 0, 1, 1], [], []>} : vector<16x128xf32>, vector<128x128xf32>, vector<16x128xf32> -> vector<16x128xf32>
    %40 = arith.addf %21, %39 : vector<16x128xf32>
    %41 = vector.extract_strided_slice %20 {offsets = [0, 0, 128], sizes = [2, 8, 128], strides = [1, 1, 1]} : vector<2x8x1536xf32> to vector<2x8x128xf32>
    %42 = vector.extract_strided_slice %20 {offsets = [0, 0, 640], sizes = [2, 8, 128], strides = [1, 1, 1]} : vector<2x8x1536xf32> to vector<2x8x128xf32>
    %43 = vector.extract_strided_slice %20 {offsets = [0, 0, 1152], sizes = [2, 8, 128], strides = [1, 1, 1]} : vector<2x8x1536xf32> to vector<2x8x128xf32>
    "tpu.trace_start"() <{level = 10 : i32, message = "bqd,bkd->bqk"}> : () -> ()
    %cst_25 = arith.constant dense<0.000000e+00> : vector<2x8x8xf32>
    %44 = tpu.matmul %41, %42, %cst_25 {dimension_numbers = #tpu.dot_dimension_numbers<[2], [2], [1], [1], [0, 0, 0, 1, 1, 1], [0], [0]>} : vector<2x8x128xf32>, vector<2x8x128xf32>, vector<2x8x8xf32> -> vector<2x8x8xf32>
    "tpu.trace_stop"() : () -> ()
    %cst_26 = arith.constant dense<0xFF800000> : vector<2x8xf32>
    %45 = vector.multi_reduction <maximumf>, %44, %cst_26 [2] : vector<2x8x8xf32> to vector<2x8xf32>
    %46 = vector.shape_cast %45 : vector<2x8xf32> to vector<2x8x1xf32>
    %47 = vector.broadcast %46 : vector<2x8x1xf32> to vector<2x8x8xf32>
    %48 = arith.subf %44, %47 : vector<2x8x8xf32>
    %49 = math.exp %48 : vector<2x8x8xf32>
    %cst_27 = arith.constant dense<0.000000e+00> : vector<2x8xf32>
    %50 = vector.multi_reduction <add>, %49, %cst_27 [2] : vector<2x8x8xf32> to vector<2x8xf32>
    %51 = vector.shape_cast %50 : vector<2x8xf32> to vector<2x8x1xf32>
    %52 = tpu.reciprocal %51 {approx = true} : vector<2x8x1xf32> -> vector<2x8x1xf32>
    %53 = vector.broadcast %52 : vector<2x8x1xf32> to vector<2x8x8xf32>
    %54 = arith.mulf %49, %53 : vector<2x8x8xf32>
    "tpu.trace_start"() <{level = 10 : i32, message = "bqk,bkd->bqd"}> : () -> ()
    %cst_28 = arith.constant dense<0.000000e+00> : vector<2x8x128xf32>
    %55 = tpu.matmul %54, %43, %cst_28 {dimension_numbers = #tpu.dot_dimension_numbers<[2], [1], [1], [2], [0, 0, 0, 1, 1, 2], [0], [0]>} : vector<2x8x8xf32>, vector<2x8x128xf32>, vector<2x8x128xf32> -> vector<2x8x128xf32>
    "tpu.trace_stop"() : () -> ()
    %56 = vector.shape_cast %55 : vector<2x8x128xf32> to vector<16x128xf32>
    %c128 = arith.constant 128 : index
    %c0_29 = arith.constant 0 : index
    %57 = vector.load %arg8[%c128, %c0_29] : memref<512x128xf32, #tpu.memory_space<vmem>>, vector<128x128xf32>
    %cst_30 = arith.constant dense<0.000000e+00> : vector<16x128xf32>
    %58 = tpu.matmul %56, %57, %cst_30 {dimension_numbers = #tpu.dot_dimension_numbers<[1], [0], [0], [1], [0, 0, 1, 1], [], []>} : vector<16x128xf32>, vector<128x128xf32>, vector<16x128xf32> -> vector<16x128xf32>
    %59 = arith.addf %40, %58 : vector<16x128xf32>
    %60 = vector.extract_strided_slice %20 {offsets = [0, 0, 256], sizes = [2, 8, 128], strides = [1, 1, 1]} : vector<2x8x1536xf32> to vector<2x8x128xf32>
    %61 = vector.extract_strided_slice %20 {offsets = [0, 0, 768], sizes = [2, 8, 128], strides = [1, 1, 1]} : vector<2x8x1536xf32> to vector<2x8x128xf32>
    %62 = vector.extract_strided_slice %20 {offsets = [0, 0, 1280], sizes = [2, 8, 128], strides = [1, 1, 1]} : vector<2x8x1536xf32> to vector<2x8x128xf32>
    "tpu.trace_start"() <{level = 10 : i32, message = "bqd,bkd->bqk"}> : () -> ()
    %cst_31 = arith.constant dense<0.000000e+00> : vector<2x8x8xf32>
    %63 = tpu.matmul %60, %61, %cst_31 {dimension_numbers = #tpu.dot_dimension_numbers<[2], [2], [1], [1], [0, 0, 0, 1, 1, 1], [0], [0]>} : vector<2x8x128xf32>, vector<2x8x128xf32>, vector<2x8x8xf32> -> vector<2x8x8xf32>
    "tpu.trace_stop"() : () -> ()
    %cst_32 = arith.constant dense<0xFF800000> : vector<2x8xf32>
    %64 = vector.multi_reduction <maximumf>, %63, %cst_32 [2] : vector<2x8x8xf32> to vector<2x8xf32>
    %65 = vector.shape_cast %64 : vector<2x8xf32> to vector<2x8x1xf32>
    %66 = vector.broadcast %65 : vector<2x8x1xf32> to vector<2x8x8xf32>
    %67 = arith.subf %63, %66 : vector<2x8x8xf32>
    %68 = math.exp %67 : vector<2x8x8xf32>
    %cst_33 = arith.constant dense<0.000000e+00> : vector<2x8xf32>
    %69 = vector.multi_reduction <add>, %68, %cst_33 [2] : vector<2x8x8xf32> to vector<2x8xf32>
    %70 = vector.shape_cast %69 : vector<2x8xf32> to vector<2x8x1xf32>
    %71 = tpu.reciprocal %70 {approx = true} : vector<2x8x1xf32> -> vector<2x8x1xf32>
    %72 = vector.broadcast %71 : vector<2x8x1xf32> to vector<2x8x8xf32>
    %73 = arith.mulf %68, %72 : vector<2x8x8xf32>
    "tpu.trace_start"() <{level = 10 : i32, message = "bqk,bkd->bqd"}> : () -> ()
    %cst_34 = arith.constant dense<0.000000e+00> : vector<2x8x128xf32>
    %74 = tpu.matmul %73, %62, %cst_34 {dimension_numbers = #tpu.dot_dimension_numbers<[2], [1], [1], [2], [0, 0, 0, 1, 1, 2], [0], [0]>} : vector<2x8x8xf32>, vector<2x8x128xf32>, vector<2x8x128xf32> -> vector<2x8x128xf32>
    "tpu.trace_stop"() : () -> ()
    %75 = vector.shape_cast %74 : vector<2x8x128xf32> to vector<16x128xf32>
    %c256 = arith.constant 256 : index
    %c0_35 = arith.constant 0 : index
    %76 = vector.load %arg8[%c256, %c0_35] : memref<512x128xf32, #tpu.memory_space<vmem>>, vector<128x128xf32>
    %cst_36 = arith.constant dense<0.000000e+00> : vector<16x128xf32>
    %77 = tpu.matmul %75, %76, %cst_36 {dimension_numbers = #tpu.dot_dimension_numbers<[1], [0], [0], [1], [0, 0, 1, 1], [], []>} : vector<16x128xf32>, vector<128x128xf32>, vector<16x128xf32> -> vector<16x128xf32>
    %78 = arith.addf %59, %77 : vector<16x128xf32>
    %79 = vector.extract_strided_slice %20 {offsets = [0, 0, 384], sizes = [2, 8, 128], strides = [1, 1, 1]} : vector<2x8x1536xf32> to vector<2x8x128xf32>
    %80 = vector.extract_strided_slice %20 {offsets = [0, 0, 896], sizes = [2, 8, 128], strides = [1, 1, 1]} : vector<2x8x1536xf32> to vector<2x8x128xf32>
    %81 = vector.extract_strided_slice %20 {offsets = [0, 0, 1408], sizes = [2, 8, 128], strides = [1, 1, 1]} : vector<2x8x1536xf32> to vector<2x8x128xf32>
    "tpu.trace_start"() <{level = 10 : i32, message = "bqd,bkd->bqk"}> : () -> ()
    %cst_37 = arith.constant dense<0.000000e+00> : vector<2x8x8xf32>
    %82 = tpu.matmul %79, %80, %cst_37 {dimension_numbers = #tpu.dot_dimension_numbers<[2], [2], [1], [1], [0, 0, 0, 1, 1, 1], [0], [0]>} : vector<2x8x128xf32>, vector<2x8x128xf32>, vector<2x8x8xf32> -> vector<2x8x8xf32>
    "tpu.trace_stop"() : () -> ()
    %cst_38 = arith.constant dense<0xFF800000> : vector<2x8xf32>
    %83 = vector.multi_reduction <maximumf>, %82, %cst_38 [2] : vector<2x8x8xf32> to vector<2x8xf32>
    %84 = vector.shape_cast %83 : vector<2x8xf32> to vector<2x8x1xf32>
    %85 = vector.broadcast %84 : vector<2x8x1xf32> to vector<2x8x8xf32>
    %86 = arith.subf %82, %85 : vector<2x8x8xf32>
    %87 = math.exp %86 : vector<2x8x8xf32>
    %cst_39 = arith.constant dense<0.000000e+00> : vector<2x8xf32>
    %88 = vector.multi_reduction <add>, %87, %cst_39 [2] : vector<2x8x8xf32> to vector<2x8xf32>
    %89 = vector.shape_cast %88 : vector<2x8xf32> to vector<2x8x1xf32>
    %90 = tpu.reciprocal %89 {approx = true} : vector<2x8x1xf32> -> vector<2x8x1xf32>
    %91 = vector.broadcast %90 : vector<2x8x1xf32> to vector<2x8x8xf32>
    %92 = arith.mulf %87, %91 : vector<2x8x8xf32>
    "tpu.trace_start"() <{level = 10 : i32, message = "bqk,bkd->bqd"}> : () -> ()
    %cst_40 = arith.constant dense<0.000000e+00> : vector<2x8x128xf32>
    %93 = tpu.matmul %92, %81, %cst_40 {dimension_numbers = #tpu.dot_dimension_numbers<[2], [1], [1], [2], [0, 0, 0, 1, 1, 2], [0], [0]>} : vector<2x8x8xf32>, vector<2x8x128xf32>, vector<2x8x128xf32> -> vector<2x8x128xf32>
    "tpu.trace_stop"() : () -> ()
    %94 = vector.shape_cast %93 : vector<2x8x128xf32> to vector<16x128xf32>
    %c384 = arith.constant 384 : index
    %c0_41 = arith.constant 0 : index
    %95 = vector.load %arg8[%c384, %c0_41] : memref<512x128xf32, #tpu.memory_space<vmem>>, vector<128x128xf32>
    %cst_42 = arith.constant dense<0.000000e+00> : vector<16x128xf32>
    %96 = tpu.matmul %94, %95, %cst_42 {dimension_numbers = #tpu.dot_dimension_numbers<[1], [0], [0], [1], [0, 0, 1, 1], [], []>} : vector<16x128xf32>, vector<128x128xf32>, vector<16x128xf32> -> vector<16x128xf32>
    %97 = arith.addf %78, %96 : vector<16x128xf32>
    %c0_43 = arith.constant 0 : index
    %c0_44 = arith.constant 0 : index
    %98 = vector.load %arg9[%c0_43, %c0_44] : memref<1x128xf32, #tpu.memory_space<vmem>>, vector<1x128xf32>
    %99 = vector.broadcast %98 : vector<1x128xf32> to vector<16x128xf32>
    %100 = arith.addf %97, %99 : vector<16x128xf32>
    %101 = arith.addf %14, %100 : vector<16x128xf32>
    %cst_45 = arith.constant dense<0.000000e+00> : vector<16xf32>
    %102 = vector.multi_reduction <add>, %101, %cst_45 [1] : vector<16x128xf32> to vector<16xf32>
    %103 = vector.shape_cast %102 : vector<16xf32> to vector<16x1xf32>
    %cst_46 = arith.constant 3.125000e-02 : f32
    %104 = vector.broadcast %cst_46 : f32 to vector<16x1xf32>
    %105 = arith.mulf %103, %104 : vector<16x1xf32>
    %106 = arith.mulf %101, %101 : vector<16x128xf32>
    %cst_47 = arith.constant dense<0.000000e+00> : vector<16xf32>
    %107 = vector.multi_reduction <add>, %106, %cst_47 [1] : vector<16x128xf32> to vector<16xf32>
    %108 = vector.shape_cast %107 : vector<16xf32> to vector<16x1xf32>
    %cst_48 = arith.constant 3.125000e-02 : f32
    %109 = vector.broadcast %cst_48 : f32 to vector<16x1xf32>
    %110 = arith.mulf %108, %109 : vector<16x1xf32>
    %111 = arith.mulf %105, %105 : vector<16x1xf32>
    %112 = arith.subf %110, %111 : vector<16x1xf32>
    %113 = vector.broadcast %105 : vector<16x1xf32> to vector<16x128xf32>
    %114 = arith.subf %101, %113 : vector<16x128xf32>
    %cst_49 = arith.constant 9.99999974E-6 : f32
    %115 = vector.broadcast %cst_49 : f32 to vector<16x1xf32>
    %116 = arith.addf %112, %115 : vector<16x1xf32>
    %117 = math.rsqrt %116 : vector<16x1xf32>
    %118 = vector.broadcast %117 : vector<16x1xf32> to vector<16x128xf32>
    %119 = arith.mulf %114, %118 : vector<16x128xf32>
    %c0_50 = arith.constant 0 : index
    %c0_51 = arith.constant 0 : index
    %120 = vector.load %arg10[%c0_50, %c0_51] : memref<1x128xf32, #tpu.memory_space<vmem>>, vector<1x128xf32>
    %121 = vector.broadcast %120 : vector<1x128xf32> to vector<16x128xf32>
    %122 = arith.mulf %119, %121 : vector<16x128xf32>
    %c0_52 = arith.constant 0 : index
    %c0_53 = arith.constant 0 : index
    %123 = vector.load %arg11[%c0_52, %c0_53] : memref<1x128xf32, #tpu.memory_space<vmem>>, vector<1x128xf32>
    %124 = vector.broadcast %123 : vector<1x128xf32> to vector<16x128xf32>
    %125 = arith.addf %122, %124 : vector<16x128xf32>
    %c0_54 = arith.constant 0 : index
    %c0_55 = arith.constant 0 : index
    %126 = vector.load %arg12[%c0_54, %c0_55] : memref<16x128xf32, #tpu.memory_space<vmem>>, vector<16x128xf32>
    tpu.vector_store %arg12[%c0_54, %c0_55], %125 {strides = array<i32>} : memref<16x128xf32, #tpu.memory_space<vmem>>, vector<16x128xf32>,
    return
  }
  func.func @transform_0(%arg0: i32) -> (i32, i32) {
    %c0_i32 = arith.constant 0 : i32
    %c0_i32_0 = arith.constant 0 : i32
    return %arg0, %c0_i32 : i32, i32
  }
  func.func @transform_1(%arg0: i32) -> (i32, i32) {
    %c0_i32 = arith.constant 0 : i32
    %c0_i32_0 = arith.constant 0 : i32
    %c0_i32_1 = arith.constant 0 : i32
    return %c0_i32, %c0_i32_0 : i32, i32
  }
  func.func @transform_2(%arg0: i32) -> (i32, i32) {
    %c0_i32 = arith.constant 0 : i32
    %c0_i32_0 = arith.constant 0 : i32
    %c0_i32_1 = arith.constant 0 : i32
    return %c0_i32, %c0_i32_0 : i32, i32
  }
  func.func @transform_3(%arg0: i32) -> (i32, i32) {
    %c0_i32 = arith.constant 0 : i32
    %c0_i32_0 = arith.constant 0 : i32
    %c0_i32_1 = arith.constant 0 : i32
    return %c0_i32, %c0_i32_0 : i32, i32
  }
  func.func @transform_4(%arg0: i32) -> (i32, i32) {
    %c0_i32 = arith.constant 0 : i32
    %c0_i32_0 = arith.constant 0 : i32
    %c0_i32_1 = arith.constant 0 : i32
    return %c0_i32, %c0_i32_0 : i32, i32
  }
  func.func @transform_5(%arg0: i32) -> (i32, i32) {
    %c0_i32 = arith.constant 0 : i32
    %c0_i32_0 = arith.constant 0 : i32
    %c0_i32_1 = arith.constant 0 : i32
    return %c0_i32, %c0_i32_0 : i32, i32
  }
  func.func @transform_6(%arg0: i32) -> (i32, i32) {
    %c0_i32 = arith.constant 0 : i32
    %c0_i32_0 = arith.constant 0 : i32
    %c0_i32_1 = arith.constant 0 : i32
    return %c0_i32, %c0_i32_0 : i32, i32
  }
  func.func @transform_7(%arg0: i32) -> (i32, i32) {
    %c0_i32 = arith.constant 0 : i32
    %c0_i32_0 = arith.constant 0 : i32
    %c0_i32_1 = arith.constant 0 : i32
    return %c0_i32, %c0_i32_0 : i32, i32
  }
  func.func @transform_8(%arg0: i32) -> (i32, i32) {
    %c0_i32 = arith.constant 0 : i32
    %c0_i32_0 = arith.constant 0 : i32
    %c0_i32_1 = arith.constant 0 : i32
    return %c0_i32, %c0_i32_0 : i32, i32
  }
  func.func @transform_9(%arg0: i32) -> (i32, i32) {
    %c0_i32 = arith.constant 0 : i32
    %c0_i32_0 = arith.constant 0 : i32
    %c0_i32_1 = arith.constant 0 : i32
    return %c0_i32, %c0_i32_0 : i32, i32
  }
  func.func @transform_10(%arg0: i32) -> (i32, i32) {
    %c0_i32 = arith.constant 0 : i32
    %c0_i32_0 = arith.constant 0 : i32
    %c0_i32_1 = arith.constant 0 : i32
    return %c0_i32, %c0_i32_0 : i32, i32
  }
  func.func @transform_11(%arg0: i32) -> (i32, i32) {
    %c0_i32 = arith.constant 0 : i32
    %c0_i32_0 = arith.constant 0 : i32
    return %arg0, %c0_i32 : i32, i32
  }
}

</mosaic_0001>

<llo_original>
// kernel: tpu_custom_call.1
$region0: #{tpu_custom_call.1}
  #allocation0 [shape = 'u32[]', space=smem, size = 0x4, offset = 0x4, fixed_abs, tag = 'smem constant byte address 0x4 - core index']
  #allocation1 [shape = 'u32[144,128]{1,0:T(1,128)}', space=vmem, size = 0x12000, scoped, tag = 'internal scratch']
  %s0 = inlined_call_operand.hbm [shape: f32[16,128], index: 0, kind: input, shape index: {}]
  %s1 = inlined_call_operand.hbm [shape: f32[128,128], index: 1, kind: input, shape index: {}]
  %s2 = inlined_call_operand.vmem [shape: f32[1,128], index: 2, kind: input, shape index: {}]
  %s3 = inlined_call_operand.hbm [shape: f32[128,128], index: 3, kind: input, shape index: {}]
  %s4 = inlined_call_operand.vmem [shape: f32[1,128], index: 4, kind: input, shape index: {}]
  %s5 = inlined_call_operand.hbm [shape: f32[128,1536], index: 5, kind: input, shape index: {}]
  %s6 = inlined_call_operand.hbm [shape: f32[1,1536], index: 6, kind: input, shape index: {}]
  %s7 = inlined_call_operand.hbm [shape: f32[512,128], index: 7, kind: input, shape index: {}]
  %s8 = inlined_call_operand.vmem [shape: f32[1,128], index: 8, kind: input, shape index: {}]
  %s9 = inlined_call_operand.vmem [shape: f32[1,128], index: 9, kind: input, shape index: {}]
  %s10 = inlined_call_operand.vmem [shape: f32[1,128], index: 10, kind: input, shape index: {}]
  %s11 = inlined_call_operand.hbm [shape: f32[16,128], index: 11, kind: output, shape index: {}]
  %s12 = sld [smem:[#allocation0]]
  $region78: #{tpu_custom_call.1} parent=0
    _
  %s14 = ssub.s32 1, %s12
  %s15 = scalar_select 0, %s14, %s12
  $region1: #{tpu_custom_call.1} parent=0
    #allocation2 [shape = 'u8[8192]{0}', space=vmem, size = 0x2000, scoped, tag = 'input window, operand 0, single buffered']
    #allocation3 [shape = 's32[1]{0}', space=sflag, size = 0x4, scoped, tag = 'scoped memory for tpu_custom_call.1']
    #allocation4 [shape = 's32[1]{0}', space=sflag, size = 0x4, scoped, tag = 'scoped memory for tpu_custom_call.1']
    #allocation5 [shape = 'u8[65536]{0}', space=vmem, size = 0x10000, scoped, tag = 'input window, operand 1, single buffered']
    #allocation6 [shape = 's32[1]{0}', space=sflag, size = 0x4, scoped, tag = 'scoped memory for tpu_custom_call.1']
    #allocation7 [shape = 'u8[65536]{0}', space=vmem, size = 0x10000, scoped, tag = 'input window, operand 3, single buffered']
    #allocation8 [shape = 'u8[786432]{0}', space=vmem, size = 0xc0000, scoped, tag = 'input window, operand 5, single buffered']
    #allocation9 [shape = 's32[1]{0}', space=sflag, size = 0x4, scoped, tag = 'scoped memory for tpu_custom_call.1']
    #allocation10 [shape = 'u8[6144]{0}', space=vmem, size = 0x1800, scoped, tag = 'input window, operand 6, single buffered']
    #allocation11 [shape = 'u8[262144]{0}', space=vmem, size = 0x40000, scoped, tag = 'input window, operand 7, single buffered']
    #allocation12 [shape = 's32[1]{0}', space=sflag, size = 0x4, scoped, tag = 'scoped memory for tpu_custom_call.1']
    #allocation13 [shape = 'u8[8192]{0}', space=vmem, size = 0x2000, scoped, tag = 'output window, operand 0, single buffered']
    %16 = vsyncpa [#allocation3], 0
    %17 = vsyncpa [#allocation6], 0
    %18 = vsyncpa [#allocation9], 0
    %19 = vsyncpa [#allocation12], 0
    %20 = vsyncpa [#allocation4], 0
    // Predicated region
    $region2: #{tpu_custom_call.1} parent=1 // pred_check
      _
    $region3: #{tpu_custom_call.1} parent=1 // pred_check_branch
      %22 = sbr.rel (0) target = $region5
    $region4: #{tpu_custom_call.1} parent=1 // pred_region
      %s24 = ssub.s32 256, 256
      %25 = vsyncadd [#allocation3], %s24
      %s26 = sshll.u32 [#allocation2], 4
      %s27 = int_to_ptr.vmem [resolvable:$true] %s26
      %32 = dma.hbm_to_vmem [thread:$0]  %s0, 256, %s27, [#allocation3], 128, 128, 8
    $region5: #{tpu_custom_call.1} parent=1 // pred_fallthru
      _
    // Predicated region
    $region6: #{tpu_custom_call.1} parent=1 // pred_check
      _
    $region7: #{tpu_custom_call.1} parent=1 // pred_check_branch
      %34 = sbr.rel (0) target = $region9
    $region8: #{tpu_custom_call.1} parent=1 // pred_region
      %s36 = ssub.s32 2048, 2048
      %37 = vsyncadd [#allocation6], %s36
      %s38 = sshll.u32 [#allocation5], 4
      %s39 = int_to_ptr.vmem [resolvable:$true] %s38
      %44 = dma.hbm_to_vmem [thread:$0]  %s1, 2048, %s39, [#allocation6], 128, 128, 8
    $region9: #{tpu_custom_call.1} parent=1 // pred_fallthru
      _
    // Predicated region
    $region10: #{tpu_custom_call.1} parent=1 // pred_check
      _
    $region11: #{tpu_custom_call.1} parent=1 // pred_check_branch
      %46 = sbr.rel (0) target = $region13
    $region12: #{tpu_custom_call.1} parent=1 // pred_region
      _
    $region13: #{tpu_custom_call.1} parent=1 // pred_fallthru
      _
    // Predicated region
    $region14: #{tpu_custom_call.1} parent=1 // pred_check
      _
    $region15: #{tpu_custom_call.1} parent=1 // pred_check_branch
      %48 = sbr.rel (0) target = $region17
    $region16: #{tpu_custom_call.1} parent=1 // pred_region
      %s50 = ssub.s32 2048, 2048
      %51 = vsyncadd [#allocation6], %s50
      %s52 = sshll.u32 [#allocation7], 4
      %s53 = int_to_ptr.vmem [resolvable:$true] %s52
      %58 = dma.hbm_to_vmem [thread:$0]  %s3, 2048, %s53, [#allocation6], 128, 128, 8
    $region17: #{tpu_custom_call.1} parent=1 // pred_fallthru
      _
    // Predicated region
    $region18: #{tpu_custom_call.1} parent=1 // pred_check
      _
    $region19: #{tpu_custom_call.1} parent=1 // pred_check_branch
      %60 = sbr.rel (0) target = $region21
    $region20: #{tpu_custom_call.1} parent=1 // pred_region
      _
    $region21: #{tpu_custom_call.1} parent=1 // pred_fallthru
      _
    // Predicated region
    $region22: #{tpu_custom_call.1} parent=1 // pred_check
      _
    $region23: #{tpu_custom_call.1} parent=1 // pred_check_branch
      %62 = sbr.rel (0) target = $region25
    $region24: #{tpu_custom_call.1} parent=1 // pred_region
      %s64 = ssub.s32 24576, 24576
      %65 = vsyncadd [#allocation9], %s64
      %s66 = sshll.u32 [#allocation8], 4
      %s67 = int_to_ptr.vmem [resolvable:$true] %s66
      %72 = dma.hbm_to_vmem [thread:$0]  %s5, 24576, %s67, [#allocation9], 1536, 1536, 96
    $region25: #{tpu_custom_call.1} parent=1 // pred_fallthru
      _
    // Predicated region
    $region26: #{tpu_custom_call.1} parent=1 // pred_check
      _
    $region27: #{tpu_custom_call.1} parent=1 // pred_check_branch
      %74 = sbr.rel (0) target = $region29
    $region28: #{tpu_custom_call.1} parent=1 // pred_region
      %s76 = ssub.s32 192, 192
      %77 = vsyncadd [#allocation9], %s76
      %s79 = sshll.u32 [#allocation10], 4
      %s80 = int_to_ptr.vmem [resolvable:$true] %s79
      %82 = dma.hbm_to_vmem [thread:$0]  %s6, 192, %s80, [#allocation9]
    $region29: #{tpu_custom_call.1} parent=1 // pred_fallthru
      _
    // Predicated region
    $region30: #{tpu_custom_call.1} parent=1 // pred_check
      _
    $region31: #{tpu_custom_call.1} parent=1 // pred_check_branch
      %84 = sbr.rel (0) target = $region33
    $region32: #{tpu_custom_call.1} parent=1 // pred_region
      %s86 = ssub.s32 8192, 8192
      %87 = vsyncadd [#allocation12], %s86
      %s88 = sshll.u32 [#allocation11], 4
      %s89 = int_to_ptr.vmem [resolvable:$true] %s88
      %94 = dma.hbm_to_vmem [thread:$0]  %s7, 8192, %s89, [#allocation12], 128, 128, 8
    $region33: #{tpu_custom_call.1} parent=1 // pred_fallthru
      _
    // Predicated region
    $region34: #{tpu_custom_call.1} parent=1 // pred_check
      _
    $region35: #{tpu_custom_call.1} parent=1 // pred_check_branch
      %96 = sbr.rel (0) target = $region37
    $region36: #{tpu_custom_call.1} parent=1 // pred_region
      _
    $region37: #{tpu_custom_call.1} parent=1 // pred_fallthru
      _
    // Predicated region
    $region38: #{tpu_custom_call.1} parent=1 // pred_check
      _
    $region39: #{tpu_custom_call.1} parent=1 // pred_check_branch
      %98 = sbr.rel (0) target = $region41
    $region40: #{tpu_custom_call.1} parent=1 // pred_region
      _
    $region41: #{tpu_custom_call.1} parent=1 // pred_fallthru
      _
    // Predicated region
    $region42: #{tpu_custom_call.1} parent=1 // pred_check
      _
    $region43: #{tpu_custom_call.1} parent=1 // pred_check_branch
      %100 = sbr.rel (0) target = $region45
    $region44: #{tpu_custom_call.1} parent=1 // pred_region
      _
    $region45: #{tpu_custom_call.1} parent=1 // pred_fallthru
      _
    // Predicated region
    $region46: #{tpu_custom_call.1} parent=1 // pred_check
      _
    $region47: #{tpu_custom_call.1} parent=1 // pred_check_branch
      %102 = sbr.rel (0) target = $region49
    $region48: #{tpu_custom_call.1} parent=1 // pred_region
      %103 = dma.done [#allocation3], 256
    $region49: #{tpu_custom_call.1} parent=1 // pred_fallthru
      _
    // Predicated region
    $region50: #{tpu_custom_call.1} parent=1 // pred_check
      _
    $region51: #{tpu_custom_call.1} parent=1 // pred_check_branch
      %105 = sbr.rel (0) target = $region53
    $region52: #{tpu_custom_call.1} parent=1 // pred_region
      %106 = dma.done [#allocation6], 2048
    $region53: #{tpu_custom_call.1} parent=1 // pred_fallthru
      _
    // Predicated region
    $region54: #{tpu_custom_call.1} parent=1 // pred_check
      _
    $region55: #{tpu_custom_call.1} parent=1 // pred_check_branch
      %108 = sbr.rel (0) target = $region57
    $region56: #{tpu_custom_call.1} parent=1 // pred_region
      %109 = dma.done [#allocation6], 2048
    $region57: #{tpu_custom_call.1} parent=1 // pred_fallthru
      _
    // Predicated region
    $region58: #{tpu_custom_call.1} parent=1 // pred_check
      _
    $region59: #{tpu_custom_call.1} parent=1 // pred_check_branch
      %111 = sbr.rel (0) target = $region61
    $region60: #{tpu_custom_call.1} parent=1 // pred_region
      %112 = dma.done [#allocation9], 24576
    $region61: #{tpu_custom_call.1} parent=1 // pred_fallthru
      _
    // Predicated region
    $region62: #{tpu_custom_call.1} parent=1 // pred_check
      _
    $region63: #{tpu_custom_call.1} parent=1 // pred_check_branch
      %114 = sbr.rel (0) target = $region65
    $region64: #{tpu_custom_call.1} parent=1 // pred_region
      %115 = dma.done [#allocation9], 192
    $region65: #{tpu_custom_call.1} parent=1 // pred_fallthru
      _
    // Predicated region
    $region66: #{tpu_custom_call.1} parent=1 // pred_check
      _
    $region67: #{tpu_custom_call.1} parent=1 // pred_check_branch
      %117 = sbr.rel (0) target = $region69
    $region68: #{tpu_custom_call.1} parent=1 // pred_region
      %118 = dma.done [#allocation12], 8192
    $region69: #{tpu_custom_call.1} parent=1 // pred_fallthru
      _
    %v119 = vld [vmem:[#allocation2] sm:$0xff]
    %v120 = vld [vmem:[#allocation2 + $0x8] sm:$0xff]
    %v121 = vld [vmem:[#allocation5] sm:$0xff]
    %v122 = vld [vmem:[#allocation5 + $0x8] sm:$0xff]
    %v123 = vld [vmem:[#allocation5 + $0x10] sm:$0xff]
    %v124 = vld [vmem:[#allocation5 + $0x18] sm:$0xff]
    %v125 = vld [vmem:[#allocation5 + $0x20] sm:$0xff]
    %v126 = vld [vmem:[#allocation5 + $0x28] sm:$0xff]
    %v127 = vld [vmem:[#allocation5 + $0x30] sm:$0xff]
    %v128 = vld [vmem:[#allocation5 + $0x38] sm:$0xff]
    %v129 = vld [vmem:[#allocation5 + $0x40] sm:$0xff]
    %v130 = vld [vmem:[#allocation5 + $0x48] sm:$0xff]
    %v131 = vld [vmem:[#allocation5 + $0x50] sm:$0xff]
    %v132 = vld [vmem:[#allocation5 + $0x58] sm:$0xff]
    %v133 = vld [vmem:[#allocation5 + $0x60] sm:$0xff]
    %v134 = vld [vmem:[#allocation5 + $0x68] sm:$0xff]
    %v135 = vld [vmem:[#allocation5 + $0x70] sm:$0xff]
    %v136 = vld [vmem:[#allocation5 + $0x78] sm:$0xff]
    %v137 = vld [vmem:[%s2] sm:$0x1]
    %v139 = vlaneseq
    %v140 = vshrl.u32 %v139, 7
    %v141 = vsub.s32 0, %v140
    %v142 = vrot.slane %v137, %v141
    %144 = vmatprep.subr.mxu0 0.0
    %145 = vmatpush1.msra.mxu0 %v136
    %146 = vmatprep.subr.mxu0 0.0
    %147 = vmatpush1.msra.mxu0 %v135
    %148 = vmatprep.subr.mxu0 0.0
    %149 = vmatpush1.msra.mxu0 %v134
    %150 = vmatprep.subr.mxu0 0.0
    %151 = vmatpush1.msra.mxu0 %v133
    %152 = vmatprep.subr.mxu0 0.0
    %153 = vmatpush1.msra.mxu0 %v132
    %154 = vmatprep.subr.mxu0 0.0
    %155 = vmatpush1.msra.mxu0 %v131
    %156 = vmatprep.subr.mxu0 0.0
    %157 = vmatpush1.msra.mxu0 %v130
    %158 = vmatprep.subr.mxu0 0.0
    %159 = vmatpush1.msra.mxu0 %v129
    %160 = vmatprep.subr.mxu0 0.0
    %161 = vmatpush1.msra.mxu0 %v128
    %162 = vmatprep.subr.mxu0 0.0
    %163 = vmatpush1.msra.mxu0 %v127
    %164 = vmatprep.subr.mxu0 0.0
    %165 = vmatpush1.msra.mxu0 %v126
    %166 = vmatprep.subr.mxu0 0.0
    %167 = vmatpush1.msra.mxu0 %v125
    %168 = vmatprep.subr.mxu0 0.0
    %169 = vmatpush1.msra.mxu0 %v124
    %170 = vmatprep.subr.mxu0 0.0
    %171 = vmatpush1.msra.mxu0 %v123
    %172 = vmatprep.subr.mxu0 0.0
    %173 = vmatpush1.msra.mxu0 %v122
    %174 = vmatprep.subr.mxu0 0.0
    %175 = vmatpush1.msra.mxu0 %v121
    %176 = vmatprep.subr.mxu0 0.0
    %177 = vmatpush2.msra.mxu0 0.0
    %178 = vmatprep.subr.mxu0 0.0
    %179 = vmatpush2.msra.mxu0 0.0
    %180 = vmatprep.subr.mxu0 0.0
    %181 = vmatpush2.msra.mxu0 0.0
    %182 = vmatprep.subr.mxu0 0.0
    %183 = vmatpush2.msra.mxu0 0.0
    %184 = vmatprep.subr.mxu0 0.0
    %185 = vmatpush2.msra.mxu0 0.0
    %186 = vmatprep.subr.mxu0 0.0
    %187 = vmatpush2.msra.mxu0 0.0
    %188 = vmatprep.subr.mxu0 0.0
    %189 = vmatpush2.msra.mxu0 0.0
    %190 = vmatprep.subr.mxu0 0.0
    %191 = vmatpush2.msra.mxu0 0.0
    %192 = vmatprep.subr.mxu0 0.0
    %193 = vmatpush2.msra.mxu0 0.0
    %194 = vmatprep.subr.mxu0 0.0
    %195 = vmatpush2.msra.mxu0 0.0
    %196 = vmatprep.subr.mxu0 0.0
    %197 = vmatpush2.msra.mxu0 0.0
    %198 = vmatprep.subr.mxu0 0.0
    %199 = vmatpush2.msra.mxu0 0.0
    %200 = vmatprep.subr.mxu0 0.0
    %201 = vmatpush2.msra.mxu0 0.0
    %202 = vmatprep.subr.mxu0 0.0
    %203 = vmatpush2.msra.mxu0 0.0
    %204 = vmatprep.subr.mxu0 0.0
    %205 = vmatpush2.msra.mxu0 0.0
    %206 = vmatprep.subr.mxu0 0.0
    %207 = vmatpush2.msra.mxu0 0.0
    %208 = vmatprep.mubr.f32.mxu0 0.0
    %209 = vmatmul.mubr.f32.gmra.mxu0 %v119
    %v210 = vpop.f32.mrf.mxu0
    %v211 = vadd.f32 %v142, %v210
    %v212 = vpop.f32.mrf.mxu0
    %213 = vmatprep.mubr.f32.mxu0 0.0
    %214 = vmatmul.mubr.f32.gmra.mxu0 %v120
    %v215 = vpop.f32.mrf.mxu0
    %v216 = vadd.f32 %v142, %v215
    %v217 = vpop.f32.mrf.mxu0
    %218 = vdwg.mxu0
    %v219 = vmax.f32 %v211, 0.0
    %v220 = vmax.f32 %v216, 0.0
    %v221 = vld [vmem:[#allocation7] sm:$0xff]
    %v222 = vld [vmem:[#allocation7 + $0x8] sm:$0xff]
    %v223 = vld [vmem:[#allocation7 + $0x10] sm:$0xff]
    %v224 = vld [vmem:[#allocation7 + $0x18] sm:$0xff]
    %v225 = vld [vmem:[#allocation7 + $0x20] sm:$0xff]
    %v226 = vld [vmem:[#allocation7 + $0x28] sm:$0xff]
    %v227 = vld [vmem:[#allocation7 + $0x30] sm:$0xff]
    %v228 = vld [vmem:[#allocation7 + $0x38] sm:$0xff]
    %v229 = vld [vmem:[#allocation7 + $0x40] sm:$0xff]
    %v230 = vld [vmem:[#allocation7 + $0x48] sm:$0xff]
    %v231 = vld [vmem:[#allocation7 + $0x50] sm:$0xff]
    %v232 = vld [vmem:[#allocation7 + $0x58] sm:$0xff]
    %v233 = vld [vmem:[#allocation7 + $0x60] sm:$0xff]
    %v234 = vld [vmem:[#allocation7 + $0x68] sm:$0xff]
    %v235 = vld [vmem:[#allocation7 + $0x70] sm:$0xff]
    %v236 = vld [vmem:[#allocation7 + $0x78] sm:$0xff]
    %v237 = vld [vmem:[%s4] sm:$0x1]
    %v239 = vlaneseq
    %v240 = vshrl.u32 %v239, 7
    %v241 = vsub.s32 0, %v240
    %v242 = vrot.slane %v237, %v241
    %244 = vmatprep.subr.mxu0 0.0
    %245 = vmatpush1.msra.mxu0 %v236
    %246 = vmatprep.subr.mxu0 0.0
    %247 = vmatpush1.msra.mxu0 %v235
    %248 = vmatprep.subr.mxu0 0.0
    %249 = vmatpush1.msra.mxu0 %v234
    %250 = vmatprep.subr.mxu0 0.0
    %251 = vmatpush1.msra.mxu0 %v233
    %252 = vmatprep.subr.mxu0 0.0
    %253 = vmatpush1.msra.mxu0 %v232
    %254 = vmatprep.subr.mxu0 0.0
    %255 = vmatpush1.msra.mxu0 %v231
    %256 = vmatprep.subr.mxu0 0.0
    %257 = vmatpush1.msra.mxu0 %v230
    %258 = vmatprep.subr.mxu0 0.0
    %259 = vmatpush1.msra.mxu0 %v229
    %260 = vmatprep.subr.mxu0 0.0
    %261 = vmatpush1.msra.mxu0 %v228
    %262 = vmatprep.subr.mxu0 0.0
    %263 = vmatpush1.msra.mxu0 %v227
    %264 = vmatprep.subr.mxu0 0.0
    %265 = vmatpush1.msra.mxu0 %v226
    %266 = vmatprep.subr.mxu0 0.0
    %267 = vmatpush1.msra.mxu0 %v225
    %268 = vmatprep.subr.mxu0 0.0
    %269 = vmatpush1.msra.mxu0 %v224
    %270 = vmatprep.subr.mxu0 0.0
    %271 = vmatpush1.msra.mxu0 %v223
    %272 = vmatprep.subr.mxu0 0.0
    %273 = vmatpush1.msra.mxu0 %v222
    %274 = vmatprep.subr.mxu0 0.0
    %275 = vmatpush1.msra.mxu0 %v221
    %276 = vmatprep.subr.mxu0 0.0
    %277 = vmatpush2.msra.mxu0 0.0
    %278 = vmatprep.subr.mxu0 0.0
    %279 = vmatpush2.msra.mxu0 0.0
    %280 = vmatprep.subr.mxu0 0.0
    %281 = vmatpush2.msra.mxu0 0.0
    %282 = vmatprep.subr.mxu0 0.0
    %283 = vmatpush2.msra.mxu0 0.0
    %284 = vmatprep.subr.mxu0 0.0
    %285 = vmatpush2.msra.mxu0 0.0
    %286 = vmatprep.subr.mxu0 0.0
    %287 = vmatpush2.msra.mxu0 0.0
    %288 = vmatprep.subr.mxu0 0.0
    %289 = vmatpush2.msra.mxu0 0.0
    %290 = vmatprep.subr.mxu0 0.0
    %291 = vmatpush2.msra.mxu0 0.0
    %292 = vmatprep.subr.mxu0 0.0
    %293 = vmatpush2.msra.mxu0 0.0
    %294 = vmatprep.subr.mxu0 0.0
    %295 = vmatpush2.msra.mxu0 0.0
    %296 = vmatprep.subr.mxu0 0.0
    %297 = vmatpush2.msra.mxu0 0.0
    %298 = vmatprep.subr.mxu0 0.0
    %299 = vmatpush2.msra.mxu0 0.0
    %300 = vmatprep.subr.mxu0 0.0
    %301 = vmatpush2.msra.mxu0 0.0
    %302 = vmatprep.subr.mxu0 0.0
    %303 = vmatpush2.msra.mxu0 0.0
    %304 = vmatprep.subr.mxu0 0.0
    %305 = vmatpush2.msra.mxu0 0.0
    %306 = vmatprep.subr.mxu0 0.0
    %307 = vmatpush2.msra.mxu0 0.0
    %308 = vmatprep.mubr.f32.mxu0 0.0
    %309 = vmatmul.mubr.f32.gmra.mxu0 %v219
    %v310 = vpop.f32.mrf.mxu0
    %v311 = vadd.f32 %v242, %v310
    %v312 = vpop.f32.mrf.mxu0
    %313 = vmatprep.mubr.f32.mxu0 0.0
    %314 = vmatmul.mubr.f32.gmra.mxu0 %v220
    %v315 = vpop.f32.mrf.mxu0
    %v316 = vadd.f32 %v242, %v315
    %v317 = vpop.f32.mrf.mxu0
    %318 = vdwg.mxu0
    %v319 = vmax.f32 %v311, 0.0
    %v320 = vmax.f32 %v316, 0.0
    %v321 = vld [vmem:[#allocation8] sm:$0xff]
    %v322 = vld [vmem:[#allocation8 + $0x8] sm:$0xff]
    %v323 = vld [vmem:[#allocation8 + $0x10] sm:$0xff]
    %v324 = vld [vmem:[#allocation8 + $0x18] sm:$0xff]
    %v325 = vld [vmem:[#allocation8 + $0x20] sm:$0xff]
    %v326 = vld [vmem:[#allocation8 + $0x28] sm:$0xff]
    %v327 = vld [vmem:[#allocation8 + $0x30] sm:$0xff]
    %v328 = vld [vmem:[#allocation8 + $0x38] sm:$0xff]
    %v329 = vld [vmem:[#allocation8 + $0x40] sm:$0xff]
    %v330 = vld [vmem:[#allocation8 + $0x48] sm:$0xff]
    %v331 = vld [vmem:[#allocation8 + $0x50] sm:$0xff]
    %v332 = vld [vmem:[#allocation8 + $0x58] sm:$0xff]
    %v333 = vld [vmem:[#allocation8 + $0x60] sm:$0xff]
    %v334 = vld [vmem:[#allocation8 + $0x68] sm:$0xff]
    %v335 = vld [vmem:[#allocation8 + $0x70] sm:$0xff]
    %v336 = vld [vmem:[#allocation8 + $0x78] sm:$0xff]
    %v337 = vld [vmem:[#allocation8 + $0x80] sm:$0xff]
    %v338 = vld [vmem:[#allocation8 + $0x88] sm:$0xff]
    %v339 = vld [vmem:[#allocation8 + $0x90] sm:$0xff]
    %v340 = vld [vmem:[#allocation8 + $0x98] sm:$0xff]
    %v341 = vld [vmem:[#allocation8 + $0xa0] sm:$0xff]
    %v342 = vld [vmem:[#allocation8 + $0xa8] sm:$0xff]
    %v343 = vld [vmem:[#allocation8 + $0xb0] sm:$0xff]
    %v344 = vld [vmem:[#allocation8 + $0xb8] sm:$0xff]
    %v345 = vld [vmem:[#allocation8 + $0xc0] sm:$0xff]
    %v346 = vld [vmem:[#allocation8 + $0xc8] sm:$0xff]
    %v347 = vld [vmem:[#allocation8 + $0xd0] sm:$0xff]
    %v348 = vld [vmem:[#allocation8 + $0xd8] sm:$0xff]
    %v349 = vld [vmem:[#allocation8 + $0xe0] sm:$0xff]
    %v350 = vld [vmem:[#allocation8 + $0xe8] sm:$0xff]
    %v351 = vld [vmem:[#allocation8 + $0xf0] sm:$0xff]
    %v352 = vld [vmem:[#allocation8 + $0xf8] sm:$0xff]
    %v353 = vld [vmem:[#allocation8 + $0x100] sm:$0xff]
    %v354 = vld [vmem:[#allocation8 + $0x108] sm:$0xff]
    %v355 = vld [vmem:[#allocation8 + $0x110] sm:$0xff]
    %v356 = vld [vmem:[#allocation8 + $0x118] sm:$0xff]
    %v357 = vld [vmem:[#allocation8 + $0x120] sm:$0xff]
    %v358 = vld [vmem:[#allocation8 + $0x128] sm:$0xff]
    %v359 = vld [vmem:[#allocation8 + $0x130] sm:$0xff]
    %v360 = vld [vmem:[#allocation8 + $0x138] sm:$0xff]
    %v361 = vld [vmem:[#allocation8 + $0x140] sm:$0xff]
    %v362 = vld [vmem:[#allocation8 + $0x148] sm:$0xff]
    %v363 = vld [vmem:[#allocation8 + $0x150] sm:$0xff]
    %v364 = vld [vmem:[#allocation8 + $0x158] sm:$0xff]
    %v365 = vld [vmem:[#allocation8 + $0x160] sm:$0xff]
    %v366 = vld [vmem:[#allocation8 + $0x168] sm:$0xff]
    %v367 = vld [vmem:[#allocation8 + $0x170] sm:$0xff]
    %v368 = vld [vmem:[#allocation8 + $0x178] sm:$0xff]
    %v369 = vld [vmem:[#allocation8 + $0x180] sm:$0xff]
    %v370 = vld [vmem:[#allocation8 + $0x188] sm:$0xff]
    %v371 = vld [vmem:[#allocation8 + $0x190] sm:$0xff]
    %v372 = vld [vmem:[#allocation8 + $0x198] sm:$0xff]
    %v373 = vld [vmem:[#allocation8 + $0x1a0] sm:$0xff]
    %v374 = vld [vmem:[#allocation8 + $0x1a8] sm:$0xff]
    %v375 = vld [vmem:[#allocation8 + $0x1b0] sm:$0xff]
    %v376 = vld [vmem:[#allocation8 + $0x1b8] sm:$0xff]
    %v377 = vld [vmem:[#allocation8 + $0x1c0] sm:$0xff]
    %v378 = vld [vmem:[#allocation8 + $0x1c8] sm:$0xff]
    %v379 = vld [vmem:[#allocation8 + $0x1d0] sm:$0xff]
    %v380 = vld [vmem:[#allocation8 + $0x1d8] sm:$0xff]
    %v381 = vld [vmem:[#allocation8 + $0x1e0] sm:$0xff]
    %v382 = vld [vmem:[#allocation8 + $0x1e8] sm:$0xff]
    %v383 = vld [vmem:[#allocation8 + $0x1f0] sm:$0xff]
    %v384 = vld [vmem:[#allocation8 + $0x1f8] sm:$0xff]
    %v385 = vld [vmem:[#allocation8 + $0x200] sm:$0xff]
    %v386 = vld [vmem:[#allocation8 + $0x208] sm:$0xff]
    %v387 = vld [vmem:[#allocation8 + $0x210] sm:$0xff]
    %v388 = vld [vmem:[#allocation8 + $0x218] sm:$0xff]
    %v389 = vld [vmem:[#allocation8 + $0x220] sm:$0xff]
    %v390 = vld [vmem:[#allocation8 + $0x228] sm:$0xff]
    %v391 = vld [vmem:[#allocation8 + $0x230] sm:$0xff]
    %v392 = vld [vmem:[#allocation8 + $0x238] sm:$0xff]
    %v393 = vld [vmem:[#allocation8 + $0x240] sm:$0xff]
    %v394 = vld [vmem:[#allocation8 + $0x248] sm:$0xff]
    %v395 = vld [vmem:[#allocation8 + $0x250] sm:$0xff]
    %v396 = vld [vmem:[#allocation8 + $0x258] sm:$0xff]
    %v397 = vld [vmem:[#allocation8 + $0x260] sm:$0xff]
    %v398 = vld [vmem:[#allocation8 + $0x268] sm:$0xff]
    %v399 = vld [vmem:[#allocation8 + $0x270] sm:$0xff]
    %v400 = vld [vmem:[#allocation8 + $0x278] sm:$0xff]
    %v401 = vld [vmem:[#allocation8 + $0x280] sm:$0xff]
    %v402 = vld [vmem:[#allocation8 + $0x288] sm:$0xff]
    %v403 = vld [vmem:[#allocation8 + $0x290] sm:$0xff]
    %v404 = vld [vmem:[#allocation8 + $0x298] sm:$0xff]
    %v405 = vld [vmem:[#allocation8 + $0x2a0] sm:$0xff]
    %v406 = vld [vmem:[#allocation8 + $0x2a8] sm:$0xff]
    %v407 = vld [vmem:[#allocation8 + $0x2b0] sm:$0xff]
    %v408 = vld [vmem:[#allocation8 + $0x2b8] sm:$0xff]
    %v409 = vld [vmem:[#allocation8 + $0x2c0] sm:$0xff]
    %v410 = vld [vmem:[#allocation8 + $0x2c8] sm:$0xff]
    %v411 = vld [vmem:[#allocation8 + $0x2d0] sm:$0xff]
    %v412 = vld [vmem:[#allocation8 + $0x2d8] sm:$0xff]
    %v413 = vld [vmem:[#allocation8 + $0x2e0] sm:$0xff]
    %v414 = vld [vmem:[#allocation8 + $0x2e8] sm:$0xff]
    %v415 = vld [vmem:[#allocation8 + $0x2f0] sm:$0xff]
    %v416 = vld [vmem:[#allocation8 + $0x2f8] sm:$0xff]
    %v417 = vld [vmem:[#allocation8 + $0x300] sm:$0xff]
    %v418 = vld [vmem:[#allocation8 + $0x308] sm:$0xff]
    %v419 = vld [vmem:[#allocation8 + $0x310] sm:$0xff]
    %v420 = vld [vmem:[#allocation8 + $0x318] sm:$0xff]
    %v421 = vld [vmem:[#allocation8 + $0x320] sm:$0xff]
    %v422 = vld [vmem:[#allocation8 + $0x328] sm:$0xff]
    %v423 = vld [vmem:[#allocation8 + $0x330] sm:$0xff]
    %v424 = vld [vmem:[#allocation8 + $0x338] sm:$0xff]
    %v425 = vld [vmem:[#allocation8 + $0x340] sm:$0xff]
    %v426 = vld [vmem:[#allocation8 + $0x348] sm:$0xff]
    %v427 = vld [vmem:[#allocation8 + $0x350] sm:$0xff]
    %v428 = vld [vmem:[#allocation8 + $0x358] sm:$0xff]
    %v429 = vld [vmem:[#allocation8 + $0x360] sm:$0xff]
    %v430 = vld [vmem:[#allocation8 + $0x368] sm:$0xff]
    %v431 = vld [vmem:[#allocation8 + $0x370] sm:$0xff]
    %v432 = vld [vmem:[#allocation8 + $0x378] sm:$0xff]
    %v433 = vld [vmem:[#allocation8 + $0x380] sm:$0xff]
    %v434 = vld [vmem:[#allocation8 + $0x388] sm:$0xff]
    %v435 = vld [vmem:[#allocation8 + $0x390] sm:$0xff]
    %v436 = vld [vmem:[#allocation8 + $0x398] sm:$0xff]
    %v437 = vld [vmem:[#allocation8 + $0x3a0] sm:$0xff]
    %v438 = vld [vmem:[#allocation8 + $0x3a8] sm:$0xff]
    %v439 = vld [vmem:[#allocation8 + $0x3b0] sm:$0xff]
    %v440 = vld [vmem:[#allocation8 + $0x3b8] sm:$0xff]
    %v441 = vld [vmem:[#allocation8 + $0x3c0] sm:$0xff]
    %v442 = vld [vmem:[#allocation8 + $0x3c8] sm:$0xff]
    %v443 = vld [vmem:[#allocation8 + $0x3d0] sm:$0xff]
    %v444 = vld [vmem:[#allocation8 + $0x3d8] sm:$0xff]
    %v445 = vld [vmem:[#allocation8 + $0x3e0] sm:$0xff]
    %v446 = vld [vmem:[#allocation8 + $0x3e8] sm:$0xff]
    %v447 = vld [vmem:[#allocation8 + $0x3f0] sm:$0xff]
    %v448 = vld [vmem:[#allocation8 + $0x3f8] sm:$0xff]
    %v449 = vld [vmem:[#allocation8 + $0x400] sm:$0xff]
    %v450 = vld [vmem:[#allocation8 + $0x408] sm:$0xff]
    %v451 = vld [vmem:[#allocation8 + $0x410] sm:$0xff]
    %v452 = vld [vmem:[#allocation8 + $0x418] sm:$0xff]
    %v453 = vld [vmem:[#allocation8 + $0x420] sm:$0xff]
    %v454 = vld [vmem:[#allocation8 + $0x428] sm:$0xff]
    %v455 = vld [vmem:[#allocation8 + $0x430] sm:$0xff]
    %v456 = vld [vmem:[#allocation8 + $0x438] sm:$0xff]
    %v457 = vld [vmem:[#allocation8 + $0x440] sm:$0xff]
    %v458 = vld [vmem:[#allocation8 + $0x448] sm:$0xff]
    %v459 = vld [vmem:[#allocation8 + $0x450] sm:$0xff]
    %v460 = vld [vmem:[#allocation8 + $0x458] sm:$0xff]
    %v461 = vld [vmem:[#allocation8 + $0x460] sm:$0xff]
    %v462 = vld [vmem:[#allocation8 + $0x468] sm:$0xff]
    %v463 = vld [vmem:[#allocation8 + $0x470] sm:$0xff]
    %v464 = vld [vmem:[#allocation8 + $0x478] sm:$0xff]
    %v465 = vld [vmem:[#allocation8 + $0x480] sm:$0xff]
    %v466 = vld [vmem:[#allocation8 + $0x488] sm:$0xff]
    %v467 = vld [vmem:[#allocation8 + $0x490] sm:$0xff]
    %v468 = vld [vmem:[#allocation8 + $0x498] sm:$0xff]
    %v469 = vld [vmem:[#allocation8 + $0x4a0] sm:$0xff]
    %v470 = vld [vmem:[#allocation8 + $0x4a8] sm:$0xff]
    %v471 = vld [vmem:[#allocation8 + $0x4b0] sm:$0xff]
    %v472 = vld [vmem:[#allocation8 + $0x4b8] sm:$0xff]
    %v473 = vld [vmem:[#allocation8 + $0x4c0] sm:$0xff]
    %v474 = vld [vmem:[#allocation8 + $0x4c8] sm:$0xff]
    %v475 = vld [vmem:[#allocation8 + $0x4d0] sm:$0xff]
    %v476 = vld [vmem:[#allocation8 + $0x4d8] sm:$0xff]
    %v477 = vld [vmem:[#allocation8 + $0x4e0] sm:$0xff]
    %v478 = vld [vmem:[#allocation8 + $0x4e8] sm:$0xff]
    %v479 = vld [vmem:[#allocation8 + $0x4f0] sm:$0xff]
    %v480 = vld [vmem:[#allocation8 + $0x4f8] sm:$0xff]
    %v481 = vld [vmem:[#allocation8 + $0x500] sm:$0xff]
    %v482 = vld [vmem:[#allocation8 + $0x508] sm:$0xff]
    %v483 = vld [vmem:[#allocation8 + $0x510] sm:$0xff]
    %v484 = vld [vmem:[#allocation8 + $0x518] sm:$0xff]
    %v485 = vld [vmem:[#allocation8 + $0x520] sm:$0xff]
    %v486 = vld [vmem:[#allocation8 + $0x528] sm:$0xff]
    %v487 = vld [vmem:[#allocation8 + $0x530] sm:$0xff]
    %v488 = vld [vmem:[#allocation8 + $0x538] sm:$0xff]
    %v489 = vld [vmem:[#allocation8 + $0x540] sm:$0xff]
    %v490 = vld [vmem:[#allocation8 + $0x548] sm:$0xff]
    %v491 = vld [vmem:[#allocation8 + $0x550] sm:$0xff]
    %v492 = vld [vmem:[#allocation8 + $0x558] sm:$0xff]
    %v493 = vld [vmem:[#allocation8 + $0x560] sm:$0xff]
    %v494 = vld [vmem:[#allocation8 + $0x568] sm:$0xff]
    %v495 = vld [vmem:[#allocation8 + $0x570] sm:$0xff]
    %v496 = vld [vmem:[#allocation8 + $0x578] sm:$0xff]
    %v497 = vld [vmem:[#allocation8 + $0x580] sm:$0xff]
    %v498 = vld [vmem:[#allocation8 + $0x588] sm:$0xff]
    %v499 = vld [vmem:[#allocation8 + $0x590] sm:$0xff]
    %v500 = vld [vmem:[#allocation8 + $0x598] sm:$0xff]
    %v501 = vld [vmem:[#allocation8 + $0x5a0] sm:$0xff]
    %v502 = vld [vmem:[#allocation8 + $0x5a8] sm:$0xff]
    %v503 = vld [vmem:[#allocation8 + $0x5b0] sm:$0xff]
    %v504 = vld [vmem:[#allocation8 + $0x5b8] sm:$0xff]
    %v505 = vld [vmem:[#allocation8 + $0x5c0] sm:$0xff]
    %v506 = vld [vmem:[#allocation8 + $0x5c8] sm:$0xff]
    %v507 = vld [vmem:[#allocation8 + $0x5d0] sm:$0xff]
    %v508 = vld [vmem:[#allocation8 + $0x5d8] sm:$0xff]
    %v509 = vld [vmem:[#allocation8 + $0x5e0] sm:$0xff]
    %v510 = vld [vmem:[#allocation8 + $0x5e8] sm:$0xff]
    %v511 = vld [vmem:[#allocation8 + $0x5f0] sm:$0xff]
    %v512 = vld [vmem:[#allocation8 + $0x5f8] sm:$0xff]
    %v513 = vld [vmem:[#allocation10] sm:$0xff]
    %v514 = vld [vmem:[#allocation10 + $0x8] sm:$0xf]
    %v517 = vlaneseq
    %v518 = vshrl.u32 %v517, 7
    %v519 = vsub.s32 0, %v518
    %v520 = vrot.slane %v513, %v519
    %v521 = vlaneseq
    %v522 = vshrl.u32 %v521, 7
    %v523 = vsub.s32 1, %v522
    %v524 = vrot.slane %v513, %v523
    %v525 = vlaneseq
    %v526 = vshrl.u32 %v525, 7
    %v527 = vsub.s32 2, %v526
    %v528 = vrot.slane %v513, %v527
    %v529 = vlaneseq
    %v530 = vshrl.u32 %v529, 7
    %v531 = vsub.s32 3, %v530
    %v532 = vrot.slane %v513, %v531
    %v533 = vlaneseq
    %v534 = vshrl.u32 %v533, 7
    %v535 = vsub.s32 4, %v534
    %v536 = vrot.slane %v513, %v535
    %v537 = vlaneseq
    %v538 = vshrl.u32 %v537, 7
    %v539 = vsub.s32 5, %v538
    %v540 = vrot.slane %v513, %v539
    %v541 = vlaneseq
    %v542 = vshrl.u32 %v541, 7
    %v543 = vsub.s32 6, %v542
    %v544 = vrot.slane %v513, %v543
    %v545 = vlaneseq
    %v546 = vshrl.u32 %v545, 7
    %v547 = vsub.s32 7, %v546
    %v548 = vrot.slane %v513, %v547
    %v549 = vlaneseq
    %v550 = vshrl.u32 %v549, 7
    %v551 = vsub.s32 0, %v550
    %v552 = vrot.slane %v514, %v551
    %v553 = vlaneseq
    %v554 = vshrl.u32 %v553, 7
    %v555 = vsub.s32 1, %v554
    %v556 = vrot.slane %v514, %v555
    %v557 = vlaneseq
    %v558 = vshrl.u32 %v557, 7
    %v559 = vsub.s32 2, %v558
    %v560 = vrot.slane %v514, %v559
    %v561 = vlaneseq
    %v562 = vshrl.u32 %v561, 7
    %v563 = vsub.s32 3, %v562
    %v564 = vrot.slane %v514, %v563
    %577 = vmatprep.subr.mxu0 %v502
    %578 = vmatpush1.msra.mxu0 %v501
    %579 = vmatprep.subr.mxu0 %v490
    %580 = vmatpush1.msra.mxu0 %v489
    %581 = vmatprep.subr.mxu0 %v478
    %582 = vmatpush1.msra.mxu0 %v477
    %583 = vmatprep.subr.mxu0 %v466
    %584 = vmatpush1.msra.mxu0 %v465
    %585 = vmatprep.subr.mxu0 %v454
    %586 = vmatpush1.msra.mxu0 %v453
    %587 = vmatprep.subr.mxu0 %v442
    %588 = vmatpush1.msra.mxu0 %v441
    %589 = vmatprep.subr.mxu0 %v430
    %590 = vmatpush1.msra.mxu0 %v429
    %591 = vmatprep.subr.mxu0 %v418
    %592 = vmatpush1.msra.mxu0 %v417
    %593 = vmatprep.subr.mxu0 %v406
    %594 = vmatpush1.msra.mxu0 %v405
    %595 = vmatprep.subr.mxu0 %v394
    %596 = vmatpush1.msra.mxu0 %v393
    %597 = vmatprep.subr.mxu0 %v382
    %598 = vmatpush1.msra.mxu0 %v381
    %599 = vmatprep.subr.mxu0 %v370
    %600 = vmatpush1.msra.mxu0 %v369
    %601 = vmatprep.subr.mxu0 %v358
    %602 = vmatpush1.msra.mxu0 %v357
    %603 = vmatprep.subr.mxu0 %v346
    %604 = vmatpush1.msra.mxu0 %v345
    %605 = vmatprep.subr.mxu0 %v334
    %606 = vmatpush1.msra.mxu0 %v333
    %607 = vmatprep.subr.mxu0 %v322
    %608 = vmatpush1.msra.mxu0 %v321
    %609 = vmatprep.subr.mxu0 0.0
    %610 = vmatpush2.msra.mxu0 0.0
    %611 = vmatprep.subr.mxu0 0.0
    %612 = vmatpush2.msra.mxu0 0.0
    %613 = vmatprep.subr.mxu0 0.0
    %614 = vmatpush2.msra.mxu0 0.0
    %615 = vmatprep.subr.mxu0 0.0
    %616 = vmatpush2.msra.mxu0 0.0
    %617 = vmatprep.subr.mxu0 0.0
    %618 = vmatpush2.msra.mxu0 0.0
    %619 = vmatprep.subr.mxu0 0.0
    %620 = vmatpush2.msra.mxu0 0.0
    %621 = vmatprep.subr.mxu0 0.0
    %622 = vmatpush2.msra.mxu0 0.0
    %623 = vmatprep.subr.mxu0 0.0
    %624 = vmatpush2.msra.mxu0 0.0
    %625 = vmatprep.subr.mxu0 0.0
    %626 = vmatpush2.msra.mxu0 0.0
    %627 = vmatprep.subr.mxu0 0.0
    %628 = vmatpush2.msra.mxu0 0.0
    %629 = vmatprep.subr.mxu0 0.0
    %630 = vmatpush2.msra.mxu0 0.0
    %631 = vmatprep.subr.mxu0 0.0
    %632 = vmatpush2.msra.mxu0 0.0
    %633 = vmatprep.subr.mxu0 0.0
    %634 = vmatpush2.msra.mxu0 0.0
    %635 = vmatprep.subr.mxu0 0.0
    %636 = vmatpush2.msra.mxu0 0.0
    %637 = vmatprep.subr.mxu0 0.0
    %638 = vmatpush2.msra.mxu0 0.0
    %639 = vmatprep.subr.mxu0 0.0
    %640 = vmatpush2.msra.mxu0 0.0
    %641 = vmatprep.mubr.f32.mxu0 0.0
    %642 = vmatmul.mubr.f32.gmra.mxu0 %v319
    %v643 = vpop.f32.mrf.mxu0
    %v644 = vadd.f32 %v520, %v643
    %v645 = vpop.f32.mrf.mxu0
    %v646 = vadd.f32 %v524, %v645
    %647 = vmatprep.mubr.f32.mxu0 0.0
    %648 = vmatmul.mubr.f32.gmra.mxu0 %v320
    %v649 = vpop.f32.mrf.mxu0
    %v650 = vadd.f32 %v520, %v649
    %v651 = vpop.f32.mrf.mxu0
    %v652 = vadd.f32 %v524, %v651
    %653 = vdwg.mxu0
    %654 = vmatprep.subr.mxu0 %v504
    %655 = vmatpush1.msra.mxu0 %v503
    %656 = vmatprep.subr.mxu0 %v492
    %657 = vmatpush1.msra.mxu0 %v491
    %658 = vmatprep.subr.mxu0 %v480
    %659 = vmatpush1.msra.mxu0 %v479
    %660 = vmatprep.subr.mxu0 %v468
    %661 = vmatpush1.msra.mxu0 %v467
    %662 = vmatprep.subr.mxu0 %v456
    %663 = vmatpush1.msra.mxu0 %v455
    %664 = vmatprep.subr.mxu0 %v444
    %665 = vmatpush1.msra.mxu0 %v443
    %666 = vmatprep.subr.mxu0 %v432
    %667 = vmatpush1.msra.mxu0 %v431
    %668 = vmatprep.subr.mxu0 %v420
    %669 = vmatpush1.msra.mxu0 %v419
    %670 = vmatprep.subr.mxu0 %v408
    %671 = vmatpush1.msra.mxu0 %v407
    %672 = vmatprep.subr.mxu0 %v396
    %673 = vmatpush1.msra.mxu0 %v395
    %674 = vmatprep.subr.mxu0 %v384
    %675 = vmatpush1.msra.mxu0 %v383
    %676 = vmatprep.subr.mxu0 %v372
    %677 = vmatpush1.msra.mxu0 %v371
    %678 = vmatprep.subr.mxu0 %v360
    %679 = vmatpush1.msra.mxu0 %v359
    %680 = vmatprep.subr.mxu0 %v348
    %681 = vmatpush1.msra.mxu0 %v347
    %682 = vmatprep.subr.mxu0 %v336
    %683 = vmatpush1.msra.mxu0 %v335
    %684 = vmatprep.subr.mxu0 %v324
    %685 = vmatpush1.msra.mxu0 %v323
    %686 = vmatprep.subr.mxu0 0.0
    %687 = vmatpush2.msra.mxu0 0.0
    %688 = vmatprep.subr.mxu0 0.0
    %689 = vmatpush2.msra.mxu0 0.0
    %690 = vmatprep.subr.mxu0 0.0
    %691 = vmatpush2.msra.mxu0 0.0
    %692 = vmatprep.subr.mxu0 0.0
    %693 = vmatpush2.msra.mxu0 0.0
    %694 = vmatprep.subr.mxu0 0.0
    %695 = vmatpush2.msra.mxu0 0.0
    %696 = vmatprep.subr.mxu0 0.0
    %697 = vmatpush2.msra.mxu0 0.0
    %698 = vmatprep.subr.mxu0 0.0
    %699 = vmatpush2.msra.mxu0 0.0
    %700 = vmatprep.subr.mxu0 0.0
    %701 = vmatpush2.msra.mxu0 0.0
    %702 = vmatprep.subr.mxu0 0.0
    %703 = vmatpush2.msra.mxu0 0.0
    %704 = vmatprep.subr.mxu0 0.0
    %705 = vmatpush2.msra.mxu0 0.0
    %706 = vmatprep.subr.mxu0 0.0
    %707 = vmatpush2.msra.mxu0 0.0
    %708 = vmatprep.subr.mxu0 0.0
    %709 = vmatpush2.msra.mxu0 0.0
    %710 = vmatprep.subr.mxu0 0.0
    %711 = vmatpush2.msra.mxu0 0.0
    %712 = vmatprep.subr.mxu0 0.0
    %713 = vmatpush2.msra.mxu0 0.0
    %714 = vmatprep.subr.mxu0 0.0
    %715 = vmatpush2.msra.mxu0 0.0
    %716 = vmatprep.subr.mxu0 0.0
    %717 = vmatpush2.msra.mxu0 0.0
    %718 = vmatprep.mubr.f32.mxu0 0.0
    %719 = vmatmul.mubr.f32.gmra.mxu0 %v319
    %v720 = vpop.f32.mrf.mxu0
    %v721 = vadd.f32 %v528, %v720
    %v722 = vpop.f32.mrf.mxu0
    %v723 = vadd.f32 %v532, %v722
    %724 = vmatprep.mubr.f32.mxu0 0.0
    %725 = vmatmul.mubr.f32.gmra.mxu0 %v320
    %v726 = vpop.f32.mrf.mxu0
    %v727 = vadd.f32 %v528, %v726
    %v728 = vpop.f32.mrf.mxu0
    %v729 = vadd.f32 %v532, %v728
    %730 = vdwg.mxu0
    %731 = vmatprep.subr.mxu0 %v506
    %732 = vmatpush1.msra.mxu0 %v505
    %733 = vmatprep.subr.mxu0 %v494
    %734 = vmatpush1.msra.mxu0 %v493
    %735 = vmatprep.subr.mxu0 %v482
    %736 = vmatpush1.msra.mxu0 %v481
    %737 = vmatprep.subr.mxu0 %v470
    %738 = vmatpush1.msra.mxu0 %v469
    %739 = vmatprep.subr.mxu0 %v458
    %740 = vmatpush1.msra.mxu0 %v457
    %741 = vmatprep.subr.mxu0 %v446
    %742 = vmatpush1.msra.mxu0 %v445
    %743 = vmatprep.subr.mxu0 %v434
    %744 = vmatpush1.msra.mxu0 %v433
    %745 = vmatprep.subr.mxu0 %v422
    %746 = vmatpush1.msra.mxu0 %v421
    %747 = vmatprep.subr.mxu0 %v410
    %748 = vmatpush1.msra.mxu0 %v409
    %749 = vmatprep.subr.mxu0 %v398
    %750 = vmatpush1.msra.mxu0 %v397
    %751 = vmatprep.subr.mxu0 %v386
    %752 = vmatpush1.msra.mxu0 %v385
    %753 = vmatprep.subr.mxu0 %v374
    %754 = vmatpush1.msra.mxu0 %v373
    %755 = vmatprep.subr.mxu0 %v362
    %756 = vmatpush1.msra.mxu0 %v361
    %757 = vmatprep.subr.mxu0 %v350
    %758 = vmatpush1.msra.mxu0 %v349
    %759 = vmatprep.subr.mxu0 %v338
    %760 = vmatpush1.msra.mxu0 %v337
    %761 = vmatprep.subr.mxu0 %v326
    %762 = vmatpush1.msra.mxu0 %v325
    %763 = vmatprep.subr.mxu0 0.0
    %764 = vmatpush2.msra.mxu0 0.0
    %765 = vmatprep.subr.mxu0 0.0
    %766 = vmatpush2.msra.mxu0 0.0
    %767 = vmatprep.subr.mxu0 0.0
    %768 = vmatpush2.msra.mxu0 0.0
    %769 = vmatprep.subr.mxu0 0.0
    %770 = vmatpush2.msra.mxu0 0.0
    %771 = vmatprep.subr.mxu0 0.0
    %772 = vmatpush2.msra.mxu0 0.0
    %773 = vmatprep.subr.mxu0 0.0
    %774 = vmatpush2.msra.mxu0 0.0
    %775 = vmatprep.subr.mxu0 0.0
    %776 = vmatpush2.msra.mxu0 0.0
    %777 = vmatprep.subr.mxu0 0.0
    %778 = vmatpush2.msra.mxu0 0.0
    %779 = vmatprep.subr.mxu0 0.0
    %780 = vmatpush2.msra.mxu0 0.0
    %781 = vmatprep.subr.mxu0 0.0
    %782 = vmatpush2.msra.mxu0 0.0
    %783 = vmatprep.subr.mxu0 0.0
    %784 = vmatpush2.msra.mxu0 0.0
    %785 = vmatprep.subr.mxu0 0.0
    %786 = vmatpush2.msra.mxu0 0.0
    %787 = vmatprep.subr.mxu0 0.0
    %788 = vmatpush2.msra.mxu0 0.0
    %789 = vmatprep.subr.mxu0 0.0
    %790 = vmatpush2.msra.mxu0 0.0
    %791 = vmatprep.subr.mxu0 0.0
    %792 = vmatpush2.msra.mxu0 0.0
    %793 = vmatprep.subr.mxu0 0.0
    %794 = vmatpush2.msra.mxu0 0.0
    %795 = vmatprep.mubr.f32.mxu0 0.0
    %796 = vmatmul.mubr.f32.gmra.mxu0 %v319
    %v797 = vpop.f32.mrf.mxu0
    %v798 = vadd.f32 %v536, %v797
    %v799 = vpop.f32.mrf.mxu0
    %v800 = vadd.f32 %v540, %v799
    %801 = vmatprep.mubr.f32.mxu0 0.0
    %802 = vmatmul.mubr.f32.gmra.mxu0 %v320
    %v803 = vpop.f32.mrf.mxu0
    %v804 = vadd.f32 %v536, %v803
    %v805 = vpop.f32.mrf.mxu0
    %v806 = vadd.f32 %v540, %v805
    %807 = vdwg.mxu0
    %808 = vmatprep.subr.mxu0 %v508
    %809 = vmatpush1.msra.mxu0 %v507
    %810 = vmatprep.subr.mxu0 %v496
    %811 = vmatpush1.msra.mxu0 %v495
    %812 = vmatprep.subr.mxu0 %v484
    %813 = vmatpush1.msra.mxu0 %v483
    %814 = vmatprep.subr.mxu0 %v472
    %815 = vmatpush1.msra.mxu0 %v471
    %816 = vmatprep.subr.mxu0 %v460
    %817 = vmatpush1.msra.mxu0 %v459
    %818 = vmatprep.subr.mxu0 %v448
    %819 = vmatpush1.msra.mxu0 %v447
    %820 = vmatprep.subr.mxu0 %v436
    %821 = vmatpush1.msra.mxu0 %v435
    %822 = vmatprep.subr.mxu0 %v424
    %823 = vmatpush1.msra.mxu0 %v423
    %824 = vmatprep.subr.mxu0 %v412
    %825 = vmatpush1.msra.mxu0 %v411
    %826 = vmatprep.subr.mxu0 %v400
    %827 = vmatpush1.msra.mxu0 %v399
    %828 = vmatprep.subr.mxu0 %v388
    %829 = vmatpush1.msra.mxu0 %v387
    %830 = vmatprep.subr.mxu0 %v376
    %831 = vmatpush1.msra.mxu0 %v375
    %832 = vmatprep.subr.mxu0 %v364
    %833 = vmatpush1.msra.mxu0 %v363
    %834 = vmatprep.subr.mxu0 %v352
    %835 = vmatpush1.msra.mxu0 %v351
    %836 = vmatprep.subr.mxu0 %v340
    %837 = vmatpush1.msra.mxu0 %v339
    %838 = vmatprep.subr.mxu0 %v328
    %839 = vmatpush1.msra.mxu0 %v327
    %840 = vmatprep.subr.mxu0 0.0
    %841 = vmatpush2.msra.mxu0 0.0
    %842 = vmatprep.subr.mxu0 0.0
    %843 = vmatpush2.msra.mxu0 0.0
    %844 = vmatprep.subr.mxu0 0.0
    %845 = vmatpush2.msra.mxu0 0.0
    %846 = vmatprep.subr.mxu0 0.0
    %847 = vmatpush2.msra.mxu0 0.0
    %848 = vmatprep.subr.mxu0 0.0
    %849 = vmatpush2.msra.mxu0 0.0
    %850 = vmatprep.subr.mxu0 0.0
    %851 = vmatpush2.msra.mxu0 0.0
    %852 = vmatprep.subr.mxu0 0.0
    %853 = vmatpush2.msra.mxu0 0.0
    %854 = vmatprep.subr.mxu0 0.0
    %855 = vmatpush2.msra.mxu0 0.0
    %856 = vmatprep.subr.mxu0 0.0
    %857 = vmatpush2.msra.mxu0 0.0
    %858 = vmatprep.subr.mxu0 0.0
    %859 = vmatpush2.msra.mxu0 0.0
    %860 = vmatprep.subr.mxu0 0.0
    %861 = vmatpush2.msra.mxu0 0.0
    %862 = vmatprep.subr.mxu0 0.0
    %863 = vmatpush2.msra.mxu0 0.0
    %864 = vmatprep.subr.mxu0 0.0
    %865 = vmatpush2.msra.mxu0 0.0
    %866 = vmatprep.subr.mxu0 0.0
    %867 = vmatpush2.msra.mxu0 0.0
    %868 = vmatprep.subr.mxu0 0.0
    %869 = vmatpush2.msra.mxu0 0.0
    %870 = vmatprep.subr.mxu0 0.0
    %871 = vmatpush2.msra.mxu0 0.0
    %872 = vmatprep.mubr.f32.mxu0 0.0
    %873 = vmatmul.mubr.f32.gmra.mxu0 %v319
    %v874 = vpop.f32.mrf.mxu0
    %v875 = vadd.f32 %v544, %v874
    %v876 = vpop.f32.mrf.mxu0
    %v877 = vadd.f32 %v548, %v876
    %878 = vmatprep.mubr.f32.mxu0 0.0
    %879 = vmatmul.mubr.f32.gmra.mxu0 %v320
    %v880 = vpop.f32.mrf.mxu0
    %v881 = vadd.f32 %v544, %v880
    %v882 = vpop.f32.mrf.mxu0
    %v883 = vadd.f32 %v548, %v882
    %884 = vdwg.mxu0
    %885 = vmatprep.subr.mxu0 %v510
    %886 = vmatpush1.msra.mxu0 %v509
    %887 = vmatprep.subr.mxu0 %v498
    %888 = vmatpush1.msra.mxu0 %v497
    %889 = vmatprep.subr.mxu0 %v486
    %890 = vmatpush1.msra.mxu0 %v485
    %891 = vmatprep.subr.mxu0 %v474
    %892 = vmatpush1.msra.mxu0 %v473
    %893 = vmatprep.subr.mxu0 %v462
    %894 = vmatpush1.msra.mxu0 %v461
    %895 = vmatprep.subr.mxu0 %v450
    %896 = vmatpush1.msra.mxu0 %v449
    %897 = vmatprep.subr.mxu0 %v438
    %898 = vmatpush1.msra.mxu0 %v437
    %899 = vmatprep.subr.mxu0 %v426
    %900 = vmatpush1.msra.mxu0 %v425
    %901 = vmatprep.subr.mxu0 %v414
    %902 = vmatpush1.msra.mxu0 %v413
    %903 = vmatprep.subr.mxu0 %v402
    %904 = vmatpush1.msra.mxu0 %v401
    %905 = vmatprep.subr.mxu0 %v390
    %906 = vmatpush1.msra.mxu0 %v389
    %907 = vmatprep.subr.mxu0 %v378
    %908 = vmatpush1.msra.mxu0 %v377
    %909 = vmatprep.subr.mxu0 %v366
    %910 = vmatpush1.msra.mxu0 %v365
    %911 = vmatprep.subr.mxu0 %v354
    %912 = vmatpush1.msra.mxu0 %v353
    %913 = vmatprep.subr.mxu0 %v342
    %914 = vmatpush1.msra.mxu0 %v341
    %915 = vmatprep.subr.mxu0 %v330
    %916 = vmatpush1.msra.mxu0 %v329
    %917 = vmatprep.subr.mxu0 0.0
    %918 = vmatpush2.msra.mxu0 0.0
    %919 = vmatprep.subr.mxu0 0.0
    %920 = vmatpush2.msra.mxu0 0.0
    %921 = vmatprep.subr.mxu0 0.0
    %922 = vmatpush2.msra.mxu0 0.0
    %923 = vmatprep.subr.mxu0 0.0
    %924 = vmatpush2.msra.mxu0 0.0
    %925 = vmatprep.subr.mxu0 0.0
    %926 = vmatpush2.msra.mxu0 0.0
    %927 = vmatprep.subr.mxu0 0.0
    %928 = vmatpush2.msra.mxu0 0.0
    %929 = vmatprep.subr.mxu0 0.0
    %930 = vmatpush2.msra.mxu0 0.0
    %931 = vmatprep.subr.mxu0 0.0
    %932 = vmatpush2.msra.mxu0 0.0
    %933 = vmatprep.subr.mxu0 0.0
    %934 = vmatpush2.msra.mxu0 0.0
    %935 = vmatprep.subr.mxu0 0.0
    %936 = vmatpush2.msra.mxu0 0.0
    %937 = vmatprep.subr.mxu0 0.0
    %938 = vmatpush2.msra.mxu0 0.0
    %939 = vmatprep.subr.mxu0 0.0
    %940 = vmatpush2.msra.mxu0 0.0
    %941 = vmatprep.subr.mxu0 0.0
    %942 = vmatpush2.msra.mxu0 0.0
    %943 = vmatprep.subr.mxu0 0.0
    %944 = vmatpush2.msra.mxu0 0.0
    %945 = vmatprep.subr.mxu0 0.0
    %946 = vmatpush2.msra.mxu0 0.0
    %947 = vmatprep.subr.mxu0 0.0
    %948 = vmatpush2.msra.mxu0 0.0
    %949 = vmatprep.mubr.f32.mxu0 0.0
    %950 = vmatmul.mubr.f32.gmra.mxu0 %v319
    %v951 = vpop.f32.mrf.mxu0
    %v952 = vadd.f32 %v552, %v951
    %v953 = vpop.f32.mrf.mxu0
    %v954 = vadd.f32 %v556, %v953
    %955 = vmatprep.mubr.f32.mxu0 0.0
    %956 = vmatmul.mubr.f32.gmra.mxu0 %v320
    %v957 = vpop.f32.mrf.mxu0
    %v958 = vadd.f32 %v552, %v957
    %v959 = vpop.f32.mrf.mxu0
    %v960 = vadd.f32 %v556, %v959
    %961 = vdwg.mxu0
    %962 = vmatprep.subr.mxu0 %v512
    %963 = vmatpush1.msra.mxu0 %v511
    %964 = vmatprep.subr.mxu0 %v500
    %965 = vmatpush1.msra.mxu0 %v499
    %966 = vmatprep.subr.mxu0 %v488
    %967 = vmatpush1.msra.mxu0 %v487
    %968 = vmatprep.subr.mxu0 %v476
    %969 = vmatpush1.msra.mxu0 %v475
    %970 = vmatprep.subr.mxu0 %v464
    %971 = vmatpush1.msra.mxu0 %v463
    %972 = vmatprep.subr.mxu0 %v452
    %973 = vmatpush1.msra.mxu0 %v451
    %974 = vmatprep.subr.mxu0 %v440
    %975 = vmatpush1.msra.mxu0 %v439
    %976 = vmatprep.subr.mxu0 %v428
    %977 = vmatpush1.msra.mxu0 %v427
    %978 = vmatprep.subr.mxu0 %v416
    %979 = vmatpush1.msra.mxu0 %v415
    %980 = vmatprep.subr.mxu0 %v404
    %981 = vmatpush1.msra.mxu0 %v403
    %982 = vmatprep.subr.mxu0 %v392
    %983 = vmatpush1.msra.mxu0 %v391
    %984 = vmatprep.subr.mxu0 %v380
    %985 = vmatpush1.msra.mxu0 %v379
    %986 = vmatprep.subr.mxu0 %v368
    %987 = vmatpush1.msra.mxu0 %v367
    %988 = vmatprep.subr.mxu0 %v356
    %989 = vmatpush1.msra.mxu0 %v355
    %990 = vmatprep.subr.mxu0 %v344
    %991 = vmatpush1.msra.mxu0 %v343
    %992 = vmatprep.subr.mxu0 %v332
    %993 = vmatpush1.msra.mxu0 %v331
    %994 = vmatprep.subr.mxu0 0.0
    %995 = vmatpush2.msra.mxu0 0.0
    %996 = vmatprep.subr.mxu0 0.0
    %997 = vmatpush2.msra.mxu0 0.0
    %998 = vmatprep.subr.mxu0 0.0
    %999 = vmatpush2.msra.mxu0 0.0
    %1000 = vmatprep.subr.mxu0 0.0
    %1001 = vmatpush2.msra.mxu0 0.0
    %1002 = vmatprep.subr.mxu0 0.0
    %1003 = vmatpush2.msra.mxu0 0.0
    %1004 = vmatprep.subr.mxu0 0.0
    %1005 = vmatpush2.msra.mxu0 0.0
    %1006 = vmatprep.subr.mxu0 0.0
    %1007 = vmatpush2.msra.mxu0 0.0
    %1008 = vmatprep.subr.mxu0 0.0
    %1009 = vmatpush2.msra.mxu0 0.0
    %1010 = vmatprep.subr.mxu0 0.0
    %1011 = vmatpush2.msra.mxu0 0.0
    %1012 = vmatprep.subr.mxu0 0.0
    %1013 = vmatpush2.msra.mxu0 0.0
    %1014 = vmatprep.subr.mxu0 0.0
    %1015 = vmatpush2.msra.mxu0 0.0
    %1016 = vmatprep.subr.mxu0 0.0
    %1017 = vmatpush2.msra.mxu0 0.0
    %1018 = vmatprep.subr.mxu0 0.0
    %1019 = vmatpush2.msra.mxu0 0.0
    %1020 = vmatprep.subr.mxu0 0.0
    %1021 = vmatpush2.msra.mxu0 0.0
    %1022 = vmatprep.subr.mxu0 0.0
    %1023 = vmatpush2.msra.mxu0 0.0
    %1024 = vmatprep.subr.mxu0 0.0
    %1025 = vmatpush2.msra.mxu0 0.0
    %1026 = vmatprep.mubr.f32.mxu0 0.0
    %1027 = vmatmul.mubr.f32.gmra.mxu0 %v319
    %v1028 = vpop.f32.mrf.mxu0
    %v1029 = vadd.f32 %v560, %v1028
    %v1030 = vpop.f32.mrf.mxu0
    %v1031 = vadd.f32 %v564, %v1030
    %1032 = vmatprep.mubr.f32.mxu0 0.0
    %1033 = vmatmul.mubr.f32.gmra.mxu0 %v320
    %v1034 = vpop.f32.mrf.mxu0
    %v1035 = vadd.f32 %v560, %v1034
    %v1036 = vpop.f32.mrf.mxu0
    %v1037 = vadd.f32 %v564, %v1036
    %1038 = vdwg.mxu0
    %1039 = vmatprep.subr.mxu0 0.0
    %1040 = vmatpush1.xpose.msra.mxu0 0.0
    %1041 = vmatprep.subr.mxu0 0.0
    %1042 = vmatpush1.xpose.msra.mxu0 0.0
    %1043 = vmatprep.subr.mxu0 0.0
    %1044 = vmatpush1.xpose.msra.mxu0 0.0
    %1045 = vmatprep.subr.mxu0 0.0
    %1046 = vmatpush1.xpose.msra.mxu0 0.0
    %1047 = vmatprep.subr.mxu0 0.0
    %1048 = vmatpush1.xpose.msra.mxu0 0.0
    %1049 = vmatprep.subr.mxu0 0.0
    %1050 = vmatpush1.xpose.msra.mxu0 0.0
    %1051 = vmatprep.subr.mxu0 0.0
    %1052 = vmatpush1.xpose.msra.mxu0 0.0
    %1053 = vmatprep.subr.mxu0 0.0
    %1054 = vmatpush1.xpose.msra.mxu0 0.0
    %1055 = vmatprep.subr.mxu0 0.0
    %1056 = vmatpush1.xpose.msra.mxu0 0.0
    %1057 = vmatprep.subr.mxu0 0.0
    %1058 = vmatpush1.xpose.msra.mxu0 0.0
    %1059 = vmatprep.subr.mxu0 0.0
    %1060 = vmatpush1.xpose.msra.mxu0 0.0
    %1061 = vmatprep.subr.mxu0 0.0
    %1062 = vmatpush1.xpose.msra.mxu0 0.0
    %1063 = vmatprep.subr.mxu0 0.0
    %1064 = vmatpush1.xpose.msra.mxu0 0.0
    %1065 = vmatprep.subr.mxu0 0.0
    %1066 = vmatpush1.xpose.msra.mxu0 0.0
    %1067 = vmatprep.subr.mxu0 0.0
    %1068 = vmatpush1.xpose.msra.mxu0 0.0
    %1069 = vmatprep.subr.mxu0 0.0
    %1070 = vmatpush1.xpose.msra.mxu0 %v798
    %1071 = vmatprep.subr.mxu0 0.0
    %1072 = vmatpush2.xpose.msra.mxu0 0.0
    %1073 = vmatprep.subr.mxu0 0.0
    %1074 = vmatpush2.xpose.msra.mxu0 0.0
    %1075 = vmatprep.subr.mxu0 0.0
    %1076 = vmatpush2.xpose.msra.mxu0 0.0
    %1077 = vmatprep.subr.mxu0 0.0
    %1078 = vmatpush2.xpose.msra.mxu0 0.0
    %1079 = vmatprep.subr.mxu0 0.0
    %1080 = vmatpush2.xpose.msra.mxu0 0.0
    %1081 = vmatprep.subr.mxu0 0.0
    %1082 = vmatpush2.xpose.msra.mxu0 0.0
    %1083 = vmatprep.subr.mxu0 0.0
    %1084 = vmatpush2.xpose.msra.mxu0 0.0
    %1085 = vmatprep.subr.mxu0 0.0
    %1086 = vmatpush2.xpose.msra.mxu0 0.0
    %1087 = vmatprep.subr.mxu0 0.0
    %1088 = vmatpush2.xpose.msra.mxu0 0.0
    %1089 = vmatprep.subr.mxu0 0.0
    %1090 = vmatpush2.xpose.msra.mxu0 0.0
    %1091 = vmatprep.subr.mxu0 0.0
    %1092 = vmatpush2.xpose.msra.mxu0 0.0
    %1093 = vmatprep.subr.mxu0 0.0
    %1094 = vmatpush2.xpose.msra.mxu0 0.0
    %1095 = vmatprep.subr.mxu0 0.0
    %1096 = vmatpush2.xpose.msra.mxu0 0.0
    %1097 = vmatprep.subr.mxu0 0.0
    %1098 = vmatpush2.xpose.msra.mxu0 0.0
    %1099 = vmatprep.subr.mxu0 0.0
    %1100 = vmatpush2.xpose.msra.mxu0 0.0
    %1101 = vmatprep.subr.mxu0 0.0
    %1102 = vmatpush2.xpose.msra.mxu0 0.0
    %1103 = vmatprep.mubr.f32.mxu0 0.0
    %1104 = vmatmul.mubr.f32.gmra.mxu0 %v644
    %v1105 = vpop.f32.mrf.mxu0
    %v1106 = vadd.f32 0.0, %v1105
    %v1107 = vpop.f32.mrf.mxu0
    %1108 = vdwg.mxu0
    %1109 = vmatprep.subr.mxu0 0.0
    %1110 = vmatpush1.xpose.msra.mxu0 0.0
    %1111 = vmatprep.subr.mxu0 0.0
    %1112 = vmatpush1.xpose.msra.mxu0 0.0
    %1113 = vmatprep.subr.mxu0 0.0
    %1114 = vmatpush1.xpose.msra.mxu0 0.0
    %1115 = vmatprep.subr.mxu0 0.0
    %1116 = vmatpush1.xpose.msra.mxu0 0.0
    %1117 = vmatprep.subr.mxu0 0.0
    %1118 = vmatpush1.xpose.msra.mxu0 0.0
    %1119 = vmatprep.subr.mxu0 0.0
    %1120 = vmatpush1.xpose.msra.mxu0 0.0
    %1121 = vmatprep.subr.mxu0 0.0
    %1122 = vmatpush1.xpose.msra.mxu0 0.0
    %1123 = vmatprep.subr.mxu0 0.0
    %1124 = vmatpush1.xpose.msra.mxu0 0.0
    %1125 = vmatprep.subr.mxu0 0.0
    %1126 = vmatpush1.xpose.msra.mxu0 0.0
    %1127 = vmatprep.subr.mxu0 0.0
    %1128 = vmatpush1.xpose.msra.mxu0 0.0
    %1129 = vmatprep.subr.mxu0 0.0
    %1130 = vmatpush1.xpose.msra.mxu0 0.0
    %1131 = vmatprep.subr.mxu0 0.0
    %1132 = vmatpush1.xpose.msra.mxu0 0.0
    %1133 = vmatprep.subr.mxu0 0.0
    %1134 = vmatpush1.xpose.msra.mxu0 0.0
    %1135 = vmatprep.subr.mxu0 0.0
    %1136 = vmatpush1.xpose.msra.mxu0 0.0
    %1137 = vmatprep.subr.mxu0 0.0
    %1138 = vmatpush1.xpose.msra.mxu0 0.0
    %1139 = vmatprep.subr.mxu0 0.0
    %1140 = vmatpush1.xpose.msra.mxu0 %v804
    %1141 = vmatprep.subr.mxu0 0.0
    %1142 = vmatpush2.xpose.msra.mxu0 0.0
    %1143 = vmatprep.subr.mxu0 0.0
    %1144 = vmatpush2.xpose.msra.mxu0 0.0
    %1145 = vmatprep.subr.mxu0 0.0
    %1146 = vmatpush2.xpose.msra.mxu0 0.0
    %1147 = vmatprep.subr.mxu0 0.0
    %1148 = vmatpush2.xpose.msra.mxu0 0.0
    %1149 = vmatprep.subr.mxu0 0.0
    %1150 = vmatpush2.xpose.msra.mxu0 0.0
    %1151 = vmatprep.subr.mxu0 0.0
    %1152 = vmatpush2.xpose.msra.mxu0 0.0
    %1153 = vmatprep.subr.mxu0 0.0
    %1154 = vmatpush2.xpose.msra.mxu0 0.0
    %1155 = vmatprep.subr.mxu0 0.0
    %1156 = vmatpush2.xpose.msra.mxu0 0.0
    %1157 = vmatprep.subr.mxu0 0.0
    %1158 = vmatpush2.xpose.msra.mxu0 0.0
    %1159 = vmatprep.subr.mxu0 0.0
    %1160 = vmatpush2.xpose.msra.mxu0 0.0
    %1161 = vmatprep.subr.mxu0 0.0
    %1162 = vmatpush2.xpose.msra.mxu0 0.0
    %1163 = vmatprep.subr.mxu0 0.0
    %1164 = vmatpush2.xpose.msra.mxu0 0.0
    %1165 = vmatprep.subr.mxu0 0.0
    %1166 = vmatpush2.xpose.msra.mxu0 0.0
    %1167 = vmatprep.subr.mxu0 0.0
    %1168 = vmatpush2.xpose.msra.mxu0 0.0
    %1169 = vmatprep.subr.mxu0 0.0
    %1170 = vmatpush2.xpose.msra.mxu0 0.0
    %1171 = vmatprep.subr.mxu0 0.0
    %1172 = vmatpush2.xpose.msra.mxu0 0.0
    %1173 = vmatprep.mubr.f32.mxu0 0.0
    %1174 = vmatmul.mubr.f32.gmra.mxu0 %v650
    %v1175 = vpop.f32.mrf.mxu0
    %v1176 = vadd.f32 0.0, %v1175
    %v1177 = vpop.f32.mrf.mxu0
    %1178 = vdwg.mxu0
    %vm1179 = vcmask 64512
    %v1180 = vsel %vm1179, %v1106, -inf
    %1181 = vmax.xlane.f32.xlu0 %v1180
    %v1182 = vpop.xlane.xlu0 %1181
    %v1183 = vsel %vm1179, %v1176, -inf
    %1184 = vmax.xlane.f32.xlu0 %v1183
    %v1185 = vpop.xlane.xlu0 %1184
    %v1186 = vsub.f32 %v1106, %v1182
    %v1187 = vsub.f32 %v1176, %v1185
    %v1188 = vmul.f32 %v1186, 1.442695
    %v1189 = vpow.pop %v1188
    %v1190 = vmul.f32 %v1187, 1.442695
    %v1191 = vpow.pop %v1190
    %v1192 = vsel %vm1179, %v1189, 0.0
    %1193 = vadd.xlane.f32.xlu0 %v1192
    %v1194 = vpop.xlane.xlu0 %1193
    %v1195 = vsel %vm1179, %v1191, 0.0
    %1196 = vadd.xlane.f32.xlu0 %v1195
    %v1197 = vpop.xlane.xlu0 %1196
    %v1198 = vrcp.pop %v1194
    %v1199 = vrcp.pop %v1197
    %v1200 = vmul.f32 %v1189, %v1198
    %v1201 = vmul.f32 %v1191, %v1199
    %v1203 = vsel %vm1179, %v1200, 0
    %1205 = vmatprep.subr.mxu0 0.0
    %1206 = vmatpush1.msra.mxu0 0.0
    %1207 = vmatprep.subr.mxu0 0.0
    %1208 = vmatpush1.msra.mxu0 0.0
    %1209 = vmatprep.subr.mxu0 0.0
    %1210 = vmatpush1.msra.mxu0 0.0
    %1211 = vmatprep.subr.mxu0 0.0
    %1212 = vmatpush1.msra.mxu0 0.0
    %1213 = vmatprep.subr.mxu0 0.0
    %1214 = vmatpush1.msra.mxu0 0.0
    %1215 = vmatprep.subr.mxu0 0.0
    %1216 = vmatpush1.msra.mxu0 0.0
    %1217 = vmatprep.subr.mxu0 0.0
    %1218 = vmatpush1.msra.mxu0 0.0
    %1219 = vmatprep.subr.mxu0 0.0
    %1220 = vmatpush1.msra.mxu0 0.0
    %1221 = vmatprep.subr.mxu0 0.0
    %1222 = vmatpush1.msra.mxu0 0.0
    %1223 = vmatprep.subr.mxu0 0.0
    %1224 = vmatpush1.msra.mxu0 0.0
    %1225 = vmatprep.subr.mxu0 0.0
    %1226 = vmatpush1.msra.mxu0 0.0
    %1227 = vmatprep.subr.mxu0 0.0
    %1228 = vmatpush1.msra.mxu0 0.0
    %1229 = vmatprep.subr.mxu0 0.0
    %1230 = vmatpush1.msra.mxu0 0.0
    %1231 = vmatprep.subr.mxu0 0.0
    %1232 = vmatpush1.msra.mxu0 0.0
    %1233 = vmatprep.subr.mxu0 0.0
    %1234 = vmatpush1.msra.mxu0 0.0
    %1235 = vmatprep.subr.mxu0 0.0
    %1236 = vmatpush1.msra.mxu0 %v952
    %1237 = vmatprep.subr.mxu0 0.0
    %1238 = vmatpush2.msra.mxu0 0.0
    %1239 = vmatprep.subr.mxu0 0.0
    %1240 = vmatpush2.msra.mxu0 0.0
    %1241 = vmatprep.subr.mxu0 0.0
    %1242 = vmatpush2.msra.mxu0 0.0
    %1243 = vmatprep.subr.mxu0 0.0
    %1244 = vmatpush2.msra.mxu0 0.0
    %1245 = vmatprep.subr.mxu0 0.0
    %1246 = vmatpush2.msra.mxu0 0.0
    %1247 = vmatprep.subr.mxu0 0.0
    %1248 = vmatpush2.msra.mxu0 0.0
    %1249 = vmatprep.subr.mxu0 0.0
    %1250 = vmatpush2.msra.mxu0 0.0
    %1251 = vmatprep.subr.mxu0 0.0
    %1252 = vmatpush2.msra.mxu0 0.0
    %1253 = vmatprep.subr.mxu0 0.0
    %1254 = vmatpush2.msra.mxu0 0.0
    %1255 = vmatprep.subr.mxu0 0.0
    %1256 = vmatpush2.msra.mxu0 0.0
    %1257 = vmatprep.subr.mxu0 0.0
    %1258 = vmatpush2.msra.mxu0 0.0
    %1259 = vmatprep.subr.mxu0 0.0
    %1260 = vmatpush2.msra.mxu0 0.0
    %1261 = vmatprep.subr.mxu0 0.0
    %1262 = vmatpush2.msra.mxu0 0.0
    %1263 = vmatprep.subr.mxu0 0.0
    %1264 = vmatpush2.msra.mxu0 0.0
    %1265 = vmatprep.subr.mxu0 0.0
    %1266 = vmatpush2.msra.mxu0 0.0
    %1267 = vmatprep.subr.mxu0 0.0
    %1268 = vmatpush2.msra.mxu0 0.0
    %1269 = vmatprep.mubr.f32.mxu0 0.0
    %1270 = vmatmul.mubr.f32.gmra.mxu0 %v1203
    %v1271 = vpop.f32.mrf.mxu0
    %v1272 = vadd.f32 0.0, %v1271
    %v1273 = vpop.f32.mrf.mxu0
    %1274 = vdwg.mxu0
    %v1276 = vsel %vm1179, %v1201, 0
    %1278 = vmatprep.subr.mxu0 0.0
    %1279 = vmatpush1.msra.mxu0 0.0
    %1280 = vmatprep.subr.mxu0 0.0
    %1281 = vmatpush1.msra.mxu0 0.0
    %1282 = vmatprep.subr.mxu0 0.0
    %1283 = vmatpush1.msra.mxu0 0.0
    %1284 = vmatprep.subr.mxu0 0.0
    %1285 = vmatpush1.msra.mxu0 0.0
    %1286 = vmatprep.subr.mxu0 0.0
    %1287 = vmatpush1.msra.mxu0 0.0
    %1288 = vmatprep.subr.mxu0 0.0
    %1289 = vmatpush1.msra.mxu0 0.0
    %1290 = vmatprep.subr.mxu0 0.0
    %1291 = vmatpush1.msra.mxu0 0.0
    %1292 = vmatprep.subr.mxu0 0.0
    %1293 = vmatpush1.msra.mxu0 0.0
    %1294 = vmatprep.subr.mxu0 0.0
    %1295 = vmatpush1.msra.mxu0 0.0
    %1296 = vmatprep.subr.mxu0 0.0
    %1297 = vmatpush1.msra.mxu0 0.0
    %1298 = vmatprep.subr.mxu0 0.0
    %1299 = vmatpush1.msra.mxu0 0.0
    %1300 = vmatprep.subr.mxu0 0.0
    %1301 = vmatpush1.msra.mxu0 0.0
    %1302 = vmatprep.subr.mxu0 0.0
    %1303 = vmatpush1.msra.mxu0 0.0
    %1304 = vmatprep.subr.mxu0 0.0
    %1305 = vmatpush1.msra.mxu0 0.0
    %1306 = vmatprep.subr.mxu0 0.0
    %1307 = vmatpush1.msra.mxu0 0.0
    %1308 = vmatprep.subr.mxu0 0.0
    %1309 = vmatpush1.msra.mxu0 %v958
    %1310 = vmatprep.subr.mxu0 0.0
    %1311 = vmatpush2.msra.mxu0 0.0
    %1312 = vmatprep.subr.mxu0 0.0
    %1313 = vmatpush2.msra.mxu0 0.0
    %1314 = vmatprep.subr.mxu0 0.0
    %1315 = vmatpush2.msra.mxu0 0.0
    %1316 = vmatprep.subr.mxu0 0.0
    %1317 = vmatpush2.msra.mxu0 0.0
    %1318 = vmatprep.subr.mxu0 0.0
    %1319 = vmatpush2.msra.mxu0 0.0
    %1320 = vmatprep.subr.mxu0 0.0
    %1321 = vmatpush2.msra.mxu0 0.0
    %1322 = vmatprep.subr.mxu0 0.0
    %1323 = vmatpush2.msra.mxu0 0.0
    %1324 = vmatprep.subr.mxu0 0.0
    %1325 = vmatpush2.msra.mxu0 0.0
    %1326 = vmatprep.subr.mxu0 0.0
    %1327 = vmatpush2.msra.mxu0 0.0
    %1328 = vmatprep.subr.mxu0 0.0
    %1329 = vmatpush2.msra.mxu0 0.0
    %1330 = vmatprep.subr.mxu0 0.0
    %1331 = vmatpush2.msra.mxu0 0.0
    %1332 = vmatprep.subr.mxu0 0.0
    %1333 = vmatpush2.msra.mxu0 0.0
    %1334 = vmatprep.subr.mxu0 0.0
    %1335 = vmatpush2.msra.mxu0 0.0
    %1336 = vmatprep.subr.mxu0 0.0
    %1337 = vmatpush2.msra.mxu0 0.0
    %1338 = vmatprep.subr.mxu0 0.0
    %1339 = vmatpush2.msra.mxu0 0.0
    %1340 = vmatprep.subr.mxu0 0.0
    %1341 = vmatpush2.msra.mxu0 0.0
    %1342 = vmatprep.mubr.f32.mxu0 0.0
    %1343 = vmatmul.mubr.f32.gmra.mxu0 %v1276
    %v1344 = vpop.f32.mrf.mxu0
    %v1345 = vadd.f32 0.0, %v1344
    %v1346 = vpop.f32.mrf.mxu0
    %1347 = vdwg.mxu0
    %v1348 = vld [vmem:[#allocation11] sm:$0xff]
    %v1349 = vld [vmem:[#allocation11 + $0x8] sm:$0xff]
    %v1350 = vld [vmem:[#allocation11 + $0x10] sm:$0xff]
    %v1351 = vld [vmem:[#allocation11 + $0x18] sm:$0xff]
    %v1352 = vld [vmem:[#allocation11 + $0x20] sm:$0xff]
    %v1353 = vld [vmem:[#allocation11 + $0x28] sm:$0xff]
    %v1354 = vld [vmem:[#allocation11 + $0x30] sm:$0xff]
    %v1355 = vld [vmem:[#allocation11 + $0x38] sm:$0xff]
    %v1356 = vld [vmem:[#allocation11 + $0x40] sm:$0xff]
    %v1357 = vld [vmem:[#allocation11 + $0x48] sm:$0xff]
    %v1358 = vld [vmem:[#allocation11 + $0x50] sm:$0xff]
    %v1359 = vld [vmem:[#allocation11 + $0x58] sm:$0xff]
    %v1360 = vld [vmem:[#allocation11 + $0x60] sm:$0xff]
    %v1361 = vld [vmem:[#allocation11 + $0x68] sm:$0xff]
    %v1362 = vld [vmem:[#allocation11 + $0x70] sm:$0xff]
    %v1363 = vld [vmem:[#allocation11 + $0x78] sm:$0xff]
    %1364 = vmatprep.subr.mxu0 0.0
    %1365 = vmatpush1.xpose.msra.mxu0 0.0
    %1366 = vmatprep.subr.mxu0 0.0
    %1367 = vmatpush1.xpose.msra.mxu0 0.0
    %1368 = vmatprep.subr.mxu0 0.0
    %1369 = vmatpush1.xpose.msra.mxu0 0.0
    %1370 = vmatprep.subr.mxu0 0.0
    %1371 = vmatpush1.xpose.msra.mxu0 0.0
    %1372 = vmatprep.subr.mxu0 0.0
    %1373 = vmatpush1.xpose.msra.mxu0 0.0
    %1374 = vmatprep.subr.mxu0 0.0
    %1375 = vmatpush1.xpose.msra.mxu0 0.0
    %1376 = vmatprep.subr.mxu0 0.0
    %1377 = vmatpush1.xpose.msra.mxu0 0.0
    %1378 = vmatprep.subr.mxu0 0.0
    %1379 = vmatpush1.xpose.msra.mxu0 0.0
    %1380 = vmatprep.subr.mxu0 0.0
    %1381 = vmatpush1.xpose.msra.mxu0 0.0
    %1382 = vmatprep.subr.mxu0 0.0
    %1383 = vmatpush1.xpose.msra.mxu0 0.0
    %1384 = vmatprep.subr.mxu0 0.0
    %1385 = vmatpush1.xpose.msra.mxu0 0.0
    %1386 = vmatprep.subr.mxu0 0.0
    %1387 = vmatpush1.xpose.msra.mxu0 0.0
    %1388 = vmatprep.subr.mxu0 0.0
    %1389 = vmatpush1.xpose.msra.mxu0 0.0
    %1390 = vmatprep.subr.mxu0 0.0
    %1391 = vmatpush1.xpose.msra.mxu0 0.0
    %1392 = vmatprep.subr.mxu0 0.0
    %1393 = vmatpush1.xpose.msra.mxu0 0.0
    %1394 = vmatprep.subr.mxu0 0.0
    %1395 = vmatpush1.xpose.msra.mxu0 %v800
    %1396 = vmatprep.subr.mxu0 0.0
    %1397 = vmatpush2.xpose.msra.mxu0 0.0
    %1398 = vmatprep.subr.mxu0 0.0
    %1399 = vmatpush2.xpose.msra.mxu0 0.0
    %1400 = vmatprep.subr.mxu0 0.0
    %1401 = vmatpush2.xpose.msra.mxu0 0.0
    %1402 = vmatprep.subr.mxu0 0.0
    %1403 = vmatpush2.xpose.msra.mxu0 0.0
    %1404 = vmatprep.subr.mxu0 0.0
    %1405 = vmatpush2.xpose.msra.mxu0 0.0
    %1406 = vmatprep.subr.mxu0 0.0
    %1407 = vmatpush2.xpose.msra.mxu0 0.0
    %1408 = vmatprep.subr.mxu0 0.0
    %1409 = vmatpush2.xpose.msra.mxu0 0.0
    %1410 = vmatprep.subr.mxu0 0.0
    %1411 = vmatpush2.xpose.msra.mxu0 0.0
    %1412 = vmatprep.subr.mxu0 0.0
    %1413 = vmatpush2.xpose.msra.mxu0 0.0
    %1414 = vmatprep.subr.mxu0 0.0
    %1415 = vmatpush2.xpose.msra.mxu0 0.0
    %1416 = vmatprep.subr.mxu0 0.0
    %1417 = vmatpush2.xpose.msra.mxu0 0.0
    %1418 = vmatprep.subr.mxu0 0.0
    %1419 = vmatpush2.xpose.msra.mxu0 0.0
    %1420 = vmatprep.subr.mxu0 0.0
    %1421 = vmatpush2.xpose.msra.mxu0 0.0
    %1422 = vmatprep.subr.mxu0 0.0
    %1423 = vmatpush2.xpose.msra.mxu0 0.0
    %1424 = vmatprep.subr.mxu0 0.0
    %1425 = vmatpush2.xpose.msra.mxu0 0.0
    %1426 = vmatprep.subr.mxu0 0.0
    %1427 = vmatpush2.xpose.msra.mxu0 0.0
    %1428 = vmatprep.mubr.f32.mxu0 0.0
    %1429 = vmatmul.mubr.f32.gmra.mxu0 %v646
    %v1430 = vpop.f32.mrf.mxu0
    %v1431 = vadd.f32 0.0, %v1430
    %v1432 = vpop.f32.mrf.mxu0
    %1433 = vdwg.mxu0
    %1434 = vmatprep.subr.mxu0 0.0
    %1435 = vmatpush1.xpose.msra.mxu0 0.0
    %1436 = vmatprep.subr.mxu0 0.0
    %1437 = vmatpush1.xpose.msra.mxu0 0.0
    %1438 = vmatprep.subr.mxu0 0.0
    %1439 = vmatpush1.xpose.msra.mxu0 0.0
    %1440 = vmatprep.subr.mxu0 0.0
    %1441 = vmatpush1.xpose.msra.mxu0 0.0
    %1442 = vmatprep.subr.mxu0 0.0
    %1443 = vmatpush1.xpose.msra.mxu0 0.0
    %1444 = vmatprep.subr.mxu0 0.0
    %1445 = vmatpush1.xpose.msra.mxu0 0.0
    %1446 = vmatprep.subr.mxu0 0.0
    %1447 = vmatpush1.xpose.msra.mxu0 0.0
    %1448 = vmatprep.subr.mxu0 0.0
    %1449 = vmatpush1.xpose.msra.mxu0 0.0
    %1450 = vmatprep.subr.mxu0 0.0
    %1451 = vmatpush1.xpose.msra.mxu0 0.0
    %1452 = vmatprep.subr.mxu0 0.0
    %1453 = vmatpush1.xpose.msra.mxu0 0.0
    %1454 = vmatprep.subr.mxu0 0.0
    %1455 = vmatpush1.xpose.msra.mxu0 0.0
    %1456 = vmatprep.subr.mxu0 0.0
    %1457 = vmatpush1.xpose.msra.mxu0 0.0
    %1458 = vmatprep.subr.mxu0 0.0
    %1459 = vmatpush1.xpose.msra.mxu0 0.0
    %1460 = vmatprep.subr.mxu0 0.0
    %1461 = vmatpush1.xpose.msra.mxu0 0.0
    %1462 = vmatprep.subr.mxu0 0.0
    %1463 = vmatpush1.xpose.msra.mxu0 0.0
    %1464 = vmatprep.subr.mxu0 0.0
    %1465 = vmatpush1.xpose.msra.mxu0 %v806
    %1466 = vmatprep.subr.mxu0 0.0
    %1467 = vmatpush2.xpose.msra.mxu0 0.0
    %1468 = vmatprep.subr.mxu0 0.0
    %1469 = vmatpush2.xpose.msra.mxu0 0.0
    %1470 = vmatprep.subr.mxu0 0.0
    %1471 = vmatpush2.xpose.msra.mxu0 0.0
    %1472 = vmatprep.subr.mxu0 0.0
    %1473 = vmatpush2.xpose.msra.mxu0 0.0
    %1474 = vmatprep.subr.mxu0 0.0
    %1475 = vmatpush2.xpose.msra.mxu0 0.0
    %1476 = vmatprep.subr.mxu0 0.0
    %1477 = vmatpush2.xpose.msra.mxu0 0.0
    %1478 = vmatprep.subr.mxu0 0.0
    %1479 = vmatpush2.xpose.msra.mxu0 0.0
    %1480 = vmatprep.subr.mxu0 0.0
    %1481 = vmatpush2.xpose.msra.mxu0 0.0
    %1482 = vmatprep.subr.mxu0 0.0
    %1483 = vmatpush2.xpose.msra.mxu0 0.0
    %1484 = vmatprep.subr.mxu0 0.0
    %1485 = vmatpush2.xpose.msra.mxu0 0.0
    %1486 = vmatprep.subr.mxu0 0.0
    %1487 = vmatpush2.xpose.msra.mxu0 0.0
    %1488 = vmatprep.subr.mxu0 0.0
    %1489 = vmatpush2.xpose.msra.mxu0 0.0
    %1490 = vmatprep.subr.mxu0 0.0
    %1491 = vmatpush2.xpose.msra.mxu0 0.0
    %1492 = vmatprep.subr.mxu0 0.0
    %1493 = vmatpush2.xpose.msra.mxu0 0.0
    %1494 = vmatprep.subr.mxu0 0.0
    %1495 = vmatpush2.xpose.msra.mxu0 0.0
    %1496 = vmatprep.subr.mxu0 0.0
    %1497 = vmatpush2.xpose.msra.mxu0 0.0
    %1498 = vmatprep.mubr.f32.mxu0 0.0
    %1499 = vmatmul.mubr.f32.gmra.mxu0 %v652
    %v1500 = vpop.f32.mrf.mxu0
    %v1501 = vadd.f32 0.0, %v1500
    %v1502 = vpop.f32.mrf.mxu0
    %1503 = vdwg.mxu0
    %v1504 = vsel %vm1179, %v1431, -inf
    %1505 = vmax.xlane.f32.xlu0 %v1504
    %v1506 = vpop.xlane.xlu0 %1505
    %v1507 = vsel %vm1179, %v1501, -inf
    %1508 = vmax.xlane.f32.xlu0 %v1507
    %v1509 = vpop.xlane.xlu0 %1508
    %v1510 = vsub.f32 %v1431, %v1506
    %v1511 = vsub.f32 %v1501, %v1509
    %v1512 = vmul.f32 %v1510, 1.442695
    %v1513 = vpow.pop %v1512
    %v1514 = vmul.f32 %v1511, 1.442695
    %v1515 = vpow.pop %v1514
    %v1516 = vsel %vm1179, %v1513, 0.0
    %1517 = vadd.xlane.f32.xlu0 %v1516
    %v1518 = vpop.xlane.xlu0 %1517
    %v1519 = vsel %vm1179, %v1515, 0.0
    %1520 = vadd.xlane.f32.xlu0 %v1519
    %v1521 = vpop.xlane.xlu0 %1520
    %v1522 = vrcp.pop %v1518
    %v1523 = vrcp.pop %v1521
    %v1524 = vmul.f32 %v1513, %v1522
    %v1525 = vmul.f32 %v1515, %v1523
    %v1527 = vsel %vm1179, %v1524, 0
    %1529 = vmatprep.subr.mxu0 0.0
    %1530 = vmatpush1.msra.mxu0 0.0
    %1531 = vmatprep.subr.mxu0 0.0
    %1532 = vmatpush1.msra.mxu0 0.0
    %1533 = vmatprep.subr.mxu0 0.0
    %1534 = vmatpush1.msra.mxu0 0.0
    %1535 = vmatprep.subr.mxu0 0.0
    %1536 = vmatpush1.msra.mxu0 0.0
    %1537 = vmatprep.subr.mxu0 0.0
    %1538 = vmatpush1.msra.mxu0 0.0
    %1539 = vmatprep.subr.mxu0 0.0
    %1540 = vmatpush1.msra.mxu0 0.0
    %1541 = vmatprep.subr.mxu0 0.0
    %1542 = vmatpush1.msra.mxu0 0.0
    %1543 = vmatprep.subr.mxu0 0.0
    %1544 = vmatpush1.msra.mxu0 0.0
    %1545 = vmatprep.subr.mxu0 0.0
    %1546 = vmatpush1.msra.mxu0 0.0
    %1547 = vmatprep.subr.mxu0 0.0
    %1548 = vmatpush1.msra.mxu0 0.0
    %1549 = vmatprep.subr.mxu0 0.0
    %1550 = vmatpush1.msra.mxu0 0.0
    %1551 = vmatprep.subr.mxu0 0.0
    %1552 = vmatpush1.msra.mxu0 0.0
    %1553 = vmatprep.subr.mxu0 0.0
    %1554 = vmatpush1.msra.mxu0 0.0
    %1555 = vmatprep.subr.mxu0 0.0
    %1556 = vmatpush1.msra.mxu0 0.0
    %1557 = vmatprep.subr.mxu0 0.0
    %1558 = vmatpush1.msra.mxu0 0.0
    %1559 = vmatprep.subr.mxu0 0.0
    %1560 = vmatpush1.msra.mxu0 %v954
    %1561 = vmatprep.subr.mxu0 0.0
    %1562 = vmatpush2.msra.mxu0 0.0
    %1563 = vmatprep.subr.mxu0 0.0
    %1564 = vmatpush2.msra.mxu0 0.0
    %1565 = vmatprep.subr.mxu0 0.0
    %1566 = vmatpush2.msra.mxu0 0.0
    %1567 = vmatprep.subr.mxu0 0.0
    %1568 = vmatpush2.msra.mxu0 0.0
    %1569 = vmatprep.subr.mxu0 0.0
    %1570 = vmatpush2.msra.mxu0 0.0
    %1571 = vmatprep.subr.mxu0 0.0
    %1572 = vmatpush2.msra.mxu0 0.0
    %1573 = vmatprep.subr.mxu0 0.0
    %1574 = vmatpush2.msra.mxu0 0.0
    %1575 = vmatprep.subr.mxu0 0.0
    %1576 = vmatpush2.msra.mxu0 0.0
    %1577 = vmatprep.subr.mxu0 0.0
    %1578 = vmatpush2.msra.mxu0 0.0
    %1579 = vmatprep.subr.mxu0 0.0
    %1580 = vmatpush2.msra.mxu0 0.0
    %1581 = vmatprep.subr.mxu0 0.0
    %1582 = vmatpush2.msra.mxu0 0.0
    %1583 = vmatprep.subr.mxu0 0.0
    %1584 = vmatpush2.msra.mxu0 0.0
    %1585 = vmatprep.subr.mxu0 0.0
    %1586 = vmatpush2.msra.mxu0 0.0
    %1587 = vmatprep.subr.mxu0 0.0
    %1588 = vmatpush2.msra.mxu0 0.0
    %1589 = vmatprep.subr.mxu0 0.0
    %1590 = vmatpush2.msra.mxu0 0.0
    %1591 = vmatprep.subr.mxu0 0.0
    %1592 = vmatpush2.msra.mxu0 0.0
    %1593 = vmatprep.mubr.f32.mxu0 0.0
    %1594 = vmatmul.mubr.f32.gmra.mxu0 %v1527
    %v1595 = vpop.f32.mrf.mxu0
    %v1596 = vadd.f32 0.0, %v1595
    %v1597 = vpop.f32.mrf.mxu0
    %1598 = vdwg.mxu0
    %v1600 = vsel %vm1179, %v1525, 0
    %1602 = vmatprep.subr.mxu0 0.0
    %1603 = vmatpush1.msra.mxu0 0.0
    %1604 = vmatprep.subr.mxu0 0.0
    %1605 = vmatpush1.msra.mxu0 0.0
    %1606 = vmatprep.subr.mxu0 0.0
    %1607 = vmatpush1.msra.mxu0 0.0
    %1608 = vmatprep.subr.mxu0 0.0
    %1609 = vmatpush1.msra.mxu0 0.0
    %1610 = vmatprep.subr.mxu0 0.0
    %1611 = vmatpush1.msra.mxu0 0.0
    %1612 = vmatprep.subr.mxu0 0.0
    %1613 = vmatpush1.msra.mxu0 0.0
    %1614 = vmatprep.subr.mxu0 0.0
    %1615 = vmatpush1.msra.mxu0 0.0
    %1616 = vmatprep.subr.mxu0 0.0
    %1617 = vmatpush1.msra.mxu0 0.0
    %1618 = vmatprep.subr.mxu0 0.0
    %1619 = vmatpush1.msra.mxu0 0.0
    %1620 = vmatprep.subr.mxu0 0.0
    %1621 = vmatpush1.msra.mxu0 0.0
    %1622 = vmatprep.subr.mxu0 0.0
    %1623 = vmatpush1.msra.mxu0 0.0
    %1624 = vmatprep.subr.mxu0 0.0
    %1625 = vmatpush1.msra.mxu0 0.0
    %1626 = vmatprep.subr.mxu0 0.0
    %1627 = vmatpush1.msra.mxu0 0.0
    %1628 = vmatprep.subr.mxu0 0.0
    %1629 = vmatpush1.msra.mxu0 0.0
    %1630 = vmatprep.subr.mxu0 0.0
    %1631 = vmatpush1.msra.mxu0 0.0
    %1632 = vmatprep.subr.mxu0 0.0
    %1633 = vmatpush1.msra.mxu0 %v960
    %1634 = vmatprep.subr.mxu0 0.0
    %1635 = vmatpush2.msra.mxu0 0.0
    %1636 = vmatprep.subr.mxu0 0.0
    %1637 = vmatpush2.msra.mxu0 0.0
    %1638 = vmatprep.subr.mxu0 0.0
    %1639 = vmatpush2.msra.mxu0 0.0
    %1640 = vmatprep.subr.mxu0 0.0
    %1641 = vmatpush2.msra.mxu0 0.0
    %1642 = vmatprep.subr.mxu0 0.0
    %1643 = vmatpush2.msra.mxu0 0.0
    %1644 = vmatprep.subr.mxu0 0.0
    %1645 = vmatpush2.msra.mxu0 0.0
    %1646 = vmatprep.subr.mxu0 0.0
    %1647 = vmatpush2.msra.mxu0 0.0
    %1648 = vmatprep.subr.mxu0 0.0
    %1649 = vmatpush2.msra.mxu0 0.0
    %1650 = vmatprep.subr.mxu0 0.0
    %1651 = vmatpush2.msra.mxu0 0.0
    %1652 = vmatprep.subr.mxu0 0.0
    %1653 = vmatpush2.msra.mxu0 0.0
    %1654 = vmatprep.subr.mxu0 0.0
    %1655 = vmatpush2.msra.mxu0 0.0
    %1656 = vmatprep.subr.mxu0 0.0
    %1657 = vmatpush2.msra.mxu0 0.0
    %1658 = vmatprep.subr.mxu0 0.0
    %1659 = vmatpush2.msra.mxu0 0.0
    %1660 = vmatprep.subr.mxu0 0.0
    %1661 = vmatpush2.msra.mxu0 0.0
    %1662 = vmatprep.subr.mxu0 0.0
    %1663 = vmatpush2.msra.mxu0 0.0
    %1664 = vmatprep.subr.mxu0 0.0
    %1665 = vmatpush2.msra.mxu0 0.0
    %1666 = vmatprep.mubr.f32.mxu0 0.0
    %1667 = vmatmul.mubr.f32.gmra.mxu0 %v1600
    %v1668 = vpop.f32.mrf.mxu0
    %v1669 = vadd.f32 0.0, %v1668
    %v1670 = vpop.f32.mrf.mxu0
    %1671 = vdwg.mxu0
    %v1672 = vld [vmem:[#allocation11 + $0x80] sm:$0xff]
    %v1673 = vld [vmem:[#allocation11 + $0x88] sm:$0xff]
    %v1674 = vld [vmem:[#allocation11 + $0x90] sm:$0xff]
    %v1675 = vld [vmem:[#allocation11 + $0x98] sm:$0xff]
    %v1676 = vld [vmem:[#allocation11 + $0xa0] sm:$0xff]
    %v1677 = vld [vmem:[#allocation11 + $0xa8] sm:$0xff]
    %v1678 = vld [vmem:[#allocation11 + $0xb0] sm:$0xff]
    %v1679 = vld [vmem:[#allocation11 + $0xb8] sm:$0xff]
    %v1680 = vld [vmem:[#allocation11 + $0xc0] sm:$0xff]
    %v1681 = vld [vmem:[#allocation11 + $0xc8] sm:$0xff]
    %v1682 = vld [vmem:[#allocation11 + $0xd0] sm:$0xff]
    %v1683 = vld [vmem:[#allocation11 + $0xd8] sm:$0xff]
    %v1684 = vld [vmem:[#allocation11 + $0xe0] sm:$0xff]
    %v1685 = vld [vmem:[#allocation11 + $0xe8] sm:$0xff]
    %v1686 = vld [vmem:[#allocation11 + $0xf0] sm:$0xff]
    %v1687 = vld [vmem:[#allocation11 + $0xf8] sm:$0xff]
    %1688 = vmatprep.subr.mxu0 0.0
    %1689 = vmatpush1.msra.mxu0 %v1687
    %1690 = vmatprep.subr.mxu0 0.0
    %1691 = vmatpush1.msra.mxu0 %v1686
    %1692 = vmatprep.subr.mxu0 0.0
    %1693 = vmatpush1.msra.mxu0 %v1685
    %1694 = vmatprep.subr.mxu0 0.0
    %1695 = vmatpush1.msra.mxu0 %v1684
    %1696 = vmatprep.subr.mxu0 0.0
    %1697 = vmatpush1.msra.mxu0 %v1683
    %1698 = vmatprep.subr.mxu0 0.0
    %1699 = vmatpush1.msra.mxu0 %v1682
    %1700 = vmatprep.subr.mxu0 0.0
    %1701 = vmatpush1.msra.mxu0 %v1681
    %1702 = vmatprep.subr.mxu0 0.0
    %1703 = vmatpush1.msra.mxu0 %v1680
    %1704 = vmatprep.subr.mxu0 0.0
    %1705 = vmatpush1.msra.mxu0 %v1679
    %1706 = vmatprep.subr.mxu0 0.0
    %1707 = vmatpush1.msra.mxu0 %v1678
    %1708 = vmatprep.subr.mxu0 0.0
    %1709 = vmatpush1.msra.mxu0 %v1677
    %1710 = vmatprep.subr.mxu0 0.0
    %1711 = vmatpush1.msra.mxu0 %v1676
    %1712 = vmatprep.subr.mxu0 0.0
    %1713 = vmatpush1.msra.mxu0 %v1675
    %1714 = vmatprep.subr.mxu0 0.0
    %1715 = vmatpush1.msra.mxu0 %v1674
    %1716 = vmatprep.subr.mxu0 0.0
    %1717 = vmatpush1.msra.mxu0 %v1673
    %1718 = vmatprep.subr.mxu0 0.0
    %1719 = vmatpush1.msra.mxu0 %v1672
    %1720 = vmatprep.subr.mxu0 0.0
    %1721 = vmatpush2.msra.mxu0 0.0
    %1722 = vmatprep.subr.mxu0 0.0
    %1723 = vmatpush2.msra.mxu0 0.0
    %1724 = vmatprep.subr.mxu0 0.0
    %1725 = vmatpush2.msra.mxu0 0.0
    %1726 = vmatprep.subr.mxu0 0.0
    %1727 = vmatpush2.msra.mxu0 0.0
    %1728 = vmatprep.subr.mxu0 0.0
    %1729 = vmatpush2.msra.mxu0 0.0
    %1730 = vmatprep.subr.mxu0 0.0
    %1731 = vmatpush2.msra.mxu0 0.0
    %1732 = vmatprep.subr.mxu0 0.0
    %1733 = vmatpush2.msra.mxu0 0.0
    %1734 = vmatprep.subr.mxu0 0.0
    %1735 = vmatpush2.msra.mxu0 0.0
    %1736 = vmatprep.subr.mxu0 0.0
    %1737 = vmatpush2.msra.mxu0 0.0
    %1738 = vmatprep.subr.mxu0 0.0
    %1739 = vmatpush2.msra.mxu0 0.0
    %1740 = vmatprep.subr.mxu0 0.0
    %1741 = vmatpush2.msra.mxu0 0.0
    %1742 = vmatprep.subr.mxu0 0.0
    %1743 = vmatpush2.msra.mxu0 0.0
    %1744 = vmatprep.subr.mxu0 0.0
    %1745 = vmatpush2.msra.mxu0 0.0
    %1746 = vmatprep.subr.mxu0 0.0
    %1747 = vmatpush2.msra.mxu0 0.0
    %1748 = vmatprep.subr.mxu0 0.0
    %1749 = vmatpush2.msra.mxu0 0.0
    %1750 = vmatprep.subr.mxu0 0.0
    %1751 = vmatpush2.msra.mxu0 0.0
    %1752 = vmatprep.mubr.f32.mxu0 0.0
    %1753 = vmatmul.mubr.f32.gmra.mxu0 %v1596
    %v1754 = vpop.f32.mrf.mxu0
    %v1755 = vadd.f32 0.0, %v1754
    %v1756 = vpop.f32.mrf.mxu0
    %1757 = vmatprep.mubr.f32.mxu0 0.0
    %1758 = vmatmul.mubr.f32.gmra.mxu0 %v1669
    %v1759 = vpop.f32.mrf.mxu0
    %v1760 = vadd.f32 0.0, %v1759
    %v1761 = vpop.f32.mrf.mxu0
    %1762 = vdwg.mxu0
    %1763 = vmatprep.subr.mxu0 0.0
    %1764 = vmatpush1.msra.mxu0 %v1363
    %1765 = vmatprep.subr.mxu0 0.0
    %1766 = vmatpush1.msra.mxu0 %v1362
    %1767 = vmatprep.subr.mxu0 0.0
    %1768 = vmatpush1.msra.mxu0 %v1361
    %1769 = vmatprep.subr.mxu0 0.0
    %1770 = vmatpush1.msra.mxu0 %v1360
    %1771 = vmatprep.subr.mxu0 0.0
    %1772 = vmatpush1.msra.mxu0 %v1359
    %1773 = vmatprep.subr.mxu0 0.0
    %1774 = vmatpush1.msra.mxu0 %v1358
    %1775 = vmatprep.subr.mxu0 0.0
    %1776 = vmatpush1.msra.mxu0 %v1357
    %1777 = vmatprep.subr.mxu0 0.0
    %1778 = vmatpush1.msra.mxu0 %v1356
    %1779 = vmatprep.subr.mxu0 0.0
    %1780 = vmatpush1.msra.mxu0 %v1355
    %1781 = vmatprep.subr.mxu0 0.0
    %1782 = vmatpush1.msra.mxu0 %v1354
    %1783 = vmatprep.subr.mxu0 0.0
    %1784 = vmatpush1.msra.mxu0 %v1353
    %1785 = vmatprep.subr.mxu0 0.0
    %1786 = vmatpush1.msra.mxu0 %v1352
    %1787 = vmatprep.subr.mxu0 0.0
    %1788 = vmatpush1.msra.mxu0 %v1351
    %1789 = vmatprep.subr.mxu0 0.0
    %1790 = vmatpush1.msra.mxu0 %v1350
    %1791 = vmatprep.subr.mxu0 0.0
    %1792 = vmatpush1.msra.mxu0 %v1349
    %1793 = vmatprep.subr.mxu0 0.0
    %1794 = vmatpush1.msra.mxu0 %v1348
    %1795 = vmatprep.subr.mxu0 0.0
    %1796 = vmatpush2.msra.mxu0 0.0
    %1797 = vmatprep.subr.mxu0 0.0
    %1798 = vmatpush2.msra.mxu0 0.0
    %1799 = vmatprep.subr.mxu0 0.0
    %1800 = vmatpush2.msra.mxu0 0.0
    %1801 = vmatprep.subr.mxu0 0.0
    %1802 = vmatpush2.msra.mxu0 0.0
    %1803 = vmatprep.subr.mxu0 0.0
    %1804 = vmatpush2.msra.mxu0 0.0
    %1805 = vmatprep.subr.mxu0 0.0
    %1806 = vmatpush2.msra.mxu0 0.0
    %1807 = vmatprep.subr.mxu0 0.0
    %1808 = vmatpush2.msra.mxu0 0.0
    %1809 = vmatprep.subr.mxu0 0.0
    %1810 = vmatpush2.msra.mxu0 0.0
    %1811 = vmatprep.subr.mxu0 0.0
    %1812 = vmatpush2.msra.mxu0 0.0
    %1813 = vmatprep.subr.mxu0 0.0
    %1814 = vmatpush2.msra.mxu0 0.0
    %1815 = vmatprep.subr.mxu0 0.0
    %1816 = vmatpush2.msra.mxu0 0.0
    %1817 = vmatprep.subr.mxu0 0.0
    %1818 = vmatpush2.msra.mxu0 0.0
    %1819 = vmatprep.subr.mxu0 0.0
    %1820 = vmatpush2.msra.mxu0 0.0
    %1821 = vmatprep.subr.mxu0 0.0
    %1822 = vmatpush2.msra.mxu0 0.0
    %1823 = vmatprep.subr.mxu0 0.0
    %1824 = vmatpush2.msra.mxu0 0.0
    %1825 = vmatprep.subr.mxu0 0.0
    %1826 = vmatpush2.msra.mxu0 0.0
    %1827 = vmatprep.mubr.f32.mxu0 0.0
    %1828 = vmatmul.mubr.f32.gmra.mxu0 %v1272
    %v1829 = vpop.f32.mrf.mxu0
    %v1830 = vadd.f32 %v1755, %v1829
    %v1831 = vpop.f32.mrf.mxu0
    %1832 = vmatprep.mubr.f32.mxu0 0.0
    %1833 = vmatmul.mubr.f32.gmra.mxu0 %v1345
    %v1834 = vpop.f32.mrf.mxu0
    %v1835 = vadd.f32 %v1760, %v1834
    %v1836 = vpop.f32.mrf.mxu0
    %1837 = vdwg.mxu0
    %1838 = vmatprep.subr.mxu0 0.0
    %1839 = vmatpush1.xpose.msra.mxu0 0.0
    %1840 = vmatprep.subr.mxu0 0.0
    %1841 = vmatpush1.xpose.msra.mxu0 0.0
    %1842 = vmatprep.subr.mxu0 0.0
    %1843 = vmatpush1.xpose.msra.mxu0 0.0
    %1844 = vmatprep.subr.mxu0 0.0
    %1845 = vmatpush1.xpose.msra.mxu0 0.0
    %1846 = vmatprep.subr.mxu0 0.0
    %1847 = vmatpush1.xpose.msra.mxu0 0.0
    %1848 = vmatprep.subr.mxu0 0.0
    %1849 = vmatpush1.xpose.msra.mxu0 0.0
    %1850 = vmatprep.subr.mxu0 0.0
    %1851 = vmatpush1.xpose.msra.mxu0 0.0
    %1852 = vmatprep.subr.mxu0 0.0
    %1853 = vmatpush1.xpose.msra.mxu0 0.0
    %1854 = vmatprep.subr.mxu0 0.0
    %1855 = vmatpush1.xpose.msra.mxu0 0.0
    %1856 = vmatprep.subr.mxu0 0.0
    %1857 = vmatpush1.xpose.msra.mxu0 0.0
    %1858 = vmatprep.subr.mxu0 0.0
    %1859 = vmatpush1.xpose.msra.mxu0 0.0
    %1860 = vmatprep.subr.mxu0 0.0
    %1861 = vmatpush1.xpose.msra.mxu0 0.0
    %1862 = vmatprep.subr.mxu0 0.0
    %1863 = vmatpush1.xpose.msra.mxu0 0.0
    %1864 = vmatprep.subr.mxu0 0.0
    %1865 = vmatpush1.xpose.msra.mxu0 0.0
    %1866 = vmatprep.subr.mxu0 0.0
    %1867 = vmatpush1.xpose.msra.mxu0 0.0
    %1868 = vmatprep.subr.mxu0 0.0
    %1869 = vmatpush1.xpose.msra.mxu0 %v875
    %1870 = vmatprep.subr.mxu0 0.0
    %1871 = vmatpush2.xpose.msra.mxu0 0.0
    %1872 = vmatprep.subr.mxu0 0.0
    %1873 = vmatpush2.xpose.msra.mxu0 0.0
    %1874 = vmatprep.subr.mxu0 0.0
    %1875 = vmatpush2.xpose.msra.mxu0 0.0
    %1876 = vmatprep.subr.mxu0 0.0
    %1877 = vmatpush2.xpose.msra.mxu0 0.0
    %1878 = vmatprep.subr.mxu0 0.0
    %1879 = vmatpush2.xpose.msra.mxu0 0.0
    %1880 = vmatprep.subr.mxu0 0.0
    %1881 = vmatpush2.xpose.msra.mxu0 0.0
    %1882 = vmatprep.subr.mxu0 0.0
    %1883 = vmatpush2.xpose.msra.mxu0 0.0
    %1884 = vmatprep.subr.mxu0 0.0
    %1885 = vmatpush2.xpose.msra.mxu0 0.0
    %1886 = vmatprep.subr.mxu0 0.0
    %1887 = vmatpush2.xpose.msra.mxu0 0.0
    %1888 = vmatprep.subr.mxu0 0.0
    %1889 = vmatpush2.xpose.msra.mxu0 0.0
    %1890 = vmatprep.subr.mxu0 0.0
    %1891 = vmatpush2.xpose.msra.mxu0 0.0
    %1892 = vmatprep.subr.mxu0 0.0
    %1893 = vmatpush2.xpose.msra.mxu0 0.0
    %1894 = vmatprep.subr.mxu0 0.0
    %1895 = vmatpush2.xpose.msra.mxu0 0.0
    %1896 = vmatprep.subr.mxu0 0.0
    %1897 = vmatpush2.xpose.msra.mxu0 0.0
    %1898 = vmatprep.subr.mxu0 0.0
    %1899 = vmatpush2.xpose.msra.mxu0 0.0
    %1900 = vmatprep.subr.mxu0 0.0
    %1901 = vmatpush2.xpose.msra.mxu0 0.0
    %1902 = vmatprep.mubr.f32.mxu0 0.0
    %1903 = vmatmul.mubr.f32.gmra.mxu0 %v721
    %v1904 = vpop.f32.mrf.mxu0
    %v1905 = vadd.f32 0.0, %v1904
    %v1906 = vpop.f32.mrf.mxu0
    %1907 = vdwg.mxu0
    %1908 = vmatprep.subr.mxu0 0.0
    %1909 = vmatpush1.xpose.msra.mxu0 0.0
    %1910 = vmatprep.subr.mxu0 0.0
    %1911 = vmatpush1.xpose.msra.mxu0 0.0
    %1912 = vmatprep.subr.mxu0 0.0
    %1913 = vmatpush1.xpose.msra.mxu0 0.0
    %1914 = vmatprep.subr.mxu0 0.0
    %1915 = vmatpush1.xpose.msra.mxu0 0.0
    %1916 = vmatprep.subr.mxu0 0.0
    %1917 = vmatpush1.xpose.msra.mxu0 0.0
    %1918 = vmatprep.subr.mxu0 0.0
    %1919 = vmatpush1.xpose.msra.mxu0 0.0
    %1920 = vmatprep.subr.mxu0 0.0
    %1921 = vmatpush1.xpose.msra.mxu0 0.0
    %1922 = vmatprep.subr.mxu0 0.0
    %1923 = vmatpush1.xpose.msra.mxu0 0.0
    %1924 = vmatprep.subr.mxu0 0.0
    %1925 = vmatpush1.xpose.msra.mxu0 0.0
    %1926 = vmatprep.subr.mxu0 0.0
    %1927 = vmatpush1.xpose.msra.mxu0 0.0
    %1928 = vmatprep.subr.mxu0 0.0
    %1929 = vmatpush1.xpose.msra.mxu0 0.0
    %1930 = vmatprep.subr.mxu0 0.0
    %1931 = vmatpush1.xpose.msra.mxu0 0.0
    %1932 = vmatprep.subr.mxu0 0.0
    %1933 = vmatpush1.xpose.msra.mxu0 0.0
    %1934 = vmatprep.subr.mxu0 0.0
    %1935 = vmatpush1.xpose.msra.mxu0 0.0
    %1936 = vmatprep.subr.mxu0 0.0
    %1937 = vmatpush1.xpose.msra.mxu0 0.0
    %1938 = vmatprep.subr.mxu0 0.0
    %1939 = vmatpush1.xpose.msra.mxu0 %v881
    %1940 = vmatprep.subr.mxu0 0.0
    %1941 = vmatpush2.xpose.msra.mxu0 0.0
    %1942 = vmatprep.subr.mxu0 0.0
    %1943 = vmatpush2.xpose.msra.mxu0 0.0
    %1944 = vmatprep.subr.mxu0 0.0
    %1945 = vmatpush2.xpose.msra.mxu0 0.0
    %1946 = vmatprep.subr.mxu0 0.0
    %1947 = vmatpush2.xpose.msra.mxu0 0.0
    %1948 = vmatprep.subr.mxu0 0.0
    %1949 = vmatpush2.xpose.msra.mxu0 0.0
    %1950 = vmatprep.subr.mxu0 0.0
    %1951 = vmatpush2.xpose.msra.mxu0 0.0
    %1952 = vmatprep.subr.mxu0 0.0
    %1953 = vmatpush2.xpose.msra.mxu0 0.0
    %1954 = vmatprep.subr.mxu0 0.0
    %1955 = vmatpush2.xpose.msra.mxu0 0.0
    %1956 = vmatprep.subr.mxu0 0.0
    %1957 = vmatpush2.xpose.msra.mxu0 0.0
    %1958 = vmatprep.subr.mxu0 0.0
    %1959 = vmatpush2.xpose.msra.mxu0 0.0
    %1960 = vmatprep.subr.mxu0 0.0
    %1961 = vmatpush2.xpose.msra.mxu0 0.0
    %1962 = vmatprep.subr.mxu0 0.0
    %1963 = vmatpush2.xpose.msra.mxu0 0.0
    %1964 = vmatprep.subr.mxu0 0.0
    %1965 = vmatpush2.xpose.msra.mxu0 0.0
    %1966 = vmatprep.subr.mxu0 0.0
    %1967 = vmatpush2.xpose.msra.mxu0 0.0
    %1968 = vmatprep.subr.mxu0 0.0
    %1969 = vmatpush2.xpose.msra.mxu0 0.0
    %1970 = vmatprep.subr.mxu0 0.0
    %1971 = vmatpush2.xpose.msra.mxu0 0.0
    %1972 = vmatprep.mubr.f32.mxu0 0.0
    %1973 = vmatmul.mubr.f32.gmra.mxu0 %v727
    %v1974 = vpop.f32.mrf.mxu0
    %v1975 = vadd.f32 0.0, %v1974
    %v1976 = vpop.f32.mrf.mxu0
    %1977 = vdwg.mxu0
    %v1978 = vsel %vm1179, %v1905, -inf
    %1979 = vmax.xlane.f32.xlu0 %v1978
    %v1980 = vpop.xlane.xlu0 %1979
    %v1981 = vsel %vm1179, %v1975, -inf
    %1982 = vmax.xlane.f32.xlu0 %v1981
    %v1983 = vpop.xlane.xlu0 %1982
    %v1984 = vsub.f32 %v1905, %v1980
    %v1985 = vsub.f32 %v1975, %v1983
    %v1986 = vmul.f32 %v1984, 1.442695
    %v1987 = vpow.pop %v1986
    %v1988 = vmul.f32 %v1985, 1.442695
    %v1989 = vpow.pop %v1988
    %v1990 = vsel %vm1179, %v1987, 0.0
    %1991 = vadd.xlane.f32.xlu0 %v1990
    %v1992 = vpop.xlane.xlu0 %1991
    %v1993 = vsel %vm1179, %v1989, 0.0
    %1994 = vadd.xlane.f32.xlu0 %v1993
    %v1995 = vpop.xlane.xlu0 %1994
    %v1996 = vrcp.pop %v1992
    %v1997 = vrcp.pop %v1995
    %v1998 = vmul.f32 %v1987, %v1996
    %v1999 = vmul.f32 %v1989, %v1997
    %v2001 = vsel %vm1179, %v1998, 0
    %2003 = vmatprep.subr.mxu0 0.0
    %2004 = vmatpush1.msra.mxu0 0.0
    %2005 = vmatprep.subr.mxu0 0.0
    %2006 = vmatpush1.msra.mxu0 0.0
    %2007 = vmatprep.subr.mxu0 0.0
    %2008 = vmatpush1.msra.mxu0 0.0
    %2009 = vmatprep.subr.mxu0 0.0
    %2010 = vmatpush1.msra.mxu0 0.0
    %2011 = vmatprep.subr.mxu0 0.0
    %2012 = vmatpush1.msra.mxu0 0.0
    %2013 = vmatprep.subr.mxu0 0.0
    %2014 = vmatpush1.msra.mxu0 0.0
    %2015 = vmatprep.subr.mxu0 0.0
    %2016 = vmatpush1.msra.mxu0 0.0
    %2017 = vmatprep.subr.mxu0 0.0
    %2018 = vmatpush1.msra.mxu0 0.0
    %2019 = vmatprep.subr.mxu0 0.0
    %2020 = vmatpush1.msra.mxu0 0.0
    %2021 = vmatprep.subr.mxu0 0.0
    %2022 = vmatpush1.msra.mxu0 0.0
    %2023 = vmatprep.subr.mxu0 0.0
    %2024 = vmatpush1.msra.mxu0 0.0
    %2025 = vmatprep.subr.mxu0 0.0
    %2026 = vmatpush1.msra.mxu0 0.0
    %2027 = vmatprep.subr.mxu0 0.0
    %2028 = vmatpush1.msra.mxu0 0.0
    %2029 = vmatprep.subr.mxu0 0.0
    %2030 = vmatpush1.msra.mxu0 0.0
    %2031 = vmatprep.subr.mxu0 0.0
    %2032 = vmatpush1.msra.mxu0 0.0
    %2033 = vmatprep.subr.mxu0 0.0
    %2034 = vmatpush1.msra.mxu0 %v1029
    %2035 = vmatprep.subr.mxu0 0.0
    %2036 = vmatpush2.msra.mxu0 0.0
    %2037 = vmatprep.subr.mxu0 0.0
    %2038 = vmatpush2.msra.mxu0 0.0
    %2039 = vmatprep.subr.mxu0 0.0
    %2040 = vmatpush2.msra.mxu0 0.0
    %2041 = vmatprep.subr.mxu0 0.0
    %2042 = vmatpush2.msra.mxu0 0.0
    %2043 = vmatprep.subr.mxu0 0.0
    %2044 = vmatpush2.msra.mxu0 0.0
    %2045 = vmatprep.subr.mxu0 0.0
    %2046 = vmatpush2.msra.mxu0 0.0
    %2047 = vmatprep.subr.mxu0 0.0
    %2048 = vmatpush2.msra.mxu0 0.0
    %2049 = vmatprep.subr.mxu0 0.0
    %2050 = vmatpush2.msra.mxu0 0.0
    %2051 = vmatprep.subr.mxu0 0.0
    %2052 = vmatpush2.msra.mxu0 0.0
    %2053 = vmatprep.subr.mxu0 0.0
    %2054 = vmatpush2.msra.mxu0 0.0
    %2055 = vmatprep.subr.mxu0 0.0
    %2056 = vmatpush2.msra.mxu0 0.0
    %2057 = vmatprep.subr.mxu0 0.0
    %2058 = vmatpush2.msra.mxu0 0.0
    %2059 = vmatprep.subr.mxu0 0.0
    %2060 = vmatpush2.msra.mxu0 0.0
    %2061 = vmatprep.subr.mxu0 0.0
    %2062 = vmatpush2.msra.mxu0 0.0
    %2063 = vmatprep.subr.mxu0 0.0
    %2064 = vmatpush2.msra.mxu0 0.0
    %2065 = vmatprep.subr.mxu0 0.0
    %2066 = vmatpush2.msra.mxu0 0.0
    %2067 = vmatprep.mubr.f32.mxu0 0.0
    %2068 = vmatmul.mubr.f32.gmra.mxu0 %v2001
    %v2069 = vpop.f32.mrf.mxu0
    %v2070 = vadd.f32 0.0, %v2069
    %v2071 = vpop.f32.mrf.mxu0
    %2072 = vdwg.mxu0
    %v2074 = vsel %vm1179, %v1999, 0
    %2076 = vmatprep.subr.mxu0 0.0
    %2077 = vmatpush1.msra.mxu0 0.0
    %2078 = vmatprep.subr.mxu0 0.0
    %2079 = vmatpush1.msra.mxu0 0.0
    %2080 = vmatprep.subr.mxu0 0.0
    %2081 = vmatpush1.msra.mxu0 0.0
    %2082 = vmatprep.subr.mxu0 0.0
    %2083 = vmatpush1.msra.mxu0 0.0
    %2084 = vmatprep.subr.mxu0 0.0
    %2085 = vmatpush1.msra.mxu0 0.0
    %2086 = vmatprep.subr.mxu0 0.0
    %2087 = vmatpush1.msra.mxu0 0.0
    %2088 = vmatprep.subr.mxu0 0.0
    %2089 = vmatpush1.msra.mxu0 0.0
    %2090 = vmatprep.subr.mxu0 0.0
    %2091 = vmatpush1.msra.mxu0 0.0
    %2092 = vmatprep.subr.mxu0 0.0
    %2093 = vmatpush1.msra.mxu0 0.0
    %2094 = vmatprep.subr.mxu0 0.0
    %2095 = vmatpush1.msra.mxu0 0.0
    %2096 = vmatprep.subr.mxu0 0.0
    %2097 = vmatpush1.msra.mxu0 0.0
    %2098 = vmatprep.subr.mxu0 0.0
    %2099 = vmatpush1.msra.mxu0 0.0
    %2100 = vmatprep.subr.mxu0 0.0
    %2101 = vmatpush1.msra.mxu0 0.0
    %2102 = vmatprep.subr.mxu0 0.0
    %2103 = vmatpush1.msra.mxu0 0.0
    %2104 = vmatprep.subr.mxu0 0.0
    %2105 = vmatpush1.msra.mxu0 0.0
    %2106 = vmatprep.subr.mxu0 0.0
    %2107 = vmatpush1.msra.mxu0 %v1035
    %2108 = vmatprep.subr.mxu0 0.0
    %2109 = vmatpush2.msra.mxu0 0.0
    %2110 = vmatprep.subr.mxu0 0.0
    %2111 = vmatpush2.msra.mxu0 0.0
    %2112 = vmatprep.subr.mxu0 0.0
    %2113 = vmatpush2.msra.mxu0 0.0
    %2114 = vmatprep.subr.mxu0 0.0
    %2115 = vmatpush2.msra.mxu0 0.0
    %2116 = vmatprep.subr.mxu0 0.0
    %2117 = vmatpush2.msra.mxu0 0.0
    %2118 = vmatprep.subr.mxu0 0.0
    %2119 = vmatpush2.msra.mxu0 0.0
    %2120 = vmatprep.subr.mxu0 0.0
    %2121 = vmatpush2.msra.mxu0 0.0
    %2122 = vmatprep.subr.mxu0 0.0
    %2123 = vmatpush2.msra.mxu0 0.0
    %2124 = vmatprep.subr.mxu0 0.0
    %2125 = vmatpush2.msra.mxu0 0.0
    %2126 = vmatprep.subr.mxu0 0.0
    %2127 = vmatpush2.msra.mxu0 0.0
    %2128 = vmatprep.subr.mxu0 0.0
    %2129 = vmatpush2.msra.mxu0 0.0
    %2130 = vmatprep.subr.mxu0 0.0
    %2131 = vmatpush2.msra.mxu0 0.0
    %2132 = vmatprep.subr.mxu0 0.0
    %2133 = vmatpush2.msra.mxu0 0.0
    %2134 = vmatprep.subr.mxu0 0.0
    %2135 = vmatpush2.msra.mxu0 0.0
    %2136 = vmatprep.subr.mxu0 0.0
    %2137 = vmatpush2.msra.mxu0 0.0
    %2138 = vmatprep.subr.mxu0 0.0
    %2139 = vmatpush2.msra.mxu0 0.0
    %2140 = vmatprep.mubr.f32.mxu0 0.0
    %2141 = vmatmul.mubr.f32.gmra.mxu0 %v2074
    %v2142 = vpop.f32.mrf.mxu0
    %v2143 = vadd.f32 0.0, %v2142
    %v2144 = vpop.f32.mrf.mxu0
    %2145 = vdwg.mxu0
    %v2146 = vld [vmem:[#allocation11 + $0x100] sm:$0xff]
    %v2147 = vld [vmem:[#allocation11 + $0x108] sm:$0xff]
    %v2148 = vld [vmem:[#allocation11 + $0x110] sm:$0xff]
    %v2149 = vld [vmem:[#allocation11 + $0x118] sm:$0xff]
    %v2150 = vld [vmem:[#allocation11 + $0x120] sm:$0xff]
    %v2151 = vld [vmem:[#allocation11 + $0x128] sm:$0xff]
    %v2152 = vld [vmem:[#allocation11 + $0x130] sm:$0xff]
    %v2153 = vld [vmem:[#allocation11 + $0x138] sm:$0xff]
    %v2154 = vld [vmem:[#allocation11 + $0x140] sm:$0xff]
    %v2155 = vld [vmem:[#allocation11 + $0x148] sm:$0xff]
    %v2156 = vld [vmem:[#allocation11 + $0x150] sm:$0xff]
    %v2157 = vld [vmem:[#allocation11 + $0x158] sm:$0xff]
    %v2158 = vld [vmem:[#allocation11 + $0x160] sm:$0xff]
    %v2159 = vld [vmem:[#allocation11 + $0x168] sm:$0xff]
    %v2160 = vld [vmem:[#allocation11 + $0x170] sm:$0xff]
    %v2161 = vld [vmem:[#allocation11 + $0x178] sm:$0xff]
    %2162 = vmatprep.subr.mxu0 0.0
    %2163 = vmatpush1.msra.mxu0 %v2161
    %2164 = vmatprep.subr.mxu0 0.0
    %2165 = vmatpush1.msra.mxu0 %v2160
    %2166 = vmatprep.subr.mxu0 0.0
    %2167 = vmatpush1.msra.mxu0 %v2159
    %2168 = vmatprep.subr.mxu0 0.0
    %2169 = vmatpush1.msra.mxu0 %v2158
    %2170 = vmatprep.subr.mxu0 0.0
    %2171 = vmatpush1.msra.mxu0 %v2157
    %2172 = vmatprep.subr.mxu0 0.0
    %2173 = vmatpush1.msra.mxu0 %v2156
    %2174 = vmatprep.subr.mxu0 0.0
    %2175 = vmatpush1.msra.mxu0 %v2155
    %2176 = vmatprep.subr.mxu0 0.0
    %2177 = vmatpush1.msra.mxu0 %v2154
    %2178 = vmatprep.subr.mxu0 0.0
    %2179 = vmatpush1.msra.mxu0 %v2153
    %2180 = vmatprep.subr.mxu0 0.0
    %2181 = vmatpush1.msra.mxu0 %v2152
    %2182 = vmatprep.subr.mxu0 0.0
    %2183 = vmatpush1.msra.mxu0 %v2151
    %2184 = vmatprep.subr.mxu0 0.0
    %2185 = vmatpush1.msra.mxu0 %v2150
    %2186 = vmatprep.subr.mxu0 0.0
    %2187 = vmatpush1.msra.mxu0 %v2149
    %2188 = vmatprep.subr.mxu0 0.0
    %2189 = vmatpush1.msra.mxu0 %v2148
    %2190 = vmatprep.subr.mxu0 0.0
    %2191 = vmatpush1.msra.mxu0 %v2147
    %2192 = vmatprep.subr.mxu0 0.0
    %2193 = vmatpush1.msra.mxu0 %v2146
    %2194 = vmatprep.subr.mxu0 0.0
    %2195 = vmatpush2.msra.mxu0 0.0
    %2196 = vmatprep.subr.mxu0 0.0
    %2197 = vmatpush2.msra.mxu0 0.0
    %2198 = vmatprep.subr.mxu0 0.0
    %2199 = vmatpush2.msra.mxu0 0.0
    %2200 = vmatprep.subr.mxu0 0.0
    %2201 = vmatpush2.msra.mxu0 0.0
    %2202 = vmatprep.subr.mxu0 0.0
    %2203 = vmatpush2.msra.mxu0 0.0
    %2204 = vmatprep.subr.mxu0 0.0
    %2205 = vmatpush2.msra.mxu0 0.0
    %2206 = vmatprep.subr.mxu0 0.0
    %2207 = vmatpush2.msra.mxu0 0.0
    %2208 = vmatprep.subr.mxu0 0.0
    %2209 = vmatpush2.msra.mxu0 0.0
    %2210 = vmatprep.subr.mxu0 0.0
    %2211 = vmatpush2.msra.mxu0 0.0
    %2212 = vmatprep.subr.mxu0 0.0
    %2213 = vmatpush2.msra.mxu0 0.0
    %2214 = vmatprep.subr.mxu0 0.0
    %2215 = vmatpush2.msra.mxu0 0.0
    %2216 = vmatprep.subr.mxu0 0.0
    %2217 = vmatpush2.msra.mxu0 0.0
    %2218 = vmatprep.subr.mxu0 0.0
    %2219 = vmatpush2.msra.mxu0 0.0
    %2220 = vmatprep.subr.mxu0 0.0
    %2221 = vmatpush2.msra.mxu0 0.0
    %2222 = vmatprep.subr.mxu0 0.0
    %2223 = vmatpush2.msra.mxu0 0.0
    %2224 = vmatprep.subr.mxu0 0.0
    %2225 = vmatpush2.msra.mxu0 0.0
    %2226 = vmatprep.mubr.f32.mxu0 0.0
    %2227 = vmatmul.mubr.f32.gmra.mxu0 %v2070
    %v2228 = vpop.f32.mrf.mxu0
    %v2229 = vadd.f32 0.0, %v2228
    %v2230 = vpop.f32.mrf.mxu0
    %2231 = vmatprep.mubr.f32.mxu0 0.0
    %2232 = vmatmul.mubr.f32.gmra.mxu0 %v2143
    %v2233 = vpop.f32.mrf.mxu0
    %v2234 = vadd.f32 0.0, %v2233
    %v2235 = vpop.f32.mrf.mxu0
    %2236 = vdwg.mxu0
    %v2237 = vadd.f32 %v1830, %v2229
    %v2238 = vadd.f32 %v1835, %v2234
    %2239 = vmatprep.subr.mxu0 0.0
    %2240 = vmatpush1.xpose.msra.mxu0 0.0
    %2241 = vmatprep.subr.mxu0 0.0
    %2242 = vmatpush1.xpose.msra.mxu0 0.0
    %2243 = vmatprep.subr.mxu0 0.0
    %2244 = vmatpush1.xpose.msra.mxu0 0.0
    %2245 = vmatprep.subr.mxu0 0.0
    %2246 = vmatpush1.xpose.msra.mxu0 0.0
    %2247 = vmatprep.subr.mxu0 0.0
    %2248 = vmatpush1.xpose.msra.mxu0 0.0
    %2249 = vmatprep.subr.mxu0 0.0
    %2250 = vmatpush1.xpose.msra.mxu0 0.0
    %2251 = vmatprep.subr.mxu0 0.0
    %2252 = vmatpush1.xpose.msra.mxu0 0.0
    %2253 = vmatprep.subr.mxu0 0.0
    %2254 = vmatpush1.xpose.msra.mxu0 0.0
    %2255 = vmatprep.subr.mxu0 0.0
    %2256 = vmatpush1.xpose.msra.mxu0 0.0
    %2257 = vmatprep.subr.mxu0 0.0
    %2258 = vmatpush1.xpose.msra.mxu0 0.0
    %2259 = vmatprep.subr.mxu0 0.0
    %2260 = vmatpush1.xpose.msra.mxu0 0.0
    %2261 = vmatprep.subr.mxu0 0.0
    %2262 = vmatpush1.xpose.msra.mxu0 0.0
    %2263 = vmatprep.subr.mxu0 0.0
    %2264 = vmatpush1.xpose.msra.mxu0 0.0
    %2265 = vmatprep.subr.mxu0 0.0
    %2266 = vmatpush1.xpose.msra.mxu0 0.0
    %2267 = vmatprep.subr.mxu0 0.0
    %2268 = vmatpush1.xpose.msra.mxu0 0.0
    %2269 = vmatprep.subr.mxu0 0.0
    %2270 = vmatpush1.xpose.msra.mxu0 %v877
    %2271 = vmatprep.subr.mxu0 0.0
    %2272 = vmatpush2.xpose.msra.mxu0 0.0
    %2273 = vmatprep.subr.mxu0 0.0
    %2274 = vmatpush2.xpose.msra.mxu0 0.0
    %2275 = vmatprep.subr.mxu0 0.0
    %2276 = vmatpush2.xpose.msra.mxu0 0.0
    %2277 = vmatprep.subr.mxu0 0.0
    %2278 = vmatpush2.xpose.msra.mxu0 0.0
    %2279 = vmatprep.subr.mxu0 0.0
    %2280 = vmatpush2.xpose.msra.mxu0 0.0
    %2281 = vmatprep.subr.mxu0 0.0
    %2282 = vmatpush2.xpose.msra.mxu0 0.0
    %2283 = vmatprep.subr.mxu0 0.0
    %2284 = vmatpush2.xpose.msra.mxu0 0.0
    %2285 = vmatprep.subr.mxu0 0.0
    %2286 = vmatpush2.xpose.msra.mxu0 0.0
    %2287 = vmatprep.subr.mxu0 0.0
    %2288 = vmatpush2.xpose.msra.mxu0 0.0
    %2289 = vmatprep.subr.mxu0 0.0
    %2290 = vmatpush2.xpose.msra.mxu0 0.0
    %2291 = vmatprep.subr.mxu0 0.0
    %2292 = vmatpush2.xpose.msra.mxu0 0.0
    %2293 = vmatprep.subr.mxu0 0.0
    %2294 = vmatpush2.xpose.msra.mxu0 0.0
    %2295 = vmatprep.subr.mxu0 0.0
    %2296 = vmatpush2.xpose.msra.mxu0 0.0
    %2297 = vmatprep.subr.mxu0 0.0
    %2298 = vmatpush2.xpose.msra.mxu0 0.0
    %2299 = vmatprep.subr.mxu0 0.0
    %2300 = vmatpush2.xpose.msra.mxu0 0.0
    %2301 = vmatprep.subr.mxu0 0.0
    %2302 = vmatpush2.xpose.msra.mxu0 0.0
    %2303 = vmatprep.mubr.f32.mxu0 0.0
    %2304 = vmatmul.mubr.f32.gmra.mxu0 %v723
    %v2305 = vpop.f32.mrf.mxu0
    %v2306 = vadd.f32 0.0, %v2305
    %v2307 = vpop.f32.mrf.mxu0
    %2308 = vdwg.mxu0
    %2309 = vmatprep.subr.mxu0 0.0
    %2310 = vmatpush1.xpose.msra.mxu0 0.0
    %2311 = vmatprep.subr.mxu0 0.0
    %2312 = vmatpush1.xpose.msra.mxu0 0.0
    %2313 = vmatprep.subr.mxu0 0.0
    %2314 = vmatpush1.xpose.msra.mxu0 0.0
    %2315 = vmatprep.subr.mxu0 0.0
    %2316 = vmatpush1.xpose.msra.mxu0 0.0
    %2317 = vmatprep.subr.mxu0 0.0
    %2318 = vmatpush1.xpose.msra.mxu0 0.0
    %2319 = vmatprep.subr.mxu0 0.0
    %2320 = vmatpush1.xpose.msra.mxu0 0.0
    %2321 = vmatprep.subr.mxu0 0.0
    %2322 = vmatpush1.xpose.msra.mxu0 0.0
    %2323 = vmatprep.subr.mxu0 0.0
    %2324 = vmatpush1.xpose.msra.mxu0 0.0
    %2325 = vmatprep.subr.mxu0 0.0
    %2326 = vmatpush1.xpose.msra.mxu0 0.0
    %2327 = vmatprep.subr.mxu0 0.0
    %2328 = vmatpush1.xpose.msra.mxu0 0.0
    %2329 = vmatprep.subr.mxu0 0.0
    %2330 = vmatpush1.xpose.msra.mxu0 0.0
    %2331 = vmatprep.subr.mxu0 0.0
    %2332 = vmatpush1.xpose.msra.mxu0 0.0
    %2333 = vmatprep.subr.mxu0 0.0
    %2334 = vmatpush1.xpose.msra.mxu0 0.0
    %2335 = vmatprep.subr.mxu0 0.0
    %2336 = vmatpush1.xpose.msra.mxu0 0.0
    %2337 = vmatprep.subr.mxu0 0.0
    %2338 = vmatpush1.xpose.msra.mxu0 0.0
    %2339 = vmatprep.subr.mxu0 0.0
    %2340 = vmatpush1.xpose.msra.mxu0 %v883
    %2341 = vmatprep.subr.mxu0 0.0
    %2342 = vmatpush2.xpose.msra.mxu0 0.0
    %2343 = vmatprep.subr.mxu0 0.0
    %2344 = vmatpush2.xpose.msra.mxu0 0.0
    %2345 = vmatprep.subr.mxu0 0.0
    %2346 = vmatpush2.xpose.msra.mxu0 0.0
    %2347 = vmatprep.subr.mxu0 0.0
    %2348 = vmatpush2.xpose.msra.mxu0 0.0
    %2349 = vmatprep.subr.mxu0 0.0
    %2350 = vmatpush2.xpose.msra.mxu0 0.0
    %2351 = vmatprep.subr.mxu0 0.0
    %2352 = vmatpush2.xpose.msra.mxu0 0.0
    %2353 = vmatprep.subr.mxu0 0.0
    %2354 = vmatpush2.xpose.msra.mxu0 0.0
    %2355 = vmatprep.subr.mxu0 0.0
    %2356 = vmatpush2.xpose.msra.mxu0 0.0
    %2357 = vmatprep.subr.mxu0 0.0
    %2358 = vmatpush2.xpose.msra.mxu0 0.0
    %2359 = vmatprep.subr.mxu0 0.0
    %2360 = vmatpush2.xpose.msra.mxu0 0.0
    %2361 = vmatprep.subr.mxu0 0.0
    %2362 = vmatpush2.xpose.msra.mxu0 0.0
    %2363 = vmatprep.subr.mxu0 0.0
    %2364 = vmatpush2.xpose.msra.mxu0 0.0
    %2365 = vmatprep.subr.mxu0 0.0
    %2366 = vmatpush2.xpose.msra.mxu0 0.0
    %2367 = vmatprep.subr.mxu0 0.0
    %2368 = vmatpush2.xpose.msra.mxu0 0.0
    %2369 = vmatprep.subr.mxu0 0.0
    %2370 = vmatpush2.xpose.msra.mxu0 0.0
    %2371 = vmatprep.subr.mxu0 0.0
    %2372 = vmatpush2.xpose.msra.mxu0 0.0
    %2373 = vmatprep.mubr.f32.mxu0 0.0
    %2374 = vmatmul.mubr.f32.gmra.mxu0 %v729
    %v2375 = vpop.f32.mrf.mxu0
    %v2376 = vadd.f32 0.0, %v2375
    %v2377 = vpop.f32.mrf.mxu0
    %2378 = vdwg.mxu0
    %v2379 = vsel %vm1179, %v2306, -inf
    %2380 = vmax.xlane.f32.xlu0 %v2379
    %v2381 = vpop.xlane.xlu0 %2380
    %v2382 = vsel %vm1179, %v2376, -inf
    %2383 = vmax.xlane.f32.xlu0 %v2382
    %v2384 = vpop.xlane.xlu0 %2383
    %v2385 = vsub.f32 %v2306, %v2381
    %v2386 = vsub.f32 %v2376, %v2384
    %v2387 = vmul.f32 %v2385, 1.442695
    %v2388 = vpow.pop %v2387
    %v2389 = vmul.f32 %v2386, 1.442695
    %v2390 = vpow.pop %v2389
    %v2391 = vsel %vm1179, %v2388, 0.0
    %2392 = vadd.xlane.f32.xlu0 %v2391
    %v2393 = vpop.xlane.xlu0 %2392
    %v2394 = vsel %vm1179, %v2390, 0.0
    %2395 = vadd.xlane.f32.xlu0 %v2394
    %v2396 = vpop.xlane.xlu0 %2395
    %v2397 = vrcp.pop %v2393
    %v2398 = vrcp.pop %v2396
    %v2399 = vmul.f32 %v2388, %v2397
    %v2400 = vmul.f32 %v2390, %v2398
    %v2402 = vsel %vm1179, %v2399, 0
    %2404 = vmatprep.subr.mxu0 0.0
    %2405 = vmatpush1.msra.mxu0 0.0
    %2406 = vmatprep.subr.mxu0 0.0
    %2407 = vmatpush1.msra.mxu0 0.0
    %2408 = vmatprep.subr.mxu0 0.0
    %2409 = vmatpush1.msra.mxu0 0.0
    %2410 = vmatprep.subr.mxu0 0.0
    %2411 = vmatpush1.msra.mxu0 0.0
    %2412 = vmatprep.subr.mxu0 0.0
    %2413 = vmatpush1.msra.mxu0 0.0
    %2414 = vmatprep.subr.mxu0 0.0
    %2415 = vmatpush1.msra.mxu0 0.0
    %2416 = vmatprep.subr.mxu0 0.0
    %2417 = vmatpush1.msra.mxu0 0.0
    %2418 = vmatprep.subr.mxu0 0.0
    %2419 = vmatpush1.msra.mxu0 0.0
    %2420 = vmatprep.subr.mxu0 0.0
    %2421 = vmatpush1.msra.mxu0 0.0
    %2422 = vmatprep.subr.mxu0 0.0
    %2423 = vmatpush1.msra.mxu0 0.0
    %2424 = vmatprep.subr.mxu0 0.0
    %2425 = vmatpush1.msra.mxu0 0.0
    %2426 = vmatprep.subr.mxu0 0.0
    %2427 = vmatpush1.msra.mxu0 0.0
    %2428 = vmatprep.subr.mxu0 0.0
    %2429 = vmatpush1.msra.mxu0 0.0
    %2430 = vmatprep.subr.mxu0 0.0
    %2431 = vmatpush1.msra.mxu0 0.0
    %2432 = vmatprep.subr.mxu0 0.0
    %2433 = vmatpush1.msra.mxu0 0.0
    %2434 = vmatprep.subr.mxu0 0.0
    %2435 = vmatpush1.msra.mxu0 %v1031
    %2436 = vmatprep.subr.mxu0 0.0
    %2437 = vmatpush2.msra.mxu0 0.0
    %2438 = vmatprep.subr.mxu0 0.0
    %2439 = vmatpush2.msra.mxu0 0.0
    %2440 = vmatprep.subr.mxu0 0.0
    %2441 = vmatpush2.msra.mxu0 0.0
    %2442 = vmatprep.subr.mxu0 0.0
    %2443 = vmatpush2.msra.mxu0 0.0
    %2444 = vmatprep.subr.mxu0 0.0
    %2445 = vmatpush2.msra.mxu0 0.0
    %2446 = vmatprep.subr.mxu0 0.0
    %2447 = vmatpush2.msra.mxu0 0.0
    %2448 = vmatprep.subr.mxu0 0.0
    %2449 = vmatpush2.msra.mxu0 0.0
    %2450 = vmatprep.subr.mxu0 0.0
    %2451 = vmatpush2.msra.mxu0 0.0
    %2452 = vmatprep.subr.mxu0 0.0
    %2453 = vmatpush2.msra.mxu0 0.0
    %2454 = vmatprep.subr.mxu0 0.0
    %2455 = vmatpush2.msra.mxu0 0.0
    %2456 = vmatprep.subr.mxu0 0.0
    %2457 = vmatpush2.msra.mxu0 0.0
    %2458 = vmatprep.subr.mxu0 0.0
    %2459 = vmatpush2.msra.mxu0 0.0
    %2460 = vmatprep.subr.mxu0 0.0
    %2461 = vmatpush2.msra.mxu0 0.0
    %2462 = vmatprep.subr.mxu0 0.0
    %2463 = vmatpush2.msra.mxu0 0.0
    %2464 = vmatprep.subr.mxu0 0.0
    %2465 = vmatpush2.msra.mxu0 0.0
    %2466 = vmatprep.subr.mxu0 0.0
    %2467 = vmatpush2.msra.mxu0 0.0
    %2468 = vmatprep.mubr.f32.mxu0 0.0
    %2469 = vmatmul.mubr.f32.gmra.mxu0 %v2402
    %v2470 = vpop.f32.mrf.mxu0
    %v2471 = vadd.f32 0.0, %v2470
    %v2472 = vpop.f32.mrf.mxu0
    %2473 = vdwg.mxu0
    %v2475 = vsel %vm1179, %v2400, 0
    %2477 = vmatprep.subr.mxu0 0.0
    %2478 = vmatpush1.msra.mxu0 0.0
    %2479 = vmatprep.subr.mxu0 0.0
    %2480 = vmatpush1.msra.mxu0 0.0
    %2481 = vmatprep.subr.mxu0 0.0
    %2482 = vmatpush1.msra.mxu0 0.0
    %2483 = vmatprep.subr.mxu0 0.0
    %2484 = vmatpush1.msra.mxu0 0.0
    %2485 = vmatprep.subr.mxu0 0.0
    %2486 = vmatpush1.msra.mxu0 0.0
    %2487 = vmatprep.subr.mxu0 0.0
    %2488 = vmatpush1.msra.mxu0 0.0
    %2489 = vmatprep.subr.mxu0 0.0
    %2490 = vmatpush1.msra.mxu0 0.0
    %2491 = vmatprep.subr.mxu0 0.0
    %2492 = vmatpush1.msra.mxu0 0.0
    %2493 = vmatprep.subr.mxu0 0.0
    %2494 = vmatpush1.msra.mxu0 0.0
    %2495 = vmatprep.subr.mxu0 0.0
    %2496 = vmatpush1.msra.mxu0 0.0
    %2497 = vmatprep.subr.mxu0 0.0
    %2498 = vmatpush1.msra.mxu0 0.0
    %2499 = vmatprep.subr.mxu0 0.0
    %2500 = vmatpush1.msra.mxu0 0.0
    %2501 = vmatprep.subr.mxu0 0.0
    %2502 = vmatpush1.msra.mxu0 0.0
    %2503 = vmatprep.subr.mxu0 0.0
    %2504 = vmatpush1.msra.mxu0 0.0
    %2505 = vmatprep.subr.mxu0 0.0
    %2506 = vmatpush1.msra.mxu0 0.0
    %2507 = vmatprep.subr.mxu0 0.0
    %2508 = vmatpush1.msra.mxu0 %v1037
    %2509 = vmatprep.subr.mxu0 0.0
    %2510 = vmatpush2.msra.mxu0 0.0
    %2511 = vmatprep.subr.mxu0 0.0
    %2512 = vmatpush2.msra.mxu0 0.0
    %2513 = vmatprep.subr.mxu0 0.0
    %2514 = vmatpush2.msra.mxu0 0.0
    %2515 = vmatprep.subr.mxu0 0.0
    %2516 = vmatpush2.msra.mxu0 0.0
    %2517 = vmatprep.subr.mxu0 0.0
    %2518 = vmatpush2.msra.mxu0 0.0
    %2519 = vmatprep.subr.mxu0 0.0
    %2520 = vmatpush2.msra.mxu0 0.0
    %2521 = vmatprep.subr.mxu0 0.0
    %2522 = vmatpush2.msra.mxu0 0.0
    %2523 = vmatprep.subr.mxu0 0.0
    %2524 = vmatpush2.msra.mxu0 0.0
    %2525 = vmatprep.subr.mxu0 0.0
    %2526 = vmatpush2.msra.mxu0 0.0
    %2527 = vmatprep.subr.mxu0 0.0
    %2528 = vmatpush2.msra.mxu0 0.0
    %2529 = vmatprep.subr.mxu0 0.0
    %2530 = vmatpush2.msra.mxu0 0.0
    %2531 = vmatprep.subr.mxu0 0.0
    %2532 = vmatpush2.msra.mxu0 0.0
    %2533 = vmatprep.subr.mxu0 0.0
    %2534 = vmatpush2.msra.mxu0 0.0
    %2535 = vmatprep.subr.mxu0 0.0
    %2536 = vmatpush2.msra.mxu0 0.0
    %2537 = vmatprep.subr.mxu0 0.0
    %2538 = vmatpush2.msra.mxu0 0.0
    %2539 = vmatprep.subr.mxu0 0.0
    %2540 = vmatpush2.msra.mxu0 0.0
    %2541 = vmatprep.mubr.f32.mxu0 0.0
    %2542 = vmatmul.mubr.f32.gmra.mxu0 %v2475
    %v2543 = vpop.f32.mrf.mxu0
    %v2544 = vadd.f32 0.0, %v2543
    %v2545 = vpop.f32.mrf.mxu0
    %2546 = vdwg.mxu0
    %v2547 = vld [vmem:[#allocation11 + $0x180] sm:$0xff]
    %v2548 = vld [vmem:[#allocation11 + $0x188] sm:$0xff]
    %v2549 = vld [vmem:[#allocation11 + $0x190] sm:$0xff]
    %v2550 = vld [vmem:[#allocation11 + $0x198] sm:$0xff]
    %v2551 = vld [vmem:[#allocation11 + $0x1a0] sm:$0xff]
    %v2552 = vld [vmem:[#allocation11 + $0x1a8] sm:$0xff]
    %v2553 = vld [vmem:[#allocation11 + $0x1b0] sm:$0xff]
    %v2554 = vld [vmem:[#allocation11 + $0x1b8] sm:$0xff]
    %v2555 = vld [vmem:[#allocation11 + $0x1c0] sm:$0xff]
    %v2556 = vld [vmem:[#allocation11 + $0x1c8] sm:$0xff]
    %v2557 = vld [vmem:[#allocation11 + $0x1d0] sm:$0xff]
    %v2558 = vld [vmem:[#allocation11 + $0x1d8] sm:$0xff]
    %v2559 = vld [vmem:[#allocation11 + $0x1e0] sm:$0xff]
    %v2560 = vld [vmem:[#allocation11 + $0x1e8] sm:$0xff]
    %v2561 = vld [vmem:[#allocation11 + $0x1f0] sm:$0xff]
    %v2562 = vld [vmem:[#allocation11 + $0x1f8] sm:$0xff]
    %2563 = vmatprep.subr.mxu0 0.0
    %2564 = vmatpush1.msra.mxu0 %v2562
    %2565 = vmatprep.subr.mxu0 0.0
    %2566 = vmatpush1.msra.mxu0 %v2561
    %2567 = vmatprep.subr.mxu0 0.0
    %2568 = vmatpush1.msra.mxu0 %v2560
    %2569 = vmatprep.subr.mxu0 0.0
    %2570 = vmatpush1.msra.mxu0 %v2559
    %2571 = vmatprep.subr.mxu0 0.0
    %2572 = vmatpush1.msra.mxu0 %v2558
    %2573 = vmatprep.subr.mxu0 0.0
    %2574 = vmatpush1.msra.mxu0 %v2557
    %2575 = vmatprep.subr.mxu0 0.0
    %2576 = vmatpush1.msra.mxu0 %v2556
    %2577 = vmatprep.subr.mxu0 0.0
    %2578 = vmatpush1.msra.mxu0 %v2555
    %2579 = vmatprep.subr.mxu0 0.0
    %2580 = vmatpush1.msra.mxu0 %v2554
    %2581 = vmatprep.subr.mxu0 0.0
    %2582 = vmatpush1.msra.mxu0 %v2553
    %2583 = vmatprep.subr.mxu0 0.0
    %2584 = vmatpush1.msra.mxu0 %v2552
    %2585 = vmatprep.subr.mxu0 0.0
    %2586 = vmatpush1.msra.mxu0 %v2551
    %2587 = vmatprep.subr.mxu0 0.0
    %2588 = vmatpush1.msra.mxu0 %v2550
    %2589 = vmatprep.subr.mxu0 0.0
    %2590 = vmatpush1.msra.mxu0 %v2549
    %2591 = vmatprep.subr.mxu0 0.0
    %2592 = vmatpush1.msra.mxu0 %v2548
    %2593 = vmatprep.subr.mxu0 0.0
    %2594 = vmatpush1.msra.mxu0 %v2547
    %2595 = vmatprep.subr.mxu0 0.0
    %2596 = vmatpush2.msra.mxu0 0.0
    %2597 = vmatprep.subr.mxu0 0.0
    %2598 = vmatpush2.msra.mxu0 0.0
    %2599 = vmatprep.subr.mxu0 0.0
    %2600 = vmatpush2.msra.mxu0 0.0
    %2601 = vmatprep.subr.mxu0 0.0
    %2602 = vmatpush2.msra.mxu0 0.0
    %2603 = vmatprep.subr.mxu0 0.0
    %2604 = vmatpush2.msra.mxu0 0.0
    %2605 = vmatprep.subr.mxu0 0.0
    %2606 = vmatpush2.msra.mxu0 0.0
    %2607 = vmatprep.subr.mxu0 0.0
    %2608 = vmatpush2.msra.mxu0 0.0
    %2609 = vmatprep.subr.mxu0 0.0
    %2610 = vmatpush2.msra.mxu0 0.0
    %2611 = vmatprep.subr.mxu0 0.0
    %2612 = vmatpush2.msra.mxu0 0.0
    %2613 = vmatprep.subr.mxu0 0.0
    %2614 = vmatpush2.msra.mxu0 0.0
    %2615 = vmatprep.subr.mxu0 0.0
    %2616 = vmatpush2.msra.mxu0 0.0
    %2617 = vmatprep.subr.mxu0 0.0
    %2618 = vmatpush2.msra.mxu0 0.0
    %2619 = vmatprep.subr.mxu0 0.0
    %2620 = vmatpush2.msra.mxu0 0.0
    %2621 = vmatprep.subr.mxu0 0.0
    %2622 = vmatpush2.msra.mxu0 0.0
    %2623 = vmatprep.subr.mxu0 0.0
    %2624 = vmatpush2.msra.mxu0 0.0
    %2625 = vmatprep.subr.mxu0 0.0
    %2626 = vmatpush2.msra.mxu0 0.0
    %2627 = vmatprep.mubr.f32.mxu0 0.0
    %2628 = vmatmul.mubr.f32.gmra.mxu0 %v2471
    %v2629 = vpop.f32.mrf.mxu0
    %v2630 = vadd.f32 0.0, %v2629
    %v2631 = vpop.f32.mrf.mxu0
    %2632 = vmatprep.mubr.f32.mxu0 0.0
    %2633 = vmatmul.mubr.f32.gmra.mxu0 %v2544
    %v2634 = vpop.f32.mrf.mxu0
    %v2635 = vadd.f32 0.0, %v2634
    %v2636 = vpop.f32.mrf.mxu0
    %2637 = vdwg.mxu0
    %v2638 = vadd.f32 %v2237, %v2630
    %v2639 = vadd.f32 %v2238, %v2635
    %v2640 = vld [vmem:[%s8] sm:$0x1]
    %v2642 = vlaneseq
    %v2643 = vshrl.u32 %v2642, 7
    %v2644 = vsub.s32 0, %v2643
    %v2645 = vrot.slane %v2640, %v2644
    %v2647 = vadd.f32 %v2638, %v2645
    %v2648 = vadd.f32 %v2639, %v2645
    %v2649 = vadd.f32 %v319, %v2647
    %v2650 = vadd.f32 %v320, %v2648
    %2651 = vadd.xlane.f32.xlu0 %v2649
    %v2652 = vpop.xlane.xlu0 %2651
    %2653 = vadd.xlane.f32.xlu0 %v2650
    %v2654 = vpop.xlane.xlu0 %2653
    %v2655 = vmul.f32 %v2652, 0.03125
    %v2656 = vmul.f32 %v2654, 0.03125
    %v2657 = vmul.f32 %v2649, %v2649
    %v2658 = vmul.f32 %v2650, %v2650
    %2659 = vadd.xlane.f32.xlu0 %v2657
    %v2660 = vpop.xlane.xlu0 %2659
    %2661 = vadd.xlane.f32.xlu0 %v2658
    %v2662 = vpop.xlane.xlu0 %2661
    %v2663 = vmul.f32 %v2660, 0.03125
    %v2664 = vmul.f32 %v2662, 0.03125
    %v2665 = vmul.f32 %v2655, %v2655
    %v2666 = vmul.f32 %v2656, %v2656
    %v2667 = vsub.f32 %v2663, %v2665
    %v2668 = vsub.f32 %v2664, %v2666
    %v2669 = vsub.f32 %v2649, %v2655
    %v2670 = vsub.f32 %v2650, %v2656
    %v2671 = vadd.f32 %v2667, 1e-05
    %v2672 = vadd.f32 %v2668, 1e-05
    %v2673 = vrsqrt.pop %v2671
    %v2674 = vrsqrt.pop %v2672
    %v2675 = vmul.f32 %v2669, %v2673
    %v2676 = vmul.f32 %v2670, %v2674
    %v2677 = vld [vmem:[%s9] sm:$0x1]
    %v2679 = vlaneseq
    %v2680 = vshrl.u32 %v2679, 7
    %v2681 = vsub.s32 0, %v2680
    %v2682 = vrot.slane %v2677, %v2681
    %v2684 = vmul.f32 %v2675, %v2682
    %v2685 = vmul.f32 %v2676, %v2682
    %v2686 = vld [vmem:[%s10] sm:$0x1]
    %v2688 = vlaneseq
    %v2689 = vshrl.u32 %v2688, 7
    %v2690 = vsub.s32 0, %v2689
    %v2691 = vrot.slane %v2686, %v2690
    %v2693 = vadd.f32 %v2684, %v2691
    %v2694 = vadd.f32 %v2685, %v2691
    %2695 = vst [vmem:[#allocation13] sm:$0xff] %v2693
    %2696 = vst [vmem:[#allocation13 + $0x8] sm:$0xff] %v2694
    // Predicated region
    $region70: #{tpu_custom_call.1} parent=1 // pred_check
      _
    $region71: #{tpu_custom_call.1} parent=1 // pred_check_branch
      %2698 = sbr.rel (0) target = $region73
    $region72: #{tpu_custom_call.1} parent=1 // pred_region
      %s2700 = ssub.s32 256, 256
      %2701 = vsyncadd [#allocation4], %s2700
      %s2702 = sshll.u32 [#allocation13], 4
      %s2703 = int_to_ptr.vmem [resolvable:$true] %s2702
      %2708 = dma.vmem_to_hbm [thread:$0]  %s2703, 256, %s11, [#allocation4], 128, 128, 8
    $region73: #{tpu_custom_call.1} parent=1 // pred_fallthru
      _
    // Predicated region
    $region74: #{tpu_custom_call.1} parent=1 // pred_check
      _
    $region75: #{tpu_custom_call.1} parent=1 // pred_check_branch
      %2710 = sbr.rel (0) target = $region77
    $region76: #{tpu_custom_call.1} parent=1 // pred_region
      %2711 = dma.done [#allocation4], 256
    $region77: #{tpu_custom_call.1} parent=1 // pred_fallthru
      _
    %2712 = vsyncpa [#allocation3], 1
    %2713 = vsyncpa [#allocation6], 1
    %2714 = vsyncpa [#allocation9], 1
    %2715 = vsyncpa [#allocation12], 1
    %2716 = vsyncpa [#allocation4], 1

</llo_original>
